<compile_context>
chip_gen: v6e
topology: v6e:2x2x1
jax: 0.10.0
libtpu: 0.0.40
codegen_flags: <defaults>
</compile_context>

<pallas_src>
import functools

import numpy as np

import jax
import jax.numpy as jnp
from jax.experimental import pallas as pl
from jax.experimental.pallas import tpu as pltpu

BN_EPS = 1e-3


# ---------------------------------------------------------------------------
# Pallas kernel: one fused MBConv layer on a (channels, N*H*W) activation tile
# ---------------------------------------------------------------------------
def _mbconv_kernel(x_ref, dwmask_ref, pool_ref, bcast_ref,
                   wexp_ref, wdw_ref, wpw_ref, wse1_ref, wse2_ref, wproj_ref,
                   bias_ref, o_ref, *, img_w, resi):
    total = x_ref.shape[1]            # N * H * W  (lane axis)
    mid = wexp_ref.shape[0]
    sq = wse1_ref.shape[0]
    cout = wproj_ref.shape[0]

    x = x_ref[...]                                            # (cin, NHW) f32

    # -- expand: folded 1x1 conv (+bias+BN) + Swish ---------------------------
    h = jnp.dot(wexp_ref[...], x.astype(jnp.bfloat16),
                preferred_element_type=jnp.float32)
    h = h + bias_ref[0:mid, 0:1]
    h = h * jax.nn.sigmoid(h)                                 # (mid, NHW) f32

    # -- depthwise 3x3 SAME conv: 9 static lane rolls (XLU) + edge masks ------
    wdw = wdw_ref[...]                                        # (mid, 9) f32
    acc = h * wdw[:, 4:5]                                     # centre tap
    for dy in (-1, 0, 1):
        for dx in (-1, 0, 1):
            if dy == 0 and dx == 0:
                continue
            k = (dy + 1) * 3 + (dx + 1)
            # out[i] must read h[i + dy*W + dx]  ->  roll left by that offset.
            src = pltpu.roll(h, shift=(-(dy * img_w + dx)) % total, axis=1)
            acc = acc + src * dwmask_ref[k:k + 1, :] * wdw[:, k:k + 1]

    # -- pointwise 1x1 conv + folded bias/BN ----------------------------------
    p = jnp.dot(wpw_ref[...], acc.astype(jnp.bfloat16),
                preferred_element_type=jnp.float32)
    p = p + bias_ref[0:mid, 1:2]                              # (mid, NHW) f32

    # -- squeeze-excite (per image): pool -> 1x1 -> Swish -> 1x1 -> gate ------
    gap = jnp.dot(p, pool_ref[...], preferred_element_type=jnp.float32)   # (mid, N)
    se = jnp.dot(wse1_ref[...], gap, preferred_element_type=jnp.float32)  # (sq, N)
    se = se + bias_ref[0:sq, 2:3]
    se = se * jax.nn.sigmoid(se)
    se = jnp.dot(wse2_ref[...], se, preferred_element_type=jnp.float32)   # (mid, N)
    se = se + bias_ref[0:mid, 3:4]
    gate = jax.nn.sigmoid(se)                                             # (mid, N)
    p = p * jnp.dot(gate, bcast_ref[...], preferred_element_type=jnp.float32)

    # -- projection 1x1 conv + folded bias/BN (+ residual) --------------------
    o = jnp.dot(wproj_ref[...], p.astype(jnp.bfloat16),
                preferred_element_type=jnp.float32)
    o = o + bias_ref[0:cout, 4:5]
    if resi:
        o = o + x
    o_ref[...] = o.astype(o_ref.dtype)


# ---------------------------------------------------------------------------
# Wrappers
# ---------------------------------------------------------------------------
def _make_constants(n_img, h_img, w_img):
    """Precomputed lane constants for the (C, N*H*W) layout (trace-time numpy)."""
    hw = h_img * w_img
    total = n_img * hw
    idx = np.arange(total)
    yy = (idx % hw) // w_img
    xx = idx % w_img
    dwmask = np.zeros((9, total), np.float32)           # depthwise edge masks
    for dy in (-1, 0, 1):
        for dx in (-1, 0, 1):
            k = (dy + 1) * 3 + (dx + 1)
            ok = ((yy + dy >= 0) & (yy + dy < h_img) &
                  (xx + dx >= 0) & (xx + dx < w_img))
            dwmask[k] = ok.astype(np.float32)
    img = idx // hw
    pool = (img[:, None] == np.arange(n_img)[None, :]).astype(np.float32) / hw
    bcast = (np.arange(n_img)[:, None] == img[None, :]).astype(np.float32)
    return jnp.asarray(dwmask), jnp.asarray(pool), jnp.asarray(bcast)


def mbconv_forward(h, consts, p, resi, w_img):
    """One fused MBConv layer. h: (cin, N*H*W) float32."""
    dwmask, pool, bcast = consts
    total = h.shape[1]
    cout = p["w_proj"].shape[0]
    kernel = functools.partial(_mbconv_kernel, img_w=w_img, resi=resi)
    # Everything (activations + weights) is a few tens of KB, so whole arrays
    # go to VMEM and we use a single grid step (no grid / default BlockSpecs).
    # TODO(synk): for production-sized H,W,C add a spatial row-strip grid with
    # a 1-row halo (and a "parallel" batch axis for v7x's two TensorCores).
    return pl.pallas_call(
        kernel,
        out_shape=jax.ShapeDtypeStruct((cout, total), jnp.float32),
    )(h, dwmask, pool, bcast,
      p["w_exp"], p["w_dw"], p["w_pw"], p["w_se1"], p["w_se2"], p["w_proj"],
      p["bias_pack"])


def mbblock_forward(x_nchw, layers):
    """MBBlock forward. x_nchw: (N, C, H, W) float32 (PyTorch layout)."""
    n, c, h_img, w_img = x_nchw.shape
    consts = _make_constants(n, h_img, w_img)
    h = jnp.transpose(x_nchw, (1, 0, 2, 3)).reshape(c, n * h_img * w_img)
    h = h.astype(jnp.float32)
    for p, resi in layers:
        h = mbconv_forward(h, consts, p, resi, w_img)
    cout = h.shape[0]
    return jnp.transpose(h.reshape(cout, n, h_img, w_img), (1, 0, 2, 3))


# ---------------------------------------------------------------------------
# Parameters (synthetic, deterministic) with eval-BN folded into conv weights
# ---------------------------------------------------------------------------
def _fold_bn_into_conv(w, b, gamma, beta, mean, var, eps=BN_EPS):
    """Eval-mode BN folded into the preceding conv (exact)."""
    s = gamma / jnp.sqrt(var + eps)
    return w * s[:, None], s * b + (beta - s * mean)


def init_mbconv_params(key, cin, cout, expand, se_ratio):
    mid = cin * expand
    sq = int(cin * se_ratio)
    assert sq > 0, "demo always keeps the SE branch (se_ratio > 0)"
    ks = jax.random.split(key, 14)

    def nrm(k, shape, scale=0.1):
        return scale * jax.random.normal(k, shape, jnp.float32)

    def bn(k, c):
        k1, k2, k3, k4 = jax.random.split(k, 4)
        return (0.5 + jax.random.uniform(k1, (c,), jnp.float32),   # gamma
                nrm(k2, (c,)),                                     # beta
                nrm(k3, (c,)),                                     # running mean
                0.5 + jax.random.uniform(k4, (c,), jnp.float32))   # running var

    w_exp, b_exp = _fold_bn_into_conv(nrm(ks[0], (mid, cin)), nrm(ks[1], (mid,)),
                                      *bn(ks[2], mid))
    w_dw = nrm(ks[3], (mid, 9))                  # depthwise taps: (c, ky*3+kx)
    w_pw, b_pw = _fold_bn_into_conv(nrm(ks[4], (mid, mid)), nrm(ks[5], (mid,)),
                                    *bn(ks[6], mid))
    w_se1, b_se1 = nrm(ks[7], (sq, mid)), nrm(ks[8], (sq,))
    w_se2, b_se2 = nrm(ks[9], (mid, sq)), nrm(ks[10], (mid,))
    w_proj, b_proj = _fold_bn_into_conv(nrm(ks[11], (cout, mid)), nrm(ks[12], (cout,)),
                                        *bn(ks[13], cout))

    # Pack the five per-stage bias columns into one small array (single DMA).
    rows = max(mid, sq, cout)
    bias_pack = jnp.zeros((rows, 5), jnp.float32)
    bias_pack = bias_pack.at[:mid, 0].set(b_exp)
    bias_pack = bias_pack.at[:mid, 1].set(b_pw)
    bias_pack = bias_pack.at[:sq, 2].set(b_se1)
    bias_pack = bias_pack.at[:mid, 3].set(b_se2)
    bias_pack = bias_pack.at[:cout, 4].set(b_proj)

    return {
        # bf16 operands for the big MXU matmuls (f32 accumulation in-kernel)
        "w_exp": w_exp.astype(jnp.bfloat16),
        "w_pw": w_pw.astype(jnp.bfloat16),
        "w_proj": w_proj.astype(jnp.bfloat16),
        # f32 everywhere else (depthwise = VPU work, SE = tiny matmuls)
        "w_dw": w_dw, "w_se1": w_se1, "w_se2": w_se2,
        "b_exp": b_exp, "b_pw": b_pw, "b_se1": b_se1, "b_se2": b_se2,
        "b_proj": b_proj,
        "bias_pack": bias_pack,
    }


def mbblock_init(key, in_channels, out_channels, expand, kernel, stride,
                 num_repeat, skip, se_ratio, drop_connect_ratio=0.2):
    # Reproduces MBBlock's argument forwarding: MBConv receives
    # se_ratio=skip, dc_ratio=se_ratio (unused in forward), resi=drop_connect_ratio.
    assert kernel == 1, "demo config uses 1x1 CSP expand/proj convs"
    assert stride == 1  # TODO(synk): stride>1 CSP SAME-padding conv not implemented.
    del se_ratio  # maps to MBConv.dc_ratio, which the reference forward never uses
    keys = jax.random.split(key, num_repeat)
    layers = []
    cin = in_channels
    for i in range(num_repeat):
        s = stride if i == 0 else 1
        p = init_mbconv_params(keys[i], cin, out_channels, expand, skip)
        resi = bool(drop_connect_ratio) and s == 1 and cin == out_channels
        layers.append((p, resi))
        cin = out_channels
    return layers


# ---------------------------------------------------------------------------
# Pure-JAX reference (same folded params / bf16 matmul casts), NCHW layout
# ---------------------------------------------------------------------------
def _mbconv_reference(x, p, resi):
    n, cin, h_img, w_img = x.shape

    def conv1x1(w, b, t):
        y = jnp.einsum("oc,nchw->nohw", w, t.astype(w.dtype),
                       preferred_element_type=jnp.float32)
        return y + b.reshape(1, -1, 1, 1)

    h = conv1x1(p["w_exp"], p["b_exp"], x)
    h = h * jax.nn.sigmoid(h)

    hp = jnp.pad(h, ((0, 0), (0, 0), (1, 1), (1, 1)))
    acc = jnp.zeros_like(h)
    for ky in range(3):
        for kx in range(3):
            acc = acc + (hp[:, :, ky:ky + h_img, kx:kx + w_img]
                         * p["w_dw"][:, ky * 3 + kx].reshape(1, -1, 1, 1))

    q = conv1x1(p["w_pw"], p["b_pw"], acc)

    gap = jnp.mean(q, axis=(2, 3))                          # (N, mid)
    se = gap @ p["w_se1"].T + p["b_se1"]
    se = se * jax.nn.sigmoid(se)
    se = se @ p["w_se2"].T + p["b_se2"]
    q = q * jax.nn.sigmoid(se)[:, :, None, None]

    o = conv1x1(p["w_proj"], p["b_proj"], q)
    if resi:
        o = o + x
    return o


def mbblock_reference(x, layers):
    for p, resi in layers:
        x = _mbconv_reference(x, p, resi)
    return x


# TODO(synk): BatchNorm is implemented in inference mode (running statistics
# folded into the conv weights); training-mode batch-statistics BN is not
# implemented.  Drop-connect is not applied (the reference forward never uses
# dc_ratio either).

if __name__ == "__main__":
    key = jax.random.PRNGKey(0)
    kx, kp = jax.random.split(key)

    # Small shapes consistent with the module: batch=2, channels=4, spatial=16.
    N, C, H, W = 2, 4, 16, 16
    x = jax.random.normal(kx, (N, C, H, W), jnp.float32)    # PyTorch NCHW layout

    layers = mbblock_init(
        kp, in_channels=4, out_channels=4, expand=2, kernel=1, stride=1,
        num_repeat=2, skip=0.5, se_ratio=0.25, drop_connect_ratio=0.2)

    fwd = jax.jit(lambda t: mbblock_forward(t, layers))
    out = jax.block_until_ready(fwd(x))
    assert out.shape == (N, 4, H, W) and out.dtype == jnp.float32
    assert bool(jnp.all(jnp.isfinite(out)))

    # Cross-check the fused Pallas path against a pure-JAX reference.
    ref = jax.block_until_ready(jax.jit(lambda t: mbblock_reference(t, layers))(x))
    err = float(jnp.max(jnp.abs(out - ref)))
    assert err < 5e-3, f"kernel vs reference mismatch: max|diff|={err:.3e}"

    print("KERNEL_OK")
</pallas_src>

<mosaic_0001>
module attributes {stable_mosaic.version = 11 : i64} {
  func.func @_mbconv_kernel(%arg0: memref<4x512xf32, #tpu.memory_space<vmem>>, %arg1: memref<9x512xf32, #tpu.memory_space<vmem>>, %arg2: memref<512x2xf32, #tpu.memory_space<vmem>>, %arg3: memref<2x512xf32, #tpu.memory_space<vmem>>, %arg4: memref<8x4xbf16, #tpu.memory_space<vmem>>, %arg5: memref<8x9xf32, #tpu.memory_space<vmem>>, %arg6: memref<8x8xbf16, #tpu.memory_space<vmem>>, %arg7: memref<2x8xf32, #tpu.memory_space<vmem>>, %arg8: memref<8x2xf32, #tpu.memory_space<vmem>>, %arg9: memref<4x8xbf16, #tpu.memory_space<vmem>>, %arg10: memref<8x5xf32, #tpu.memory_space<vmem>>, %arg11: memref<4x512xf32, #tpu.memory_space<vmem>>) attributes {dimension_semantics = [], scalar_prefetch = 0 : i64, scratch_operands = 0 : i64, tpu.core_type = #tpu.core_type<tc>} {
    %c0 = arith.constant 0 : index
    %c0_0 = arith.constant 0 : index
    %0 = vector.load %arg0[%c0, %c0_0] : memref<4x512xf32, #tpu.memory_space<vmem>>, vector<4x512xf32>
    %c0_1 = arith.constant 0 : index
    %c0_2 = arith.constant 0 : index
    %1 = vector.load %arg4[%c0_1, %c0_2] : memref<8x4xbf16, #tpu.memory_space<vmem>>, vector<8x4xbf16>
    %2 = arith.truncf %0 : vector<4x512xf32> to vector<4x512xbf16>
    %cst = arith.constant dense<0.000000e+00> : vector<8x512xf32>
    %3 = tpu.matmul %1, %2, %cst {dimension_numbers = #tpu.dot_dimension_numbers<[1], [0], [0], [1], [0, 0, 1, 1], [], []>} : vector<8x4xbf16>, vector<4x512xbf16>, vector<8x512xf32> -> vector<8x512xf32>
    %c0_3 = arith.constant 0 : index
    %c0_4 = arith.constant 0 : index
    %4 = vector.load %arg10[%c0_3, %c0_4] : memref<8x5xf32, #tpu.memory_space<vmem>>, vector<8x1xf32>
    %5 = vector.broadcast %4 : vector<8x1xf32> to vector<8x512xf32>
    %6 = arith.addf %3, %5 : vector<8x512xf32>
    %7 = arith.negf %6 : vector<8x512xf32>
    %8 = math.exp %7 : vector<8x512xf32>
    %cst_5 = arith.constant 1.000000e+00 : f32
    %9 = vector.broadcast %cst_5 : f32 to vector<8x512xf32>
    %10 = arith.addf %9, %8 : vector<8x512xf32>
    %11 = arith.divf %9, %10 : vector<8x512xf32>
    %12 = arith.mulf %6, %11 : vector<8x512xf32>
    %c0_6 = arith.constant 0 : index
    %c0_7 = arith.constant 0 : index
    %13 = vector.load %arg5[%c0_6, %c0_7] : memref<8x9xf32, #tpu.memory_space<vmem>>, vector<8x9xf32>
    %14 = vector.extract_strided_slice %13 {offsets = [0, 4], sizes = [8, 1], strides = [1, 1]} : vector<8x9xf32> to vector<8x1xf32>
    %15 = vector.broadcast %14 : vector<8x1xf32> to vector<8x512xf32>
    %16 = arith.mulf %12, %15 : vector<8x512xf32>
    %c17_i32 = arith.constant 17 : i32
    %17 = tpu.dynamic_rotate %12 by %c17_i32 dim 1 : vector<8x512xf32>, i32 -> vector<8x512xf32>
    %c0_8 = arith.constant 0 : index
    %c0_9 = arith.constant 0 : index
    %18 = vector.load %arg1[%c0_8, %c0_9] : memref<9x512xf32, #tpu.memory_space<vmem>>, vector<1x512xf32>
    %19 = vector.broadcast %18 : vector<1x512xf32> to vector<8x512xf32>
    %20 = arith.mulf %17, %19 : vector<8x512xf32>
    %21 = vector.extract_strided_slice %13 {offsets = [0, 0], sizes = [8, 1], strides = [1, 1]} : vector<8x9xf32> to vector<8x1xf32>
    %22 = vector.broadcast %21 : vector<8x1xf32> to vector<8x512xf32>
    %23 = arith.mulf %20, %22 : vector<8x512xf32>
    %24 = arith.addf %16, %23 : vector<8x512xf32>
    %c16_i32 = arith.constant 16 : i32
    %25 = tpu.dynamic_rotate %12 by %c16_i32 dim 1 : vector<8x512xf32>, i32 -> vector<8x512xf32>
    %c1 = arith.constant 1 : index
    %c0_10 = arith.constant 0 : index
    %26 = vector.load %arg1[%c1, %c0_10] : memref<9x512xf32, #tpu.memory_space<vmem>>, vector<1x512xf32>
    %27 = vector.broadcast %26 : vector<1x512xf32> to vector<8x512xf32>
    %28 = arith.mulf %25, %27 : vector<8x512xf32>
    %29 = vector.extract_strided_slice %13 {offsets = [0, 1], sizes = [8, 1], strides = [1, 1]} : vector<8x9xf32> to vector<8x1xf32>
    %30 = vector.broadcast %29 : vector<8x1xf32> to vector<8x512xf32>
    %31 = arith.mulf %28, %30 : vector<8x512xf32>
    %32 = arith.addf %24, %31 : vector<8x512xf32>
    %c15_i32 = arith.constant 15 : i32
    %33 = tpu.dynamic_rotate %12 by %c15_i32 dim 1 : vector<8x512xf32>, i32 -> vector<8x512xf32>
    %c2 = arith.constant 2 : index
    %c0_11 = arith.constant 0 : index
    %34 = vector.load %arg1[%c2, %c0_11] : memref<9x512xf32, #tpu.memory_space<vmem>>, vector<1x512xf32>
    %35 = vector.broadcast %34 : vector<1x512xf32> to vector<8x512xf32>
    %36 = arith.mulf %33, %35 : vector<8x512xf32>
    %37 = vector.extract_strided_slice %13 {offsets = [0, 2], sizes = [8, 1], strides = [1, 1]} : vector<8x9xf32> to vector<8x1xf32>
    %38 = vector.broadcast %37 : vector<8x1xf32> to vector<8x512xf32>
    %39 = arith.mulf %36, %38 : vector<8x512xf32>
    %40 = arith.addf %32, %39 : vector<8x512xf32>
    %c1_i32 = arith.constant 1 : i32
    %41 = tpu.dynamic_rotate %12 by %c1_i32 dim 1 : vector<8x512xf32>, i32 -> vector<8x512xf32>
    %c3 = arith.constant 3 : index
    %c0_12 = arith.constant 0 : index
    %42 = vector.load %arg1[%c3, %c0_12] : memref<9x512xf32, #tpu.memory_space<vmem>>, vector<1x512xf32>
    %43 = vector.broadcast %42 : vector<1x512xf32> to vector<8x512xf32>
    %44 = arith.mulf %41, %43 : vector<8x512xf32>
    %45 = vector.extract_strided_slice %13 {offsets = [0, 3], sizes = [8, 1], strides = [1, 1]} : vector<8x9xf32> to vector<8x1xf32>
    %46 = vector.broadcast %45 : vector<8x1xf32> to vector<8x512xf32>
    %47 = arith.mulf %44, %46 : vector<8x512xf32>
    %48 = arith.addf %40, %47 : vector<8x512xf32>
    %c511_i32 = arith.constant 511 : i32
    %49 = tpu.dynamic_rotate %12 by %c511_i32 dim 1 : vector<8x512xf32>, i32 -> vector<8x512xf32>
    %c5 = arith.constant 5 : index
    %c0_13 = arith.constant 0 : index
    %50 = vector.load %arg1[%c5, %c0_13] : memref<9x512xf32, #tpu.memory_space<vmem>>, vector<1x512xf32>
    %51 = vector.broadcast %50 : vector<1x512xf32> to vector<8x512xf32>
    %52 = arith.mulf %49, %51 : vector<8x512xf32>
    %53 = vector.extract_strided_slice %13 {offsets = [0, 5], sizes = [8, 1], strides = [1, 1]} : vector<8x9xf32> to vector<8x1xf32>
    %54 = vector.broadcast %53 : vector<8x1xf32> to vector<8x512xf32>
    %55 = arith.mulf %52, %54 : vector<8x512xf32>
    %56 = arith.addf %48, %55 : vector<8x512xf32>
    %c497_i32 = arith.constant 497 : i32
    %57 = tpu.dynamic_rotate %12 by %c497_i32 dim 1 : vector<8x512xf32>, i32 -> vector<8x512xf32>
    %c6 = arith.constant 6 : index
    %c0_14 = arith.constant 0 : index
    %58 = vector.load %arg1[%c6, %c0_14] : memref<9x512xf32, #tpu.memory_space<vmem>>, vector<1x512xf32>
    %59 = vector.broadcast %58 : vector<1x512xf32> to vector<8x512xf32>
    %60 = arith.mulf %57, %59 : vector<8x512xf32>
    %61 = vector.extract_strided_slice %13 {offsets = [0, 6], sizes = [8, 1], strides = [1, 1]} : vector<8x9xf32> to vector<8x1xf32>
    %62 = vector.broadcast %61 : vector<8x1xf32> to vector<8x512xf32>
    %63 = arith.mulf %60, %62 : vector<8x512xf32>
    %64 = arith.addf %56, %63 : vector<8x512xf32>
    %c496_i32 = arith.constant 496 : i32
    %65 = tpu.dynamic_rotate %12 by %c496_i32 dim 1 : vector<8x512xf32>, i32 -> vector<8x512xf32>
    %c7 = arith.constant 7 : index
    %c0_15 = arith.constant 0 : index
    %66 = vector.load %arg1[%c7, %c0_15] : memref<9x512xf32, #tpu.memory_space<vmem>>, vector<1x512xf32>
    %67 = vector.broadcast %66 : vector<1x512xf32> to vector<8x512xf32>
    %68 = arith.mulf %65, %67 : vector<8x512xf32>
    %69 = vector.extract_strided_slice %13 {offsets = [0, 7], sizes = [8, 1], strides = [1, 1]} : vector<8x9xf32> to vector<8x1xf32>
    %70 = vector.broadcast %69 : vector<8x1xf32> to vector<8x512xf32>
    %71 = arith.mulf %68, %70 : vector<8x512xf32>
    %72 = arith.addf %64, %71 : vector<8x512xf32>
    %c495_i32 = arith.constant 495 : i32
    %73 = tpu.dynamic_rotate %12 by %c495_i32 dim 1 : vector<8x512xf32>, i32 -> vector<8x512xf32>
    %c8 = arith.constant 8 : index
    %c0_16 = arith.constant 0 : index
    %74 = vector.load %arg1[%c8, %c0_16] : memref<9x512xf32, #tpu.memory_space<vmem>>, vector<1x512xf32>
    %75 = vector.broadcast %74 : vector<1x512xf32> to vector<8x512xf32>
    %76 = arith.mulf %73, %75 : vector<8x512xf32>
    %77 = vector.extract_strided_slice %13 {offsets = [0, 8], sizes = [8, 1], strides = [1, 1]} : vector<8x9xf32> to vector<8x1xf32>
    %78 = vector.broadcast %77 : vector<8x1xf32> to vector<8x512xf32>
    %79 = arith.mulf %76, %78 : vector<8x512xf32>
    %80 = arith.addf %72, %79 : vector<8x512xf32>
    %c0_17 = arith.constant 0 : index
    %c0_18 = arith.constant 0 : index
    %81 = vector.load %arg6[%c0_17, %c0_18] : memref<8x8xbf16, #tpu.memory_space<vmem>>, vector<8x8xbf16>
    %82 = arith.truncf %80 : vector<8x512xf32> to vector<8x512xbf16>
    %cst_19 = arith.constant dense<0.000000e+00> : vector<8x512xf32>
    %83 = tpu.matmul %81, %82, %cst_19 {dimension_numbers = #tpu.dot_dimension_numbers<[1], [0], [0], [1], [0, 0, 1, 1], [], []>} : vector<8x8xbf16>, vector<8x512xbf16>, vector<8x512xf32> -> vector<8x512xf32>
    %c0_20 = arith.constant 0 : index
    %c1_21 = arith.constant 1 : index
    %84 = vector.load %arg10[%c0_20, %c1_21] : memref<8x5xf32, #tpu.memory_space<vmem>>, vector<8x1xf32>
    %85 = vector.broadcast %84 : vector<8x1xf32> to vector<8x512xf32>
    %86 = arith.addf %83, %85 : vector<8x512xf32>
    %c0_22 = arith.constant 0 : index
    %c0_23 = arith.constant 0 : index
    %87 = vector.load %arg2[%c0_22, %c0_23] : memref<512x2xf32, #tpu.memory_space<vmem>>, vector<512x2xf32>
    %cst_24 = arith.constant dense<0.000000e+00> : vector<8x2xf32>
    %88 = tpu.matmul %86, %87, %cst_24 {dimension_numbers = #tpu.dot_dimension_numbers<[1], [0], [0], [1], [0, 0, 1, 1], [], []>} : vector<8x512xf32>, vector<512x2xf32>, vector<8x2xf32> -> vector<8x2xf32>
    %c0_25 = arith.constant 0 : index
    %c0_26 = arith.constant 0 : index
    %89 = vector.load %arg7[%c0_25, %c0_26] : memref<2x8xf32, #tpu.memory_space<vmem>>, vector<2x8xf32>
    %cst_27 = arith.constant dense<0.000000e+00> : vector<2x2xf32>
    %90 = tpu.matmul %89, %88, %cst_27 {dimension_numbers = #tpu.dot_dimension_numbers<[1], [0], [0], [1], [0, 0, 1, 1], [], []>} : vector<2x8xf32>, vector<8x2xf32>, vector<2x2xf32> -> vector<2x2xf32>
    %c0_28 = arith.constant 0 : index
    %c2_29 = arith.constant 2 : index
    %91 = vector.load %arg10[%c0_28, %c2_29] : memref<8x5xf32, #tpu.memory_space<vmem>>, vector<2x1xf32>
    %92 = vector.broadcast %91 : vector<2x1xf32> to vector<2x2xf32>
    %93 = arith.addf %90, %92 : vector<2x2xf32>
    %94 = arith.negf %93 : vector<2x2xf32>
    %95 = math.exp %94 : vector<2x2xf32>
    %cst_30 = arith.constant 1.000000e+00 : f32
    %96 = vector.broadcast %cst_30 : f32 to vector<2x2xf32>
    %97 = arith.addf %96, %95 : vector<2x2xf32>
    %98 = arith.divf %96, %97 : vector<2x2xf32>
    %99 = arith.mulf %93, %98 : vector<2x2xf32>
    %c0_31 = arith.constant 0 : index
    %c0_32 = arith.constant 0 : index
    %100 = vector.load %arg8[%c0_31, %c0_32] : memref<8x2xf32, #tpu.memory_space<vmem>>, vector<8x2xf32>
    %cst_33 = arith.constant dense<0.000000e+00> : vector<8x2xf32>
    %101 = tpu.matmul %100, %99, %cst_33 {dimension_numbers = #tpu.dot_dimension_numbers<[1], [0], [0], [1], [0, 0, 1, 1], [], []>} : vector<8x2xf32>, vector<2x2xf32>, vector<8x2xf32> -> vector<8x2xf32>
    %c0_34 = arith.constant 0 : index
    %c3_35 = arith.constant 3 : index
    %102 = vector.load %arg10[%c0_34, %c3_35] : memref<8x5xf32, #tpu.memory_space<vmem>>, vector<8x1xf32>
    %103 = vector.broadcast %102 : vector<8x1xf32> to vector<8x2xf32>
    %104 = arith.addf %101, %103 : vector<8x2xf32>
    %105 = arith.negf %104 : vector<8x2xf32>
    %106 = math.exp %105 : vector<8x2xf32>
    %cst_36 = arith.constant 1.000000e+00 : f32
    %107 = vector.broadcast %cst_36 : f32 to vector<8x2xf32>
    %108 = arith.addf %107, %106 : vector<8x2xf32>
    %109 = arith.divf %107, %108 : vector<8x2xf32>
    %c0_37 = arith.constant 0 : index
    %c0_38 = arith.constant 0 : index
    %110 = vector.load %arg3[%c0_37, %c0_38] : memref<2x512xf32, #tpu.memory_space<vmem>>, vector<2x512xf32>
    %cst_39 = arith.constant dense<0.000000e+00> : vector<8x512xf32>
    %111 = tpu.matmul %109, %110, %cst_39 {dimension_numbers = #tpu.dot_dimension_numbers<[1], [0], [0], [1], [0, 0, 1, 1], [], []>} : vector<8x2xf32>, vector<2x512xf32>, vector<8x512xf32> -> vector<8x512xf32>
    %112 = arith.mulf %86, %111 : vector<8x512xf32>
    %c0_40 = arith.constant 0 : index
    %c0_41 = arith.constant 0 : index
    %113 = vector.load %arg9[%c0_40, %c0_41] : memref<4x8xbf16, #tpu.memory_space<vmem>>, vector<4x8xbf16>
    %114 = arith.truncf %112 : vector<8x512xf32> to vector<8x512xbf16>
    %cst_42 = arith.constant dense<0.000000e+00> : vector<4x512xf32>
    %115 = tpu.matmul %113, %114, %cst_42 {dimension_numbers = #tpu.dot_dimension_numbers<[1], [0], [0], [1], [0, 0, 1, 1], [], []>} : vector<4x8xbf16>, vector<8x512xbf16>, vector<4x512xf32> -> vector<4x512xf32>
    %c0_43 = arith.constant 0 : index
    %c4 = arith.constant 4 : index
    %116 = vector.load %arg10[%c0_43, %c4] : memref<8x5xf32, #tpu.memory_space<vmem>>, vector<4x1xf32>
    %117 = vector.broadcast %116 : vector<4x1xf32> to vector<4x512xf32>
    %118 = arith.addf %115, %117 : vector<4x512xf32>
    %119 = arith.addf %118, %0 : vector<4x512xf32>
    %c0_44 = arith.constant 0 : index
    %c0_45 = arith.constant 0 : index
    %120 = vector.load %arg11[%c0_44, %c0_45] : memref<4x512xf32, #tpu.memory_space<vmem>>, vector<4x512xf32>
    tpu.vector_store %arg11[%c0_44, %c0_45], %119 {strides = array<i32>} : memref<4x512xf32, #tpu.memory_space<vmem>>, vector<4x512xf32>,
    return
  }
}

module attributes {stable_mosaic.version = 11 : i64} {
  func.func @_mbconv_kernel(%arg0: memref<4x512xf32, #tpu.memory_space<vmem>>, %arg1: memref<9x512xf32, #tpu.memory_space<vmem>>, %arg2: memref<512x2xf32, #tpu.memory_space<vmem>>, %arg3: memref<2x512xf32, #tpu.memory_space<vmem>>, %arg4: memref<8x4xbf16, #tpu.memory_space<vmem>>, %arg5: memref<8x9xf32, #tpu.memory_space<vmem>>, %arg6: memref<8x8xbf16, #tpu.memory_space<vmem>>, %arg7: memref<2x8xf32, #tpu.memory_space<vmem>>, %arg8: memref<8x2xf32, #tpu.memory_space<vmem>>, %arg9: memref<4x8xbf16, #tpu.memory_space<vmem>>, %arg10: memref<8x5xf32, #tpu.memory_space<vmem>>, %arg11: memref<4x512xf32, #tpu.memory_space<vmem>>) attributes {dimension_semantics = [], scalar_prefetch = 0 : i64, scratch_operands = 0 : i64, tpu.core_type = #tpu.core_type<tc>} {
    %c0 = arith.constant 0 : index
    %c0_0 = arith.constant 0 : index
    %0 = vector.load %arg0[%c0, %c0_0] : memref<4x512xf32, #tpu.memory_space<vmem>>, vector<4x512xf32>
    %c0_1 = arith.constant 0 : index
    %c0_2 = arith.constant 0 : index
    %1 = vector.load %arg4[%c0_1, %c0_2] : memref<8x4xbf16, #tpu.memory_space<vmem>>, vector<8x4xbf16>
    %2 = arith.truncf %0 : vector<4x512xf32> to vector<4x512xbf16>
    %cst = arith.constant dense<0.000000e+00> : vector<8x512xf32>
    %3 = tpu.matmul %1, %2, %cst {dimension_numbers = #tpu.dot_dimension_numbers<[1], [0], [0], [1], [0, 0, 1, 1], [], []>} : vector<8x4xbf16>, vector<4x512xbf16>, vector<8x512xf32> -> vector<8x512xf32>
    %c0_3 = arith.constant 0 : index
    %c0_4 = arith.constant 0 : index
    %4 = vector.load %arg10[%c0_3, %c0_4] : memref<8x5xf32, #tpu.memory_space<vmem>>, vector<8x1xf32>
    %5 = vector.broadcast %4 : vector<8x1xf32> to vector<8x512xf32>
    %6 = arith.addf %3, %5 : vector<8x512xf32>
    %7 = arith.negf %6 : vector<8x512xf32>
    %8 = math.exp %7 : vector<8x512xf32>
    %cst_5 = arith.constant 1.000000e+00 : f32
    %9 = vector.broadcast %cst_5 : f32 to vector<8x512xf32>
    %10 = arith.addf %9, %8 : vector<8x512xf32>
    %11 = arith.divf %9, %10 : vector<8x512xf32>
    %12 = arith.mulf %6, %11 : vector<8x512xf32>
    %c0_6 = arith.constant 0 : index
    %c0_7 = arith.constant 0 : index
    %13 = vector.load %arg5[%c0_6, %c0_7] : memref<8x9xf32, #tpu.memory_space<vmem>>, vector<8x9xf32>
    %14 = vector.extract_strided_slice %13 {offsets = [0, 4], sizes = [8, 1], strides = [1, 1]} : vector<8x9xf32> to vector<8x1xf32>
    %15 = vector.broadcast %14 : vector<8x1xf32> to vector<8x512xf32>
    %16 = arith.mulf %12, %15 : vector<8x512xf32>
    %c17_i32 = arith.constant 17 : i32
    %17 = tpu.dynamic_rotate %12 by %c17_i32 dim 1 : vector<8x512xf32>, i32 -> vector<8x512xf32>
    %c0_8 = arith.constant 0 : index
    %c0_9 = arith.constant 0 : index
    %18 = vector.load %arg1[%c0_8, %c0_9] : memref<9x512xf32, #tpu.memory_space<vmem>>, vector<1x512xf32>
    %19 = vector.broadcast %18 : vector<1x512xf32> to vector<8x512xf32>
    %20 = arith.mulf %17, %19 : vector<8x512xf32>
    %21 = vector.extract_strided_slice %13 {offsets = [0, 0], sizes = [8, 1], strides = [1, 1]} : vector<8x9xf32> to vector<8x1xf32>
    %22 = vector.broadcast %21 : vector<8x1xf32> to vector<8x512xf32>
    %23 = arith.mulf %20, %22 : vector<8x512xf32>
    %24 = arith.addf %16, %23 : vector<8x512xf32>
    %c16_i32 = arith.constant 16 : i32
    %25 = tpu.dynamic_rotate %12 by %c16_i32 dim 1 : vector<8x512xf32>, i32 -> vector<8x512xf32>
    %c1 = arith.constant 1 : index
    %c0_10 = arith.constant 0 : index
    %26 = vector.load %arg1[%c1, %c0_10] : memref<9x512xf32, #tpu.memory_space<vmem>>, vector<1x512xf32>
    %27 = vector.broadcast %26 : vector<1x512xf32> to vector<8x512xf32>
    %28 = arith.mulf %25, %27 : vector<8x512xf32>
    %29 = vector.extract_strided_slice %13 {offsets = [0, 1], sizes = [8, 1], strides = [1, 1]} : vector<8x9xf32> to vector<8x1xf32>
    %30 = vector.broadcast %29 : vector<8x1xf32> to vector<8x512xf32>
    %31 = arith.mulf %28, %30 : vector<8x512xf32>
    %32 = arith.addf %24, %31 : vector<8x512xf32>
    %c15_i32 = arith.constant 15 : i32
    %33 = tpu.dynamic_rotate %12 by %c15_i32 dim 1 : vector<8x512xf32>, i32 -> vector<8x512xf32>
    %c2 = arith.constant 2 : index
    %c0_11 = arith.constant 0 : index
    %34 = vector.load %arg1[%c2, %c0_11] : memref<9x512xf32, #tpu.memory_space<vmem>>, vector<1x512xf32>
    %35 = vector.broadcast %34 : vector<1x512xf32> to vector<8x512xf32>
    %36 = arith.mulf %33, %35 : vector<8x512xf32>
    %37 = vector.extract_strided_slice %13 {offsets = [0, 2], sizes = [8, 1], strides = [1, 1]} : vector<8x9xf32> to vector<8x1xf32>
    %38 = vector.broadcast %37 : vector<8x1xf32> to vector<8x512xf32>
    %39 = arith.mulf %36, %38 : vector<8x512xf32>
    %40 = arith.addf %32, %39 : vector<8x512xf32>
    %c1_i32 = arith.constant 1 : i32
    %41 = tpu.dynamic_rotate %12 by %c1_i32 dim 1 : vector<8x512xf32>, i32 -> vector<8x512xf32>
    %c3 = arith.constant 3 : index
    %c0_12 = arith.constant 0 : index
    %42 = vector.load %arg1[%c3, %c0_12] : memref<9x512xf32, #tpu.memory_space<vmem>>, vector<1x512xf32>
    %43 = vector.broadcast %42 : vector<1x512xf32> to vector<8x512xf32>
    %44 = arith.mulf %41, %43 : vector<8x512xf32>
    %45 = vector.extract_strided_slice %13 {offsets = [0, 3], sizes = [8, 1], strides = [1, 1]} : vector<8x9xf32> to vector<8x1xf32>
    %46 = vector.broadcast %45 : vector<8x1xf32> to vector<8x512xf32>
    %47 = arith.mulf %44, %46 : vector<8x512xf32>
    %48 = arith.addf %40, %47 : vector<8x512xf32>
    %c511_i32 = arith.constant 511 : i32
    %49 = tpu.dynamic_rotate %12 by %c511_i32 dim 1 : vector<8x512xf32>, i32 -> vector<8x512xf32>
    %c5 = arith.constant 5 : index
    %c0_13 = arith.constant 0 : index
    %50 = vector.load %arg1[%c5, %c0_13] : memref<9x512xf32, #tpu.memory_space<vmem>>, vector<1x512xf32>
    %51 = vector.broadcast %50 : vector<1x512xf32> to vector<8x512xf32>
    %52 = arith.mulf %49, %51 : vector<8x512xf32>
    %53 = vector.extract_strided_slice %13 {offsets = [0, 5], sizes = [8, 1], strides = [1, 1]} : vector<8x9xf32> to vector<8x1xf32>
    %54 = vector.broadcast %53 : vector<8x1xf32> to vector<8x512xf32>
    %55 = arith.mulf %52, %54 : vector<8x512xf32>
    %56 = arith.addf %48, %55 : vector<8x512xf32>
    %c497_i32 = arith.constant 497 : i32
    %57 = tpu.dynamic_rotate %12 by %c497_i32 dim 1 : vector<8x512xf32>, i32 -> vector<8x512xf32>
    %c6 = arith.constant 6 : index
    %c0_14 = arith.constant 0 : index
    %58 = vector.load %arg1[%c6, %c0_14] : memref<9x512xf32, #tpu.memory_space<vmem>>, vector<1x512xf32>
    %59 = vector.broadcast %58 : vector<1x512xf32> to vector<8x512xf32>
    %60 = arith.mulf %57, %59 : vector<8x512xf32>
    %61 = vector.extract_strided_slice %13 {offsets = [0, 6], sizes = [8, 1], strides = [1, 1]} : vector<8x9xf32> to vector<8x1xf32>
    %62 = vector.broadcast %61 : vector<8x1xf32> to vector<8x512xf32>
    %63 = arith.mulf %60, %62 : vector<8x512xf32>
    %64 = arith.addf %56, %63 : vector<8x512xf32>
    %c496_i32 = arith.constant 496 : i32
    %65 = tpu.dynamic_rotate %12 by %c496_i32 dim 1 : vector<8x512xf32>, i32 -> vector<8x512xf32>
    %c7 = arith.constant 7 : index
    %c0_15 = arith.constant 0 : index
    %66 = vector.load %arg1[%c7, %c0_15] : memref<9x512xf32, #tpu.memory_space<vmem>>, vector<1x512xf32>
    %67 = vector.broadcast %66 : vector<1x512xf32> to vector<8x512xf32>
    %68 = arith.mulf %65, %67 : vector<8x512xf32>
    %69 = vector.extract_strided_slice %13 {offsets = [0, 7], sizes = [8, 1], strides = [1, 1]} : vector<8x9xf32> to vector<8x1xf32>
    %70 = vector.broadcast %69 : vector<8x1xf32> to vector<8x512xf32>
    %71 = arith.mulf %68, %70 : vector<8x512xf32>
    %72 = arith.addf %64, %71 : vector<8x512xf32>
    %c495_i32 = arith.constant 495 : i32
    %73 = tpu.dynamic_rotate %12 by %c495_i32 dim 1 : vector<8x512xf32>, i32 -> vector<8x512xf32>
    %c8 = arith.constant 8 : index
    %c0_16 = arith.constant 0 : index
    %74 = vector.load %arg1[%c8, %c0_16] : memref<9x512xf32, #tpu.memory_space<vmem>>, vector<1x512xf32>
    %75 = vector.broadcast %74 : vector<1x512xf32> to vector<8x512xf32>
    %76 = arith.mulf %73, %75 : vector<8x512xf32>
    %77 = vector.extract_strided_slice %13 {offsets = [0, 8], sizes = [8, 1], strides = [1, 1]} : vector<8x9xf32> to vector<8x1xf32>
    %78 = vector.broadcast %77 : vector<8x1xf32> to vector<8x512xf32>
    %79 = arith.mulf %76, %78 : vector<8x512xf32>
    %80 = arith.addf %72, %79 : vector<8x512xf32>
    %c0_17 = arith.constant 0 : index
    %c0_18 = arith.constant 0 : index
    %81 = vector.load %arg6[%c0_17, %c0_18] : memref<8x8xbf16, #tpu.memory_space<vmem>>, vector<8x8xbf16>
    %82 = arith.truncf %80 : vector<8x512xf32> to vector<8x512xbf16>
    %cst_19 = arith.constant dense<0.000000e+00> : vector<8x512xf32>
    %83 = tpu.matmul %81, %82, %cst_19 {dimension_numbers = #tpu.dot_dimension_numbers<[1], [0], [0], [1], [0, 0, 1, 1], [], []>} : vector<8x8xbf16>, vector<8x512xbf16>, vector<8x512xf32> -> vector<8x512xf32>
    %c0_20 = arith.constant 0 : index
    %c1_21 = arith.constant 1 : index
    %84 = vector.load %arg10[%c0_20, %c1_21] : memref<8x5xf32, #tpu.memory_space<vmem>>, vector<8x1xf32>
    %85 = vector.broadcast %84 : vector<8x1xf32> to vector<8x512xf32>
    %86 = arith.addf %83, %85 : vector<8x512xf32>
    %c0_22 = arith.constant 0 : index
    %c0_23 = arith.constant 0 : index
    %87 = vector.load %arg2[%c0_22, %c0_23] : memref<512x2xf32, #tpu.memory_space<vmem>>, vector<512x2xf32>
    %cst_24 = arith.constant dense<0.000000e+00> : vector<8x2xf32>
    %88 = tpu.matmul %86, %87, %cst_24 {dimension_numbers = #tpu.dot_dimension_numbers<[1], [0], [0], [1], [0, 0, 1, 1], [], []>} : vector<8x512xf32>, vector<512x2xf32>, vector<8x2xf32> -> vector<8x2xf32>
    %c0_25 = arith.constant 0 : index
    %c0_26 = arith.constant 0 : index
    %89 = vector.load %arg7[%c0_25, %c0_26] : memref<2x8xf32, #tpu.memory_space<vmem>>, vector<2x8xf32>
    %cst_27 = arith.constant dense<0.000000e+00> : vector<2x2xf32>
    %90 = tpu.matmul %89, %88, %cst_27 {dimension_numbers = #tpu.dot_dimension_numbers<[1], [0], [0], [1], [0, 0, 1, 1], [], []>} : vector<2x8xf32>, vector<8x2xf32>, vector<2x2xf32> -> vector<2x2xf32>
    %c0_28 = arith.constant 0 : index
    %c2_29 = arith.constant 2 : index
    %91 = vector.load %arg10[%c0_28, %c2_29] : memref<8x5xf32, #tpu.memory_space<vmem>>, vector<2x1xf32>
    %92 = vector.broadcast %91 : vector<2x1xf32> to vector<2x2xf32>
    %93 = arith.addf %90, %92 : vector<2x2xf32>
    %94 = arith.negf %93 : vector<2x2xf32>
    %95 = math.exp %94 : vector<2x2xf32>
    %cst_30 = arith.constant 1.000000e+00 : f32
    %96 = vector.broadcast %cst_30 : f32 to vector<2x2xf32>
    %97 = arith.addf %96, %95 : vector<2x2xf32>
    %98 = arith.divf %96, %97 : vector<2x2xf32>
    %99 = arith.mulf %93, %98 : vector<2x2xf32>
    %c0_31 = arith.constant 0 : index
    %c0_32 = arith.constant 0 : index
    %100 = vector.load %arg8[%c0_31, %c0_32] : memref<8x2xf32, #tpu.memory_space<vmem>>, vector<8x2xf32>
    %cst_33 = arith.constant dense<0.000000e+00> : vector<8x2xf32>
    %101 = tpu.matmul %100, %99, %cst_33 {dimension_numbers = #tpu.dot_dimension_numbers<[1], [0], [0], [1], [0, 0, 1, 1], [], []>} : vector<8x2xf32>, vector<2x2xf32>, vector<8x2xf32> -> vector<8x2xf32>
    %c0_34 = arith.constant 0 : index
    %c3_35 = arith.constant 3 : index
    %102 = vector.load %arg10[%c0_34, %c3_35] : memref<8x5xf32, #tpu.memory_space<vmem>>, vector<8x1xf32>
    %103 = vector.broadcast %102 : vector<8x1xf32> to vector<8x2xf32>
    %104 = arith.addf %101, %103 : vector<8x2xf32>
    %105 = arith.negf %104 : vector<8x2xf32>
    %106 = math.exp %105 : vector<8x2xf32>
    %cst_36 = arith.constant 1.000000e+00 : f32
    %107 = vector.broadcast %cst_36 : f32 to vector<8x2xf32>
    %108 = arith.addf %107, %106 : vector<8x2xf32>
    %109 = arith.divf %107, %108 : vector<8x2xf32>
    %c0_37 = arith.constant 0 : index
    %c0_38 = arith.constant 0 : index
    %110 = vector.load %arg3[%c0_37, %c0_38] : memref<2x512xf32, #tpu.memory_space<vmem>>, vector<2x512xf32>
    %cst_39 = arith.constant dense<0.000000e+00> : vector<8x512xf32>
    %111 = tpu.matmul %109, %110, %cst_39 {dimension_numbers = #tpu.dot_dimension_numbers<[1], [0], [0], [1], [0, 0, 1, 1], [], []>} : vector<8x2xf32>, vector<2x512xf32>, vector<8x512xf32> -> vector<8x512xf32>
    %112 = arith.mulf %86, %111 : vector<8x512xf32>
    %c0_40 = arith.constant 0 : index
    %c0_41 = arith.constant 0 : index
    %113 = vector.load %arg9[%c0_40, %c0_41] : memref<4x8xbf16, #tpu.memory_space<vmem>>, vector<4x8xbf16>
    %114 = arith.truncf %112 : vector<8x512xf32> to vector<8x512xbf16>
    %cst_42 = arith.constant dense<0.000000e+00> : vector<4x512xf32>
    %115 = tpu.matmul %113, %114, %cst_42 {dimension_numbers = #tpu.dot_dimension_numbers<[1], [0], [0], [1], [0, 0, 1, 1], [], []>} : vector<4x8xbf16>, vector<8x512xbf16>, vector<4x512xf32> -> vector<4x512xf32>
    %c0_43 = arith.constant 0 : index
    %c4 = arith.constant 4 : index
    %116 = vector.load %arg10[%c0_43, %c4] : memref<8x5xf32, #tpu.memory_space<vmem>>, vector<4x1xf32>
    %117 = vector.broadcast %116 : vector<4x1xf32> to vector<4x512xf32>
    %118 = arith.addf %115, %117 : vector<4x512xf32>
    %119 = arith.addf %118, %0 : vector<4x512xf32>
    %c0_44 = arith.constant 0 : index
    %c0_45 = arith.constant 0 : index
    %120 = vector.load %arg11[%c0_44, %c0_45] : memref<4x512xf32, #tpu.memory_space<vmem>>, vector<4x512xf32>
    tpu.vector_store %arg11[%c0_44, %c0_45], %119 {strides = array<i32>} : memref<4x512xf32, #tpu.memory_space<vmem>>, vector<4x512xf32>,
    return
  }
}

</mosaic_0001>

<llo_original>
// kernel: _lambda_.3
$region0: #{_lambda_.3}
  #allocation0 [shape = 'u32[]', space=smem, size = 0x4, offset = 0x4, fixed_abs, tag = 'smem constant byte address 0x4 - core index']
  #allocation1 [shape = 'u32[144,128]{1,0:T(1,128)}', space=vmem, size = 0x12000, scoped, tag = 'internal scratch']
  %s0 = inlined_call_operand.vmem [shape: f32[4,512], index: 0, kind: input, shape index: {}]
  %s1 = inlined_call_operand.vmem [shape: f32[9,512], index: 1, kind: input, shape index: {}]
  %s2 = inlined_call_operand.vmem [shape: f32[512,2], index: 2, kind: input, shape index: {}]
  %s3 = inlined_call_operand.vmem [shape: f32[2,512], index: 3, kind: input, shape index: {}]
  %s4 = inlined_call_operand.vmem [shape: bf16[8,4], index: 4, kind: input, shape index: {}]
  %s5 = inlined_call_operand.vmem [shape: f32[8,9], index: 5, kind: input, shape index: {}]
  %s6 = inlined_call_operand.vmem [shape: bf16[8,8], index: 6, kind: input, shape index: {}]
  %s7 = inlined_call_operand.vmem [shape: f32[2,8], index: 7, kind: input, shape index: {}]
  %s8 = inlined_call_operand.vmem [shape: f32[8,2], index: 8, kind: input, shape index: {}]
  %s9 = inlined_call_operand.vmem [shape: bf16[4,8], index: 9, kind: input, shape index: {}]
  %s10 = inlined_call_operand.vmem [shape: f32[8,5], index: 10, kind: input, shape index: {}]
  %s11 = inlined_call_operand.vmem [shape: f32[4,512], index: 11, kind: output, shape index: {}]
  %s12 = sld [smem:[#allocation0]]
  $region54: #{_lambda_.3} parent=0
    _
  %s14 = ssub.s32 1, %s12
  %s15 = scalar_select 0, %s14, %s12
  // Predicated region
  $region2: #{_lambda_.3} parent=0 // pred_check
    _
  $region3: #{_lambda_.3} parent=0 // pred_check_branch
    %17 = sbr.rel (0) target = $region5
  $region4: #{_lambda_.3} parent=0 // pred_region
    _
  $region5: #{_lambda_.3} parent=0 // pred_fallthru
    _
  // Predicated region
  $region6: #{_lambda_.3} parent=0 // pred_check
    _
  $region7: #{_lambda_.3} parent=0 // pred_check_branch
    %19 = sbr.rel (0) target = $region9
  $region8: #{_lambda_.3} parent=0 // pred_region
    _
  $region9: #{_lambda_.3} parent=0 // pred_fallthru
    _
  // Predicated region
  $region10: #{_lambda_.3} parent=0 // pred_check
    _
  $region11: #{_lambda_.3} parent=0 // pred_check_branch
    %21 = sbr.rel (0) target = $region13
  $region12: #{_lambda_.3} parent=0 // pred_region
    _
  $region13: #{_lambda_.3} parent=0 // pred_fallthru
    _
  // Predicated region
  $region14: #{_lambda_.3} parent=0 // pred_check
    _
  $region15: #{_lambda_.3} parent=0 // pred_check_branch
    %23 = sbr.rel (0) target = $region17
  $region16: #{_lambda_.3} parent=0 // pred_region
    _
  $region17: #{_lambda_.3} parent=0 // pred_fallthru
    _
  // Predicated region
  $region18: #{_lambda_.3} parent=0 // pred_check
    _
  $region19: #{_lambda_.3} parent=0 // pred_check_branch
    %25 = sbr.rel (0) target = $region21
  $region20: #{_lambda_.3} parent=0 // pred_region
    _
  $region21: #{_lambda_.3} parent=0 // pred_fallthru
    _
  // Predicated region
  $region22: #{_lambda_.3} parent=0 // pred_check
    _
  $region23: #{_lambda_.3} parent=0 // pred_check_branch
    %27 = sbr.rel (0) target = $region25
  $region24: #{_lambda_.3} parent=0 // pred_region
    _
  $region25: #{_lambda_.3} parent=0 // pred_fallthru
    _
  // Predicated region
  $region26: #{_lambda_.3} parent=0 // pred_check
    _
  $region27: #{_lambda_.3} parent=0 // pred_check_branch
    %29 = sbr.rel (0) target = $region29
  $region28: #{_lambda_.3} parent=0 // pred_region
    _
  $region29: #{_lambda_.3} parent=0 // pred_fallthru
    _
  // Predicated region
  $region30: #{_lambda_.3} parent=0 // pred_check
    _
  $region31: #{_lambda_.3} parent=0 // pred_check_branch
    %31 = sbr.rel (0) target = $region33
  $region32: #{_lambda_.3} parent=0 // pred_region
    _
  $region33: #{_lambda_.3} parent=0 // pred_fallthru
    _
  // Predicated region
  $region34: #{_lambda_.3} parent=0 // pred_check
    _
  $region35: #{_lambda_.3} parent=0 // pred_check_branch
    %33 = sbr.rel (0) target = $region37
  $region36: #{_lambda_.3} parent=0 // pred_region
    _
  $region37: #{_lambda_.3} parent=0 // pred_fallthru
    _
  // Predicated region
  $region38: #{_lambda_.3} parent=0 // pred_check
    _
  $region39: #{_lambda_.3} parent=0 // pred_check_branch
    %35 = sbr.rel (0) target = $region41
  $region40: #{_lambda_.3} parent=0 // pred_region
    _
  $region41: #{_lambda_.3} parent=0 // pred_fallthru
    _
  // Predicated region
  $region42: #{_lambda_.3} parent=0 // pred_check
    _
  $region43: #{_lambda_.3} parent=0 // pred_check_branch
    %37 = sbr.rel (0) target = $region45
  $region44: #{_lambda_.3} parent=0 // pred_region
    _
  $region45: #{_lambda_.3} parent=0 // pred_fallthru
    _
  %v39 = vld [vmem:[%s0] sm:$0xff]
  %v40 = vld [vmem:[%s0 + $0x8] sm:$0xff]
  %v41 = vld [vmem:[%s4] sm:$0xf]
  %v44 = vcombine.high %v39, %v39
  %v45 = vcombine.high %v40, %v40
  %v48 = vpack.c.bf16 %v39, %v39
  %v49 = vpack.c.bf16 %v44, %v44
  %v50 = vpack.c.bf16 %v40, %v40
  %v51 = vpack.c.bf16 %v45, %v45
  %v52 = vld [vmem:[%s10] sm:$0xff]
  %54 = vset.pattern.permute.xlu0 0
  %55 = vperm.xlu0 %54, %v52
  %v56 = vpop.permute.xlu0 %55
  %vm58 = vcmask 31744
  %v60 = vsel %vm58, %v41, 0
  %vm62 = vcmask 1041408
  %v64 = vsel %vm62, %v48, 0
  %v67 = vsel %vm62, %v49, 0
  %v70 = vsel %vm62, %v50, 0
  %v73 = vsel %vm62, %v51, 0
  %75 = vmatprep.subr.bf16.mxu0 0
  %76 = vmatpush1.bf16.msra.mxu0 0
  %77 = vmatprep.subr.bf16.mxu0 0
  %78 = vmatpush1.bf16.msra.mxu0 0
  %79 = vmatprep.subr.bf16.mxu0 0
  %80 = vmatpush1.bf16.msra.mxu0 0
  %81 = vmatprep.subr.bf16.mxu0 0
  %82 = vmatpush1.bf16.msra.mxu0 0
  %83 = vmatprep.subr.bf16.mxu0 0
  %84 = vmatpush1.bf16.msra.mxu0 0
  %85 = vmatprep.subr.bf16.mxu0 0
  %86 = vmatpush1.bf16.msra.mxu0 0
  %87 = vmatprep.subr.bf16.mxu0 0
  %88 = vmatpush1.bf16.msra.mxu0 0
  %89 = vmatprep.subr.bf16.mxu0 %v67
  %90 = vmatpush1.bf16.msra.mxu0 %v64
  %91 = vmatprep.subr.bf16.mxu0 0
  %92 = vmatpush2.bf16.msra.mxu0 0
  %93 = vmatprep.subr.bf16.mxu0 0
  %94 = vmatpush2.bf16.msra.mxu0 0
  %95 = vmatprep.subr.bf16.mxu0 0
  %96 = vmatpush2.bf16.msra.mxu0 0
  %97 = vmatprep.subr.bf16.mxu0 0
  %98 = vmatpush2.bf16.msra.mxu0 0
  %99 = vmatprep.subr.bf16.mxu0 0
  %100 = vmatpush2.bf16.msra.mxu0 0
  %101 = vmatprep.subr.bf16.mxu0 0
  %102 = vmatpush2.bf16.msra.mxu0 0
  %103 = vmatprep.subr.bf16.mxu0 0
  %104 = vmatpush2.bf16.msra.mxu0 0
  %105 = vmatprep.subr.bf16.mxu0 0
  %106 = vmatpush2.bf16.msra.mxu0 0
  %107 = vmatprep.mubr.bf16.mxu0 0
  %108 = vmatmul.mubr.bf16.gmra.mxu0 %v60
  %v109 = vpop.f32.mrf.mxu0
  %v110 = vadd.f32 %v56, %v109
  %v111 = vpop.f32.mrf.mxu0
  %v112 = vadd.f32 %v56, %v111
  %v113 = vpop.f32.mrf.mxu0
  %v114 = vpop.f32.mrf.mxu0
  %115 = vdwg.mxu0
  %116 = vmatprep.subr.bf16.mxu0 0
  %117 = vmatpush1.bf16.msra.mxu0 0
  %118 = vmatprep.subr.bf16.mxu0 0
  %119 = vmatpush1.bf16.msra.mxu0 0
  %120 = vmatprep.subr.bf16.mxu0 0
  %121 = vmatpush1.bf16.msra.mxu0 0
  %122 = vmatprep.subr.bf16.mxu0 0
  %123 = vmatpush1.bf16.msra.mxu0 0
  %124 = vmatprep.subr.bf16.mxu0 0
  %125 = vmatpush1.bf16.msra.mxu0 0
  %126 = vmatprep.subr.bf16.mxu0 0
  %127 = vmatpush1.bf16.msra.mxu0 0
  %128 = vmatprep.subr.bf16.mxu0 0
  %129 = vmatpush1.bf16.msra.mxu0 0
  %130 = vmatprep.subr.bf16.mxu0 %v73
  %131 = vmatpush1.bf16.msra.mxu0 %v70
  %132 = vmatprep.subr.bf16.mxu0 0
  %133 = vmatpush2.bf16.msra.mxu0 0
  %134 = vmatprep.subr.bf16.mxu0 0
  %135 = vmatpush2.bf16.msra.mxu0 0
  %136 = vmatprep.subr.bf16.mxu0 0
  %137 = vmatpush2.bf16.msra.mxu0 0
  %138 = vmatprep.subr.bf16.mxu0 0
  %139 = vmatpush2.bf16.msra.mxu0 0
  %140 = vmatprep.subr.bf16.mxu0 0
  %141 = vmatpush2.bf16.msra.mxu0 0
  %142 = vmatprep.subr.bf16.mxu0 0
  %143 = vmatpush2.bf16.msra.mxu0 0
  %144 = vmatprep.subr.bf16.mxu0 0
  %145 = vmatpush2.bf16.msra.mxu0 0
  %146 = vmatprep.subr.bf16.mxu0 0
  %147 = vmatpush2.bf16.msra.mxu0 0
  %148 = vmatprep.mubr.bf16.mxu0 0
  %149 = vmatmul.mubr.bf16.gmra.mxu0 %v60
  %v150 = vpop.f32.mrf.mxu0
  %v151 = vadd.f32 %v56, %v150
  %v152 = vpop.f32.mrf.mxu0
  %v153 = vadd.f32 %v56, %v152
  %v154 = vpop.f32.mrf.mxu0
  %v155 = vpop.f32.mrf.mxu0
  %156 = vdwg.mxu0
  %v157 = vxor.u32 %v110, 2147483648
  %v158 = vxor.u32 %v112, 2147483648
  %v159 = vxor.u32 %v151, 2147483648
  %v160 = vxor.u32 %v153, 2147483648
  %v161 = vmul.f32 %v157, 1.442695
  %v162 = vpow.pop %v161
  %v163 = vmul.f32 %v158, 1.442695
  %v164 = vpow.pop %v163
  %v165 = vmul.f32 %v159, 1.442695
  %v166 = vpow.pop %v165
  %v167 = vmul.f32 %v160, 1.442695
  %v168 = vpow.pop %v167
  %v169 = vadd.f32 %v162, 1.0
  %v170 = vadd.f32 %v164, 1.0
  %v171 = vadd.f32 %v166, 1.0
  %v172 = vadd.f32 %v168, 1.0
  %v173 = vrcp.pop %v169
  %v174 = vmul.f32 1.0, %v173
  %v175 = vrcp.pop %v170
  %v176 = vmul.f32 1.0, %v175
  %v177 = vrcp.pop %v171
  %v178 = vmul.f32 1.0, %v177
  %v179 = vrcp.pop %v172
  %v180 = vmul.f32 1.0, %v179
  %v181 = vmul.f32 %v110, %v174
  %v182 = vmul.f32 %v112, %v176
  %v183 = vmul.f32 %v151, %v178
  %v184 = vmul.f32 %v153, %v180
  %v185 = vld [vmem:[%s5] sm:$0xff]
  %187 = vset.pattern.permute.xlu0 4
  %188 = vperm.xlu0 %187, %v185
  %v189 = vpop.permute.xlu0 %188
  %v191 = vmul.f32 %v181, %v189
  %v192 = vmul.f32 %v182, %v189
  %v193 = vmul.f32 %v183, %v189
  %v194 = vmul.f32 %v184, %v189
  %195 = vrot.lane.b32.xlu0 %v181, 17
  %v196 = vpop.permute.xlu0 %195
  %197 = vrot.lane.b32.xlu0 %v182, 17
  %v198 = vpop.permute.xlu0 %197
  %199 = vrot.lane.b32.xlu0 %v183, 17
  %v200 = vpop.permute.xlu0 %199
  %201 = vrot.lane.b32.xlu0 %v184, 17
  %v202 = vpop.permute.xlu0 %201
  %v203 = vlaneseq
  %v204 = vand.u32 %v203, 127
  %vm205 = vcmp.lt.s32.totalorder %v204, 17
  %v206 = vsel %vm205, %v200, %v202
  %v207 = vsel %vm205, %v198, %v200
  %v208 = vsel %vm205, %v196, %v198
  %v209 = vsel %vm205, %v202, %v196
  %v210 = vld [vmem:[%s1] ss:$8 sm:$0xf]
  %v212 = vlaneseq
  %v213 = vshrl.u32 %v212, 7
  %v214 = vsub.s32 0, %v213
  %v215 = vrot.slane %v210, %v214
  %v216 = vlaneseq
  %v217 = vshrl.u32 %v216, 7
  %v218 = vsub.s32 1, %v217
  %v219 = vrot.slane %v210, %v218
  %v220 = vlaneseq
  %v221 = vshrl.u32 %v220, 7
  %v222 = vsub.s32 2, %v221
  %v223 = vrot.slane %v210, %v222
  %v224 = vlaneseq
  %v225 = vshrl.u32 %v224, 7
  %v226 = vsub.s32 3, %v225
  %v227 = vrot.slane %v210, %v226
  %v232 = vmul.f32 %v209, %v215
  %v233 = vmul.f32 %v208, %v219
  %v234 = vmul.f32 %v207, %v223
  %v235 = vmul.f32 %v206, %v227
  %236 = vset.pattern.permute.xlu0 0
  %237 = vperm.xlu0 %236, %v185
  %v238 = vpop.permute.xlu0 %237
  %v240 = vmul.f32 %v232, %v238
  %v241 = vmul.f32 %v233, %v238
  %v242 = vmul.f32 %v234, %v238
  %v243 = vmul.f32 %v235, %v238
  %v244 = vadd.f32 %v191, %v240
  %v245 = vadd.f32 %v192, %v241
  %v246 = vadd.f32 %v193, %v242
  %v247 = vadd.f32 %v194, %v243
  %248 = vrot.lane.b32.xlu0 %v181, 16
  %v249 = vpop.permute.xlu0 %248
  %250 = vrot.lane.b32.xlu0 %v182, 16
  %v251 = vpop.permute.xlu0 %250
  %252 = vrot.lane.b32.xlu0 %v183, 16
  %v253 = vpop.permute.xlu0 %252
  %254 = vrot.lane.b32.xlu0 %v184, 16
  %v255 = vpop.permute.xlu0 %254
  %vm256 = vcmp.lt.s32.totalorder %v204, 16
  %v257 = vsel %vm256, %v253, %v255
  %v258 = vsel %vm256, %v251, %v253
  %v259 = vsel %vm256, %v249, %v251
  %v260 = vsel %vm256, %v255, %v249
  %s261 = scalar_lea.vmem %s1, 1
  %v262 = vld [vmem:[%s261] ss:$8 sm:$0xf]
  %v264 = vlaneseq
  %v265 = vshrl.u32 %v264, 7
  %v266 = vsub.s32 0, %v265
  %v267 = vrot.slane %v262, %v266
  %v268 = vlaneseq
  %v269 = vshrl.u32 %v268, 7
  %v270 = vsub.s32 1, %v269
  %v271 = vrot.slane %v262, %v270
  %v272 = vlaneseq
  %v273 = vshrl.u32 %v272, 7
  %v274 = vsub.s32 2, %v273
  %v275 = vrot.slane %v262, %v274
  %v276 = vlaneseq
  %v277 = vshrl.u32 %v276, 7
  %v278 = vsub.s32 3, %v277
  %v279 = vrot.slane %v262, %v278
  %v284 = vmul.f32 %v260, %v267
  %v285 = vmul.f32 %v259, %v271
  %v286 = vmul.f32 %v258, %v275
  %v287 = vmul.f32 %v257, %v279
  %288 = vset.pattern.permute.xlu0 1
  %289 = vperm.xlu0 %288, %v185
  %v290 = vpop.permute.xlu0 %289
  %v292 = vmul.f32 %v284, %v290
  %v293 = vmul.f32 %v285, %v290
  %v294 = vmul.f32 %v286, %v290
  %v295 = vmul.f32 %v287, %v290
  %v296 = vadd.f32 %v244, %v292
  %v297 = vadd.f32 %v245, %v293
  %v298 = vadd.f32 %v246, %v294
  %v299 = vadd.f32 %v247, %v295
  %300 = vrot.lane.b32.xlu0 %v181, 15
  %v301 = vpop.permute.xlu0 %300
  %302 = vrot.lane.b32.xlu0 %v182, 15
  %v303 = vpop.permute.xlu0 %302
  %304 = vrot.lane.b32.xlu0 %v183, 15
  %v305 = vpop.permute.xlu0 %304
  %306 = vrot.lane.b32.xlu0 %v184, 15
  %v307 = vpop.permute.xlu0 %306
  %vm308 = vcmp.lt.s32.totalorder %v204, 15
  %v309 = vsel %vm308, %v305, %v307
  %v310 = vsel %vm308, %v303, %v305
  %v311 = vsel %vm308, %v301, %v303
  %v312 = vsel %vm308, %v307, %v301
  %s313 = scalar_lea.vmem %s1, 2
  %v314 = vld [vmem:[%s313] ss:$8 sm:$0xf]
  %v316 = vlaneseq
  %v317 = vshrl.u32 %v316, 7
  %v318 = vsub.s32 0, %v317
  %v319 = vrot.slane %v314, %v318
  %v320 = vlaneseq
  %v321 = vshrl.u32 %v320, 7
  %v322 = vsub.s32 1, %v321
  %v323 = vrot.slane %v314, %v322
  %v324 = vlaneseq
  %v325 = vshrl.u32 %v324, 7
  %v326 = vsub.s32 2, %v325
  %v327 = vrot.slane %v314, %v326
  %v328 = vlaneseq
  %v329 = vshrl.u32 %v328, 7
  %v330 = vsub.s32 3, %v329
  %v331 = vrot.slane %v314, %v330
  %v336 = vmul.f32 %v312, %v319
  %v337 = vmul.f32 %v311, %v323
  %v338 = vmul.f32 %v310, %v327
  %v339 = vmul.f32 %v309, %v331
  %340 = vset.pattern.permute.xlu0 2
  %341 = vperm.xlu0 %340, %v185
  %v342 = vpop.permute.xlu0 %341
  %v344 = vmul.f32 %v336, %v342
  %v345 = vmul.f32 %v337, %v342
  %v346 = vmul.f32 %v338, %v342
  %v347 = vmul.f32 %v339, %v342
  %v348 = vadd.f32 %v296, %v344
  %v349 = vadd.f32 %v297, %v345
  %v350 = vadd.f32 %v298, %v346
  %v351 = vadd.f32 %v299, %v347
  %352 = vrot.lane.b32.xlu0 %v181, 1
  %v353 = vpop.permute.xlu0 %352
  %354 = vrot.lane.b32.xlu0 %v182, 1
  %v355 = vpop.permute.xlu0 %354
  %356 = vrot.lane.b32.xlu0 %v183, 1
  %v357 = vpop.permute.xlu0 %356
  %358 = vrot.lane.b32.xlu0 %v184, 1
  %v359 = vpop.permute.xlu0 %358
  %vm360 = vcmp.lt.s32.totalorder %v204, 1
  %v361 = vsel %vm360, %v357, %v359
  %v362 = vsel %vm360, %v355, %v357
  %v363 = vsel %vm360, %v353, %v355
  %v364 = vsel %vm360, %v359, %v353
  %s365 = scalar_lea.vmem %s1, 3
  %v366 = vld [vmem:[%s365] ss:$8 sm:$0xf]
  %v368 = vlaneseq
  %v369 = vshrl.u32 %v368, 7
  %v370 = vsub.s32 0, %v369
  %v371 = vrot.slane %v366, %v370
  %v372 = vlaneseq
  %v373 = vshrl.u32 %v372, 7
  %v374 = vsub.s32 1, %v373
  %v375 = vrot.slane %v366, %v374
  %v376 = vlaneseq
  %v377 = vshrl.u32 %v376, 7
  %v378 = vsub.s32 2, %v377
  %v379 = vrot.slane %v366, %v378
  %v380 = vlaneseq
  %v381 = vshrl.u32 %v380, 7
  %v382 = vsub.s32 3, %v381
  %v383 = vrot.slane %v366, %v382
  %v388 = vmul.f32 %v364, %v371
  %v389 = vmul.f32 %v363, %v375
  %v390 = vmul.f32 %v362, %v379
  %v391 = vmul.f32 %v361, %v383
  %392 = vset.pattern.permute.xlu0 3
  %393 = vperm.xlu0 %392, %v185
  %v394 = vpop.permute.xlu0 %393
  %v396 = vmul.f32 %v388, %v394
  %v397 = vmul.f32 %v389, %v394
  %v398 = vmul.f32 %v390, %v394
  %v399 = vmul.f32 %v391, %v394
  %v400 = vadd.f32 %v348, %v396
  %v401 = vadd.f32 %v349, %v397
  %v402 = vadd.f32 %v350, %v398
  %v403 = vadd.f32 %v351, %v399
  %404 = vrot.lane.b32.xlu0 %v181, 127
  %v405 = vpop.permute.xlu0 %404
  %406 = vrot.lane.b32.xlu0 %v182, 127
  %v407 = vpop.permute.xlu0 %406
  %408 = vrot.lane.b32.xlu0 %v183, 127
  %v409 = vpop.permute.xlu0 %408
  %410 = vrot.lane.b32.xlu0 %v184, 127
  %v411 = vpop.permute.xlu0 %410
  %vm412 = vcmp.lt.s32.totalorder %v204, 127
  %v413 = vsel %vm412, %v409, %v411
  %v414 = vsel %vm412, %v407, %v409
  %v415 = vsel %vm412, %v405, %v407
  %v416 = vsel %vm412, %v411, %v405
  %s417 = scalar_lea.vmem %s1, 5
  %v418 = vld [vmem:[%s417] ss:$8 sm:$0xf]
  %v420 = vlaneseq
  %v421 = vshrl.u32 %v420, 7
  %v422 = vsub.s32 0, %v421
  %v423 = vrot.slane %v418, %v422
  %v424 = vlaneseq
  %v425 = vshrl.u32 %v424, 7
  %v426 = vsub.s32 1, %v425
  %v427 = vrot.slane %v418, %v426
  %v428 = vlaneseq
  %v429 = vshrl.u32 %v428, 7
  %v430 = vsub.s32 2, %v429
  %v431 = vrot.slane %v418, %v430
  %v432 = vlaneseq
  %v433 = vshrl.u32 %v432, 7
  %v434 = vsub.s32 3, %v433
  %v435 = vrot.slane %v418, %v434
  %v440 = vmul.f32 %v415, %v423
  %v441 = vmul.f32 %v414, %v427
  %v442 = vmul.f32 %v413, %v431
  %v443 = vmul.f32 %v416, %v435
  %444 = vset.pattern.permute.xlu0 5
  %445 = vperm.xlu0 %444, %v185
  %v446 = vpop.permute.xlu0 %445
  %v448 = vmul.f32 %v440, %v446
  %v449 = vmul.f32 %v441, %v446
  %v450 = vmul.f32 %v442, %v446
  %v451 = vmul.f32 %v443, %v446
  %v452 = vadd.f32 %v400, %v448
  %v453 = vadd.f32 %v401, %v449
  %v454 = vadd.f32 %v402, %v450
  %v455 = vadd.f32 %v403, %v451
  %456 = vrot.lane.b32.xlu0 %v181, 113
  %v457 = vpop.permute.xlu0 %456
  %458 = vrot.lane.b32.xlu0 %v182, 113
  %v459 = vpop.permute.xlu0 %458
  %460 = vrot.lane.b32.xlu0 %v183, 113
  %v461 = vpop.permute.xlu0 %460
  %462 = vrot.lane.b32.xlu0 %v184, 113
  %v463 = vpop.permute.xlu0 %462
  %vm464 = vcmp.lt.s32.totalorder %v204, 113
  %v465 = vsel %vm464, %v461, %v463
  %v466 = vsel %vm464, %v459, %v461
  %v467 = vsel %vm464, %v457, %v459
  %v468 = vsel %vm464, %v463, %v457
  %s469 = scalar_lea.vmem %s1, 6
  %v470 = vld [vmem:[%s469] ss:$8 sm:$0xf]
  %v472 = vlaneseq
  %v473 = vshrl.u32 %v472, 7
  %v474 = vsub.s32 0, %v473
  %v475 = vrot.slane %v470, %v474
  %v476 = vlaneseq
  %v477 = vshrl.u32 %v476, 7
  %v478 = vsub.s32 1, %v477
  %v479 = vrot.slane %v470, %v478
  %v480 = vlaneseq
  %v481 = vshrl.u32 %v480, 7
  %v482 = vsub.s32 2, %v481
  %v483 = vrot.slane %v470, %v482
  %v484 = vlaneseq
  %v485 = vshrl.u32 %v484, 7
  %v486 = vsub.s32 3, %v485
  %v487 = vrot.slane %v470, %v486
  %v492 = vmul.f32 %v467, %v475
  %v493 = vmul.f32 %v466, %v479
  %v494 = vmul.f32 %v465, %v483
  %v495 = vmul.f32 %v468, %v487
  %496 = vset.pattern.permute.xlu0 6
  %497 = vperm.xlu0 %496, %v185
  %v498 = vpop.permute.xlu0 %497
  %v500 = vmul.f32 %v492, %v498
  %v501 = vmul.f32 %v493, %v498
  %v502 = vmul.f32 %v494, %v498
  %v503 = vmul.f32 %v495, %v498
  %v504 = vadd.f32 %v452, %v500
  %v505 = vadd.f32 %v453, %v501
  %v506 = vadd.f32 %v454, %v502
  %v507 = vadd.f32 %v455, %v503
  %508 = vrot.lane.b32.xlu0 %v181, 112
  %v509 = vpop.permute.xlu0 %508
  %510 = vrot.lane.b32.xlu0 %v182, 112
  %v511 = vpop.permute.xlu0 %510
  %512 = vrot.lane.b32.xlu0 %v183, 112
  %v513 = vpop.permute.xlu0 %512
  %514 = vrot.lane.b32.xlu0 %v184, 112
  %v515 = vpop.permute.xlu0 %514
  %vm516 = vcmp.lt.s32.totalorder %v204, 112
  %v517 = vsel %vm516, %v513, %v515
  %v518 = vsel %vm516, %v511, %v513
  %v519 = vsel %vm516, %v509, %v511
  %v520 = vsel %vm516, %v515, %v509
  %s521 = scalar_lea.vmem %s1, 7
  %v522 = vld [vmem:[%s521] ss:$8 sm:$0xf]
  %v524 = vlaneseq
  %v525 = vshrl.u32 %v524, 7
  %v526 = vsub.s32 0, %v525
  %v527 = vrot.slane %v522, %v526
  %v528 = vlaneseq
  %v529 = vshrl.u32 %v528, 7
  %v530 = vsub.s32 1, %v529
  %v531 = vrot.slane %v522, %v530
  %v532 = vlaneseq
  %v533 = vshrl.u32 %v532, 7
  %v534 = vsub.s32 2, %v533
  %v535 = vrot.slane %v522, %v534
  %v536 = vlaneseq
  %v537 = vshrl.u32 %v536, 7
  %v538 = vsub.s32 3, %v537
  %v539 = vrot.slane %v522, %v538
  %v544 = vmul.f32 %v519, %v527
  %v545 = vmul.f32 %v518, %v531
  %v546 = vmul.f32 %v517, %v535
  %v547 = vmul.f32 %v520, %v539
  %548 = vset.pattern.permute.xlu0 7
  %549 = vperm.xlu0 %548, %v185
  %v550 = vpop.permute.xlu0 %549
  %v552 = vmul.f32 %v544, %v550
  %v553 = vmul.f32 %v545, %v550
  %v554 = vmul.f32 %v546, %v550
  %v555 = vmul.f32 %v547, %v550
  %v556 = vadd.f32 %v504, %v552
  %v557 = vadd.f32 %v505, %v553
  %v558 = vadd.f32 %v506, %v554
  %v559 = vadd.f32 %v507, %v555
  %560 = vrot.lane.b32.xlu0 %v181, 111
  %v561 = vpop.permute.xlu0 %560
  %562 = vrot.lane.b32.xlu0 %v182, 111
  %v563 = vpop.permute.xlu0 %562
  %564 = vrot.lane.b32.xlu0 %v183, 111
  %v565 = vpop.permute.xlu0 %564
  %566 = vrot.lane.b32.xlu0 %v184, 111
  %v567 = vpop.permute.xlu0 %566
  %vm568 = vcmp.lt.s32.totalorder %v204, 111
  %v569 = vsel %vm568, %v565, %v567
  %v570 = vsel %vm568, %v563, %v565
  %v571 = vsel %vm568, %v561, %v563
  %v572 = vsel %vm568, %v567, %v561
  %s573 = scalar_lea.vmem %s1, 32
  %v574 = vld [vmem:[%s573] ss:$8 sm:$0xf]
  %v576 = vlaneseq
  %v577 = vshrl.u32 %v576, 7
  %v578 = vsub.s32 0, %v577
  %v579 = vrot.slane %v574, %v578
  %v580 = vlaneseq
  %v581 = vshrl.u32 %v580, 7
  %v582 = vsub.s32 1, %v581
  %v583 = vrot.slane %v574, %v582
  %v584 = vlaneseq
  %v585 = vshrl.u32 %v584, 7
  %v586 = vsub.s32 2, %v585
  %v587 = vrot.slane %v574, %v586
  %v588 = vlaneseq
  %v589 = vshrl.u32 %v588, 7
  %v590 = vsub.s32 3, %v589
  %v591 = vrot.slane %v574, %v590
  %v596 = vmul.f32 %v571, %v579
  %v597 = vmul.f32 %v570, %v583
  %v598 = vmul.f32 %v569, %v587
  %v599 = vmul.f32 %v572, %v591
  %600 = vset.pattern.permute.xlu0 8
  %601 = vperm.xlu0 %600, %v185
  %v602 = vpop.permute.xlu0 %601
  %v604 = vmul.f32 %v596, %v602
  %v605 = vmul.f32 %v597, %v602
  %v606 = vmul.f32 %v598, %v602
  %v607 = vmul.f32 %v599, %v602
  %v608 = vadd.f32 %v556, %v604
  %v609 = vadd.f32 %v557, %v605
  %v610 = vadd.f32 %v558, %v606
  %v611 = vadd.f32 %v559, %v607
  %v612 = vld [vmem:[%s6] sm:$0xf]
  %v613 = vpack.c.bf16 %v608, %v608
  %v614 = vpack.c.bf16 %v609, %v609
  %v615 = vpack.c.bf16 %v610, %v610
  %v616 = vpack.c.bf16 %v611, %v611
  %617 = vset.pattern.permute.xlu0 1
  %618 = vperm.xlu0 %617, %v52
  %v619 = vpop.permute.xlu0 %618
  %vm621 = vcmask 64512
  %v623 = vsel %vm621, %v612, 0
  %vm625 = vcmask 1043456
  %v627 = vsel %vm625, %v613, 0
  %v630 = vsel %vm625, %v614, 0
  %v633 = vsel %vm625, %v615, 0
  %v636 = vsel %vm625, %v616, 0
  %638 = vmatprep.subr.bf16.mxu0 0
  %639 = vmatpush1.bf16.msra.mxu0 0
  %640 = vmatprep.subr.bf16.mxu0 0
  %641 = vmatpush1.bf16.msra.mxu0 0
  %642 = vmatprep.subr.bf16.mxu0 0
  %643 = vmatpush1.bf16.msra.mxu0 0
  %644 = vmatprep.subr.bf16.mxu0 0
  %645 = vmatpush1.bf16.msra.mxu0 0
  %646 = vmatprep.subr.bf16.mxu0 0
  %647 = vmatpush1.bf16.msra.mxu0 0
  %648 = vmatprep.subr.bf16.mxu0 0
  %649 = vmatpush1.bf16.msra.mxu0 0
  %650 = vmatprep.subr.bf16.mxu0 0
  %651 = vmatpush1.bf16.msra.mxu0 0
  %652 = vmatprep.subr.bf16.mxu0 %v630
  %653 = vmatpush1.bf16.msra.mxu0 %v627
  %654 = vmatprep.subr.bf16.mxu0 0
  %655 = vmatpush2.bf16.msra.mxu0 0
  %656 = vmatprep.subr.bf16.mxu0 0
  %657 = vmatpush2.bf16.msra.mxu0 0
  %658 = vmatprep.subr.bf16.mxu0 0
  %659 = vmatpush2.bf16.msra.mxu0 0
  %660 = vmatprep.subr.bf16.mxu0 0
  %661 = vmatpush2.bf16.msra.mxu0 0
  %662 = vmatprep.subr.bf16.mxu0 0
  %663 = vmatpush2.bf16.msra.mxu0 0
  %664 = vmatprep.subr.bf16.mxu0 0
  %665 = vmatpush2.bf16.msra.mxu0 0
  %666 = vmatprep.subr.bf16.mxu0 0
  %667 = vmatpush2.bf16.msra.mxu0 0
  %668 = vmatprep.subr.bf16.mxu0 0
  %669 = vmatpush2.bf16.msra.mxu0 0
  %670 = vmatprep.mubr.bf16.mxu0 0
  %671 = vmatmul.mubr.bf16.gmra.mxu0 %v623
  %v672 = vpop.f32.mrf.mxu0
  %v673 = vadd.f32 %v619, %v672
  %v674 = vpop.f32.mrf.mxu0
  %v675 = vadd.f32 %v619, %v674
  %v676 = vpop.f32.mrf.mxu0
  %v677 = vpop.f32.mrf.mxu0
  %678 = vdwg.mxu0
  %679 = vmatprep.subr.bf16.mxu0 0
  %680 = vmatpush1.bf16.msra.mxu0 0
  %681 = vmatprep.subr.bf16.mxu0 0
  %682 = vmatpush1.bf16.msra.mxu0 0
  %683 = vmatprep.subr.bf16.mxu0 0
  %684 = vmatpush1.bf16.msra.mxu0 0
  %685 = vmatprep.subr.bf16.mxu0 0
  %686 = vmatpush1.bf16.msra.mxu0 0
  %687 = vmatprep.subr.bf16.mxu0 0
  %688 = vmatpush1.bf16.msra.mxu0 0
  %689 = vmatprep.subr.bf16.mxu0 0
  %690 = vmatpush1.bf16.msra.mxu0 0
  %691 = vmatprep.subr.bf16.mxu0 0
  %692 = vmatpush1.bf16.msra.mxu0 0
  %693 = vmatprep.subr.bf16.mxu0 %v636
  %694 = vmatpush1.bf16.msra.mxu0 %v633
  %695 = vmatprep.subr.bf16.mxu0 0
  %696 = vmatpush2.bf16.msra.mxu0 0
  %697 = vmatprep.subr.bf16.mxu0 0
  %698 = vmatpush2.bf16.msra.mxu0 0
  %699 = vmatprep.subr.bf16.mxu0 0
  %700 = vmatpush2.bf16.msra.mxu0 0
  %701 = vmatprep.subr.bf16.mxu0 0
  %702 = vmatpush2.bf16.msra.mxu0 0
  %703 = vmatprep.subr.bf16.mxu0 0
  %704 = vmatpush2.bf16.msra.mxu0 0
  %705 = vmatprep.subr.bf16.mxu0 0
  %706 = vmatpush2.bf16.msra.mxu0 0
  %707 = vmatprep.subr.bf16.mxu0 0
  %708 = vmatpush2.bf16.msra.mxu0 0
  %709 = vmatprep.subr.bf16.mxu0 0
  %710 = vmatpush2.bf16.msra.mxu0 0
  %711 = vmatprep.mubr.bf16.mxu0 0
  %712 = vmatmul.mubr.bf16.gmra.mxu0 %v623
  %v713 = vpop.f32.mrf.mxu0
  %v714 = vadd.f32 %v619, %v713
  %v715 = vpop.f32.mrf.mxu0
  %v716 = vadd.f32 %v619, %v715
  %v717 = vpop.f32.mrf.mxu0
  %v718 = vpop.f32.mrf.mxu0
  %719 = vdwg.mxu0
  %v720 = vld [vmem:[%s2] sm:$0xff]
  %v721 = vld [vmem:[%s2 + $0x8] sm:$0xff]
  %v722 = vld [vmem:[%s2 + $0x10] sm:$0xff]
  %v723 = vld [vmem:[%s2 + $0x18] sm:$0xff]
  %v724 = vld [vmem:[%s2 + $0x20] sm:$0xff]
  %v725 = vld [vmem:[%s2 + $0x28] sm:$0xff]
  %v726 = vld [vmem:[%s2 + $0x30] sm:$0xff]
  %v727 = vld [vmem:[%s2 + $0x38] sm:$0xff]
  %v728 = vld [vmem:[%s2 + $0x40] sm:$0xff]
  %v729 = vld [vmem:[%s2 + $0x48] sm:$0xff]
  %v730 = vld [vmem:[%s2 + $0x50] sm:$0xff]
  %v731 = vld [vmem:[%s2 + $0x58] sm:$0xff]
  %v732 = vld [vmem:[%s2 + $0x60] sm:$0xff]
  %v733 = vld [vmem:[%s2 + $0x68] sm:$0xff]
  %v734 = vld [vmem:[%s2 + $0x70] sm:$0xff]
  %v735 = vld [vmem:[%s2 + $0x78] sm:$0xff]
  %v736 = vld [vmem:[%s2 + $0x80] sm:$0xff]
  %v737 = vld [vmem:[%s2 + $0x88] sm:$0xff]
  %v738 = vld [vmem:[%s2 + $0x90] sm:$0xff]
  %v739 = vld [vmem:[%s2 + $0x98] sm:$0xff]
  %v740 = vld [vmem:[%s2 + $0xa0] sm:$0xff]
  %v741 = vld [vmem:[%s2 + $0xa8] sm:$0xff]
  %v742 = vld [vmem:[%s2 + $0xb0] sm:$0xff]
  %v743 = vld [vmem:[%s2 + $0xb8] sm:$0xff]
  %v744 = vld [vmem:[%s2 + $0xc0] sm:$0xff]
  %v745 = vld [vmem:[%s2 + $0xc8] sm:$0xff]
  %v746 = vld [vmem:[%s2 + $0xd0] sm:$0xff]
  %v747 = vld [vmem:[%s2 + $0xd8] sm:$0xff]
  %v748 = vld [vmem:[%s2 + $0xe0] sm:$0xff]
  %v749 = vld [vmem:[%s2 + $0xe8] sm:$0xff]
  %v750 = vld [vmem:[%s2 + $0xf0] sm:$0xff]
  %v751 = vld [vmem:[%s2 + $0xf8] sm:$0xff]
  %v752 = vld [vmem:[%s2 + $0x100] sm:$0xff]
  %v753 = vld [vmem:[%s2 + $0x108] sm:$0xff]
  %v754 = vld [vmem:[%s2 + $0x110] sm:$0xff]
  %v755 = vld [vmem:[%s2 + $0x118] sm:$0xff]
  %v756 = vld [vmem:[%s2 + $0x120] sm:$0xff]
  %v757 = vld [vmem:[%s2 + $0x128] sm:$0xff]
  %v758 = vld [vmem:[%s2 + $0x130] sm:$0xff]
  %v759 = vld [vmem:[%s2 + $0x138] sm:$0xff]
  %v760 = vld [vmem:[%s2 + $0x140] sm:$0xff]
  %v761 = vld [vmem:[%s2 + $0x148] sm:$0xff]
  %v762 = vld [vmem:[%s2 + $0x150] sm:$0xff]
  %v763 = vld [vmem:[%s2 + $0x158] sm:$0xff]
  %v764 = vld [vmem:[%s2 + $0x160] sm:$0xff]
  %v765 = vld [vmem:[%s2 + $0x168] sm:$0xff]
  %v766 = vld [vmem:[%s2 + $0x170] sm:$0xff]
  %v767 = vld [vmem:[%s2 + $0x178] sm:$0xff]
  %v768 = vld [vmem:[%s2 + $0x180] sm:$0xff]
  %v769 = vld [vmem:[%s2 + $0x188] sm:$0xff]
  %v770 = vld [vmem:[%s2 + $0x190] sm:$0xff]
  %v771 = vld [vmem:[%s2 + $0x198] sm:$0xff]
  %v772 = vld [vmem:[%s2 + $0x1a0] sm:$0xff]
  %v773 = vld [vmem:[%s2 + $0x1a8] sm:$0xff]
  %v774 = vld [vmem:[%s2 + $0x1b0] sm:$0xff]
  %v775 = vld [vmem:[%s2 + $0x1b8] sm:$0xff]
  %v776 = vld [vmem:[%s2 + $0x1c0] sm:$0xff]
  %v777 = vld [vmem:[%s2 + $0x1c8] sm:$0xff]
  %v778 = vld [vmem:[%s2 + $0x1d0] sm:$0xff]
  %v779 = vld [vmem:[%s2 + $0x1d8] sm:$0xff]
  %v780 = vld [vmem:[%s2 + $0x1e0] sm:$0xff]
  %v781 = vld [vmem:[%s2 + $0x1e8] sm:$0xff]
  %v782 = vld [vmem:[%s2 + $0x1f0] sm:$0xff]
  %v783 = vld [vmem:[%s2 + $0x1f8] sm:$0xff]
  %784 = vmatprep.subr.mxu0 0.0
  %785 = vmatpush1.msra.mxu0 %v735
  %786 = vmatprep.subr.mxu0 0.0
  %787 = vmatpush1.msra.mxu0 %v734
  %788 = vmatprep.subr.mxu0 0.0
  %789 = vmatpush1.msra.mxu0 %v733
  %790 = vmatprep.subr.mxu0 0.0
  %791 = vmatpush1.msra.mxu0 %v732
  %792 = vmatprep.subr.mxu0 0.0
  %793 = vmatpush1.msra.mxu0 %v731
  %794 = vmatprep.subr.mxu0 0.0
  %795 = vmatpush1.msra.mxu0 %v730
  %796 = vmatprep.subr.mxu0 0.0
  %797 = vmatpush1.msra.mxu0 %v729
  %798 = vmatprep.subr.mxu0 0.0
  %799 = vmatpush1.msra.mxu0 %v728
  %800 = vmatprep.subr.mxu0 0.0
  %801 = vmatpush1.msra.mxu0 %v727
  %802 = vmatprep.subr.mxu0 0.0
  %803 = vmatpush1.msra.mxu0 %v726
  %804 = vmatprep.subr.mxu0 0.0
  %805 = vmatpush1.msra.mxu0 %v725
  %806 = vmatprep.subr.mxu0 0.0
  %807 = vmatpush1.msra.mxu0 %v724
  %808 = vmatprep.subr.mxu0 0.0
  %809 = vmatpush1.msra.mxu0 %v723
  %810 = vmatprep.subr.mxu0 0.0
  %811 = vmatpush1.msra.mxu0 %v722
  %812 = vmatprep.subr.mxu0 0.0
  %813 = vmatpush1.msra.mxu0 %v721
  %814 = vmatprep.subr.mxu0 0.0
  %815 = vmatpush1.msra.mxu0 %v720
  %816 = vmatprep.subr.mxu0 0.0
  %817 = vmatpush2.msra.mxu0 %v751
  %818 = vmatprep.subr.mxu0 0.0
  %819 = vmatpush2.msra.mxu0 %v750
  %820 = vmatprep.subr.mxu0 0.0
  %821 = vmatpush2.msra.mxu0 %v749
  %822 = vmatprep.subr.mxu0 0.0
  %823 = vmatpush2.msra.mxu0 %v748
  %824 = vmatprep.subr.mxu0 0.0
  %825 = vmatpush2.msra.mxu0 %v747
  %826 = vmatprep.subr.mxu0 0.0
  %827 = vmatpush2.msra.mxu0 %v746
  %828 = vmatprep.subr.mxu0 0.0
  %829 = vmatpush2.msra.mxu0 %v745
  %830 = vmatprep.subr.mxu0 0.0
  %831 = vmatpush2.msra.mxu0 %v744
  %832 = vmatprep.subr.mxu0 0.0
  %833 = vmatpush2.msra.mxu0 %v743
  %834 = vmatprep.subr.mxu0 0.0
  %835 = vmatpush2.msra.mxu0 %v742
  %836 = vmatprep.subr.mxu0 0.0
  %837 = vmatpush2.msra.mxu0 %v741
  %838 = vmatprep.subr.mxu0 0.0
  %839 = vmatpush2.msra.mxu0 %v740
  %840 = vmatprep.subr.mxu0 0.0
  %841 = vmatpush2.msra.mxu0 %v739
  %842 = vmatprep.subr.mxu0 0.0
  %843 = vmatpush2.msra.mxu0 %v738
  %844 = vmatprep.subr.mxu0 0.0
  %845 = vmatpush2.msra.mxu0 %v737
  %846 = vmatprep.subr.mxu0 0.0
  %847 = vmatpush2.msra.mxu0 %v736
  %848 = vmatprep.mubr.f32.mxu0 %v675
  %849 = vmatmul.mubr.f32.gmra.mxu0 %v673
  %v850 = vpop.f32.mrf.mxu0
  %v851 = vadd.f32 0.0, %v850
  %v852 = vpop.f32.mrf.mxu0
  %853 = vdwg.mxu0
  %854 = vmatprep.subr.mxu0 0.0
  %855 = vmatpush1.msra.mxu0 %v767
  %856 = vmatprep.subr.mxu0 0.0
  %857 = vmatpush1.msra.mxu0 %v766
  %858 = vmatprep.subr.mxu0 0.0
  %859 = vmatpush1.msra.mxu0 %v765
  %860 = vmatprep.subr.mxu0 0.0
  %861 = vmatpush1.msra.mxu0 %v764
  %862 = vmatprep.subr.mxu0 0.0
  %863 = vmatpush1.msra.mxu0 %v763
  %864 = vmatprep.subr.mxu0 0.0
  %865 = vmatpush1.msra.mxu0 %v762
  %866 = vmatprep.subr.mxu0 0.0
  %867 = vmatpush1.msra.mxu0 %v761
  %868 = vmatprep.subr.mxu0 0.0
  %869 = vmatpush1.msra.mxu0 %v760
  %870 = vmatprep.subr.mxu0 0.0
  %871 = vmatpush1.msra.mxu0 %v759
  %872 = vmatprep.subr.mxu0 0.0
  %873 = vmatpush1.msra.mxu0 %v758
  %874 = vmatprep.subr.mxu0 0.0
  %875 = vmatpush1.msra.mxu0 %v757
  %876 = vmatprep.subr.mxu0 0.0
  %877 = vmatpush1.msra.mxu0 %v756
  %878 = vmatprep.subr.mxu0 0.0
  %879 = vmatpush1.msra.mxu0 %v755
  %880 = vmatprep.subr.mxu0 0.0
  %881 = vmatpush1.msra.mxu0 %v754
  %882 = vmatprep.subr.mxu0 0.0
  %883 = vmatpush1.msra.mxu0 %v753
  %884 = vmatprep.subr.mxu0 0.0
  %885 = vmatpush1.msra.mxu0 %v752
  %886 = vmatprep.subr.mxu0 0.0
  %887 = vmatpush2.msra.mxu0 %v783
  %888 = vmatprep.subr.mxu0 0.0
  %889 = vmatpush2.msra.mxu0 %v782
  %890 = vmatprep.subr.mxu0 0.0
  %891 = vmatpush2.msra.mxu0 %v781
  %892 = vmatprep.subr.mxu0 0.0
  %893 = vmatpush2.msra.mxu0 %v780
  %894 = vmatprep.subr.mxu0 0.0
  %895 = vmatpush2.msra.mxu0 %v779
  %896 = vmatprep.subr.mxu0 0.0
  %897 = vmatpush2.msra.mxu0 %v778
  %898 = vmatprep.subr.mxu0 0.0
  %899 = vmatpush2.msra.mxu0 %v777
  %900 = vmatprep.subr.mxu0 0.0
  %901 = vmatpush2.msra.mxu0 %v776
  %902 = vmatprep.subr.mxu0 0.0
  %903 = vmatpush2.msra.mxu0 %v775
  %904 = vmatprep.subr.mxu0 0.0
  %905 = vmatpush2.msra.mxu0 %v774
  %906 = vmatprep.subr.mxu0 0.0
  %907 = vmatpush2.msra.mxu0 %v773
  %908 = vmatprep.subr.mxu0 0.0
  %909 = vmatpush2.msra.mxu0 %v772
  %910 = vmatprep.subr.mxu0 0.0
  %911 = vmatpush2.msra.mxu0 %v771
  %912 = vmatprep.subr.mxu0 0.0
  %913 = vmatpush2.msra.mxu0 %v770
  %914 = vmatprep.subr.mxu0 0.0
  %915 = vmatpush2.msra.mxu0 %v769
  %916 = vmatprep.subr.mxu0 0.0
  %917 = vmatpush2.msra.mxu0 %v768
  %918 = vmatprep.mubr.f32.mxu0 %v716
  %919 = vmatmul.mubr.f32.gmra.mxu0 %v714
  %v920 = vpop.f32.mrf.mxu0
  %v921 = vadd.f32 %v851, %v920
  %v922 = vpop.f32.mrf.mxu0
  %923 = vdwg.mxu0
  %v924 = vld [vmem:[%s7] sm:$0x3]
  %v925 = vld [vmem:[%s10] sm:$0x3]
  %927 = vset.pattern.permute.xlu0 2
  %928 = vperm.xlu0 %927, %v925
  %v929 = vpop.permute.xlu0 %928
  %v932 = vsel %vm621, %v924, 0
  %934 = vmatprep.subr.mxu0 0.0
  %935 = vmatpush1.msra.mxu0 0.0
  %936 = vmatprep.subr.mxu0 0.0
  %937 = vmatpush1.msra.mxu0 0.0
  %938 = vmatprep.subr.mxu0 0.0
  %939 = vmatpush1.msra.mxu0 0.0
  %940 = vmatprep.subr.mxu0 0.0
  %941 = vmatpush1.msra.mxu0 0.0
  %942 = vmatprep.subr.mxu0 0.0
  %943 = vmatpush1.msra.mxu0 0.0
  %944 = vmatprep.subr.mxu0 0.0
  %945 = vmatpush1.msra.mxu0 0.0
  %946 = vmatprep.subr.mxu0 0.0
  %947 = vmatpush1.msra.mxu0 0.0
  %948 = vmatprep.subr.mxu0 0.0
  %949 = vmatpush1.msra.mxu0 0.0
  %950 = vmatprep.subr.mxu0 0.0
  %951 = vmatpush1.msra.mxu0 0.0
  %952 = vmatprep.subr.mxu0 0.0
  %953 = vmatpush1.msra.mxu0 0.0
  %954 = vmatprep.subr.mxu0 0.0
  %955 = vmatpush1.msra.mxu0 0.0
  %956 = vmatprep.subr.mxu0 0.0
  %957 = vmatpush1.msra.mxu0 0.0
  %958 = vmatprep.subr.mxu0 0.0
  %959 = vmatpush1.msra.mxu0 0.0
  %960 = vmatprep.subr.mxu0 0.0
  %961 = vmatpush1.msra.mxu0 0.0
  %962 = vmatprep.subr.mxu0 0.0
  %963 = vmatpush1.msra.mxu0 0.0
  %964 = vmatprep.subr.mxu0 0.0
  %965 = vmatpush1.msra.mxu0 %v921
  %966 = vmatprep.subr.mxu0 0.0
  %967 = vmatpush2.msra.mxu0 0.0
  %968 = vmatprep.subr.mxu0 0.0
  %969 = vmatpush2.msra.mxu0 0.0
  %970 = vmatprep.subr.mxu0 0.0
  %971 = vmatpush2.msra.mxu0 0.0
  %972 = vmatprep.subr.mxu0 0.0
  %973 = vmatpush2.msra.mxu0 0.0
  %974 = vmatprep.subr.mxu0 0.0
  %975 = vmatpush2.msra.mxu0 0.0
  %976 = vmatprep.subr.mxu0 0.0
  %977 = vmatpush2.msra.mxu0 0.0
  %978 = vmatprep.subr.mxu0 0.0
  %979 = vmatpush2.msra.mxu0 0.0
  %980 = vmatprep.subr.mxu0 0.0
  %981 = vmatpush2.msra.mxu0 0.0
  %982 = vmatprep.subr.mxu0 0.0
  %983 = vmatpush2.msra.mxu0 0.0
  %984 = vmatprep.subr.mxu0 0.0
  %985 = vmatpush2.msra.mxu0 0.0
  %986 = vmatprep.subr.mxu0 0.0
  %987 = vmatpush2.msra.mxu0 0.0
  %988 = vmatprep.subr.mxu0 0.0
  %989 = vmatpush2.msra.mxu0 0.0
  %990 = vmatprep.subr.mxu0 0.0
  %991 = vmatpush2.msra.mxu0 0.0
  %992 = vmatprep.subr.mxu0 0.0
  %993 = vmatpush2.msra.mxu0 0.0
  %994 = vmatprep.subr.mxu0 0.0
  %995 = vmatpush2.msra.mxu0 0.0
  %996 = vmatprep.subr.mxu0 0.0
  %997 = vmatpush2.msra.mxu0 0.0
  %998 = vmatprep.mubr.f32.mxu0 0.0
  %999 = vmatmul.mubr.f32.gmra.mxu0 %v932
  %v1000 = vpop.f32.mrf.mxu0
  %v1001 = vadd.f32 %v929, %v1000
  %v1002 = vpop.f32.mrf.mxu0
  %1003 = vdwg.mxu0
  %v1004 = vxor.u32 %v1001, 2147483648
  %v1005 = vmul.f32 %v1004, 1.442695
  %v1006 = vpow.pop %v1005
  %v1007 = vadd.f32 %v1006, 1.0
  %v1008 = vrcp.pop %v1007
  %v1009 = vmul.f32 1.0, %v1008
  %v1010 = vmul.f32 %v1001, %v1009
  %v1011 = vld [vmem:[%s8] sm:$0xff]
  %1012 = vset.pattern.permute.xlu0 3
  %1013 = vperm.xlu0 %1012, %v52
  %v1014 = vpop.permute.xlu0 %1013
  %vm1016 = vcmask 15360
  %v1018 = vsel %vm1016, %v1011, 0
  %v1021 = vsel %vm62, %v1010, 0
  %1023 = vmatprep.subr.mxu0 0.0
  %1024 = vmatpush1.msra.mxu0 0.0
  %1025 = vmatprep.subr.mxu0 0.0
  %1026 = vmatpush1.msra.mxu0 0.0
  %1027 = vmatprep.subr.mxu0 0.0
  %1028 = vmatpush1.msra.mxu0 0.0
  %1029 = vmatprep.subr.mxu0 0.0
  %1030 = vmatpush1.msra.mxu0 0.0
  %1031 = vmatprep.subr.mxu0 0.0
  %1032 = vmatpush1.msra.mxu0 0.0
  %1033 = vmatprep.subr.mxu0 0.0
  %1034 = vmatpush1.msra.mxu0 0.0
  %1035 = vmatprep.subr.mxu0 0.0
  %1036 = vmatpush1.msra.mxu0 0.0
  %1037 = vmatprep.subr.mxu0 0.0
  %1038 = vmatpush1.msra.mxu0 0.0
  %1039 = vmatprep.subr.mxu0 0.0
  %1040 = vmatpush1.msra.mxu0 0.0
  %1041 = vmatprep.subr.mxu0 0.0
  %1042 = vmatpush1.msra.mxu0 0.0
  %1043 = vmatprep.subr.mxu0 0.0
  %1044 = vmatpush1.msra.mxu0 0.0
  %1045 = vmatprep.subr.mxu0 0.0
  %1046 = vmatpush1.msra.mxu0 0.0
  %1047 = vmatprep.subr.mxu0 0.0
  %1048 = vmatpush1.msra.mxu0 0.0
  %1049 = vmatprep.subr.mxu0 0.0
  %1050 = vmatpush1.msra.mxu0 0.0
  %1051 = vmatprep.subr.mxu0 0.0
  %1052 = vmatpush1.msra.mxu0 0.0
  %1053 = vmatprep.subr.mxu0 0.0
  %1054 = vmatpush1.msra.mxu0 %v1021
  %1055 = vmatprep.subr.mxu0 0.0
  %1056 = vmatpush2.msra.mxu0 0.0
  %1057 = vmatprep.subr.mxu0 0.0
  %1058 = vmatpush2.msra.mxu0 0.0
  %1059 = vmatprep.subr.mxu0 0.0
  %1060 = vmatpush2.msra.mxu0 0.0
  %1061 = vmatprep.subr.mxu0 0.0
  %1062 = vmatpush2.msra.mxu0 0.0
  %1063 = vmatprep.subr.mxu0 0.0
  %1064 = vmatpush2.msra.mxu0 0.0
  %1065 = vmatprep.subr.mxu0 0.0
  %1066 = vmatpush2.msra.mxu0 0.0
  %1067 = vmatprep.subr.mxu0 0.0
  %1068 = vmatpush2.msra.mxu0 0.0
  %1069 = vmatprep.subr.mxu0 0.0
  %1070 = vmatpush2.msra.mxu0 0.0
  %1071 = vmatprep.subr.mxu0 0.0
  %1072 = vmatpush2.msra.mxu0 0.0
  %1073 = vmatprep.subr.mxu0 0.0
  %1074 = vmatpush2.msra.mxu0 0.0
  %1075 = vmatprep.subr.mxu0 0.0
  %1076 = vmatpush2.msra.mxu0 0.0
  %1077 = vmatprep.subr.mxu0 0.0
  %1078 = vmatpush2.msra.mxu0 0.0
  %1079 = vmatprep.subr.mxu0 0.0
  %1080 = vmatpush2.msra.mxu0 0.0
  %1081 = vmatprep.subr.mxu0 0.0
  %1082 = vmatpush2.msra.mxu0 0.0
  %1083 = vmatprep.subr.mxu0 0.0
  %1084 = vmatpush2.msra.mxu0 0.0
  %1085 = vmatprep.subr.mxu0 0.0
  %1086 = vmatpush2.msra.mxu0 0.0
  %1087 = vmatprep.mubr.f32.mxu0 0.0
  %1088 = vmatmul.mubr.f32.gmra.mxu0 %v1018
  %v1089 = vpop.f32.mrf.mxu0
  %v1090 = vadd.f32 %v1014, %v1089
  %v1091 = vpop.f32.mrf.mxu0
  %1092 = vdwg.mxu0
  %v1093 = vxor.u32 %v1090, 2147483648
  %v1094 = vmul.f32 %v1093, 1.442695
  %v1095 = vpow.pop %v1094
  %v1096 = vadd.f32 %v1095, 1.0
  %v1097 = vrcp.pop %v1096
  %v1098 = vmul.f32 1.0, %v1097
  %v1099 = vld [vmem:[%s3] sm:$0xff]
  %v1101 = vcombine.high %v1099, %v1099
  %v1103 = vunpack.c.l.s4 1983009808
  %v1104 = vunpack.c.0.s8 %v1103
  %v1105 = vlaneseq
  %v1106 = vshrl.u32 %v1105, 7
  %v1107 = vsub.s32 %v1104, %v1106
  %v1108 = vrot.slane %v1099, %v1107
  %v1110 = vunpack.c.l.s4 1983009808
  %v1111 = vunpack.c.0.s8 %v1110
  %v1112 = vlaneseq
  %v1113 = vshrl.u32 %v1112, 7
  %v1114 = vsub.s32 %v1111, %v1113
  %v1115 = vrot.slane %v1101, %v1114
  %v1116 = vcombine.high %v1108, %v1108
  %v1117 = vcombine.high %v1115, %v1115
  %v1119 = vsel %vm1016, %v1098, 0
  %v1121 = vsel %vm62, %v1108, 0
  %v1123 = vsel %vm62, %v1116, 0
  %v1125 = vsel %vm62, %v1115, 0
  %v1127 = vsel %vm62, %v1117, 0
  %1129 = vmatprep.subr.mxu0 0.0
  %1130 = vmatpush1.msra.mxu0 0.0
  %1131 = vmatprep.subr.mxu0 0.0
  %1132 = vmatpush1.msra.mxu0 0.0
  %1133 = vmatprep.subr.mxu0 0.0
  %1134 = vmatpush1.msra.mxu0 0.0
  %1135 = vmatprep.subr.mxu0 0.0
  %1136 = vmatpush1.msra.mxu0 0.0
  %1137 = vmatprep.subr.mxu0 0.0
  %1138 = vmatpush1.msra.mxu0 0.0
  %1139 = vmatprep.subr.mxu0 0.0
  %1140 = vmatpush1.msra.mxu0 0.0
  %1141 = vmatprep.subr.mxu0 0.0
  %1142 = vmatpush1.msra.mxu0 0.0
  %1143 = vmatprep.subr.mxu0 0.0
  %1144 = vmatpush1.msra.mxu0 0.0
  %1145 = vmatprep.subr.mxu0 0.0
  %1146 = vmatpush1.msra.mxu0 0.0
  %1147 = vmatprep.subr.mxu0 0.0
  %1148 = vmatpush1.msra.mxu0 0.0
  %1149 = vmatprep.subr.mxu0 0.0
  %1150 = vmatpush1.msra.mxu0 0.0
  %1151 = vmatprep.subr.mxu0 0.0
  %1152 = vmatpush1.msra.mxu0 0.0
  %1153 = vmatprep.subr.mxu0 0.0
  %1154 = vmatpush1.msra.mxu0 0.0
  %1155 = vmatprep.subr.mxu0 0.0
  %1156 = vmatpush1.msra.mxu0 0.0
  %1157 = vmatprep.subr.mxu0 0.0
  %1158 = vmatpush1.msra.mxu0 0.0
  %1159 = vmatprep.subr.mxu0 %v1123
  %1160 = vmatpush1.msra.mxu0 %v1121
  %1161 = vmatprep.subr.mxu0 0.0
  %1162 = vmatpush2.msra.mxu0 0.0
  %1163 = vmatprep.subr.mxu0 0.0
  %1164 = vmatpush2.msra.mxu0 0.0
  %1165 = vmatprep.subr.mxu0 0.0
  %1166 = vmatpush2.msra.mxu0 0.0
  %1167 = vmatprep.subr.mxu0 0.0
  %1168 = vmatpush2.msra.mxu0 0.0
  %1169 = vmatprep.subr.mxu0 0.0
  %1170 = vmatpush2.msra.mxu0 0.0
  %1171 = vmatprep.subr.mxu0 0.0
  %1172 = vmatpush2.msra.mxu0 0.0
  %1173 = vmatprep.subr.mxu0 0.0
  %1174 = vmatpush2.msra.mxu0 0.0
  %1175 = vmatprep.subr.mxu0 0.0
  %1176 = vmatpush2.msra.mxu0 0.0
  %1177 = vmatprep.subr.mxu0 0.0
  %1178 = vmatpush2.msra.mxu0 0.0
  %1179 = vmatprep.subr.mxu0 0.0
  %1180 = vmatpush2.msra.mxu0 0.0
  %1181 = vmatprep.subr.mxu0 0.0
  %1182 = vmatpush2.msra.mxu0 0.0
  %1183 = vmatprep.subr.mxu0 0.0
  %1184 = vmatpush2.msra.mxu0 0.0
  %1185 = vmatprep.subr.mxu0 0.0
  %1186 = vmatpush2.msra.mxu0 0.0
  %1187 = vmatprep.subr.mxu0 0.0
  %1188 = vmatpush2.msra.mxu0 0.0
  %1189 = vmatprep.subr.mxu0 0.0
  %1190 = vmatpush2.msra.mxu0 0.0
  %1191 = vmatprep.subr.mxu0 0.0
  %1192 = vmatpush2.msra.mxu0 0.0
  %1193 = vmatprep.mubr.f32.mxu0 0.0
  %1194 = vmatmul.mubr.f32.gmra.mxu0 %v1119
  %v1195 = vpop.f32.mrf.mxu0
  %v1196 = vadd.f32 0.0, %v1195
  %v1197 = vpop.f32.mrf.mxu0
  %v1198 = vadd.f32 0.0, %v1197
  %1199 = vdwg.mxu0
  %1200 = vmatprep.subr.mxu0 0.0
  %1201 = vmatpush1.msra.mxu0 0.0
  %1202 = vmatprep.subr.mxu0 0.0
  %1203 = vmatpush1.msra.mxu0 0.0
  %1204 = vmatprep.subr.mxu0 0.0
  %1205 = vmatpush1.msra.mxu0 0.0
  %1206 = vmatprep.subr.mxu0 0.0
  %1207 = vmatpush1.msra.mxu0 0.0
  %1208 = vmatprep.subr.mxu0 0.0
  %1209 = vmatpush1.msra.mxu0 0.0
  %1210 = vmatprep.subr.mxu0 0.0
  %1211 = vmatpush1.msra.mxu0 0.0
  %1212 = vmatprep.subr.mxu0 0.0
  %1213 = vmatpush1.msra.mxu0 0.0
  %1214 = vmatprep.subr.mxu0 0.0
  %1215 = vmatpush1.msra.mxu0 0.0
  %1216 = vmatprep.subr.mxu0 0.0
  %1217 = vmatpush1.msra.mxu0 0.0
  %1218 = vmatprep.subr.mxu0 0.0
  %1219 = vmatpush1.msra.mxu0 0.0
  %1220 = vmatprep.subr.mxu0 0.0
  %1221 = vmatpush1.msra.mxu0 0.0
  %1222 = vmatprep.subr.mxu0 0.0
  %1223 = vmatpush1.msra.mxu0 0.0
  %1224 = vmatprep.subr.mxu0 0.0
  %1225 = vmatpush1.msra.mxu0 0.0
  %1226 = vmatprep.subr.mxu0 0.0
  %1227 = vmatpush1.msra.mxu0 0.0
  %1228 = vmatprep.subr.mxu0 0.0
  %1229 = vmatpush1.msra.mxu0 0.0
  %1230 = vmatprep.subr.mxu0 %v1127
  %1231 = vmatpush1.msra.mxu0 %v1125
  %1232 = vmatprep.subr.mxu0 0.0
  %1233 = vmatpush2.msra.mxu0 0.0
  %1234 = vmatprep.subr.mxu0 0.0
  %1235 = vmatpush2.msra.mxu0 0.0
  %1236 = vmatprep.subr.mxu0 0.0
  %1237 = vmatpush2.msra.mxu0 0.0
  %1238 = vmatprep.subr.mxu0 0.0
  %1239 = vmatpush2.msra.mxu0 0.0
  %1240 = vmatprep.subr.mxu0 0.0
  %1241 = vmatpush2.msra.mxu0 0.0
  %1242 = vmatprep.subr.mxu0 0.0
  %1243 = vmatpush2.msra.mxu0 0.0
  %1244 = vmatprep.subr.mxu0 0.0
  %1245 = vmatpush2.msra.mxu0 0.0
  %1246 = vmatprep.subr.mxu0 0.0
  %1247 = vmatpush2.msra.mxu0 0.0
  %1248 = vmatprep.subr.mxu0 0.0
  %1249 = vmatpush2.msra.mxu0 0.0
  %1250 = vmatprep.subr.mxu0 0.0
  %1251 = vmatpush2.msra.mxu0 0.0
  %1252 = vmatprep.subr.mxu0 0.0
  %1253 = vmatpush2.msra.mxu0 0.0
  %1254 = vmatprep.subr.mxu0 0.0
  %1255 = vmatpush2.msra.mxu0 0.0
  %1256 = vmatprep.subr.mxu0 0.0
  %1257 = vmatpush2.msra.mxu0 0.0
  %1258 = vmatprep.subr.mxu0 0.0
  %1259 = vmatpush2.msra.mxu0 0.0
  %1260 = vmatprep.subr.mxu0 0.0
  %1261 = vmatpush2.msra.mxu0 0.0
  %1262 = vmatprep.subr.mxu0 0.0
  %1263 = vmatpush2.msra.mxu0 0.0
  %1264 = vmatprep.mubr.f32.mxu0 0.0
  %1265 = vmatmul.mubr.f32.gmra.mxu0 %v1119
  %v1266 = vpop.f32.mrf.mxu0
  %v1267 = vadd.f32 0.0, %v1266
  %v1268 = vpop.f32.mrf.mxu0
  %v1269 = vadd.f32 0.0, %v1268
  %1270 = vdwg.mxu0
  %v1271 = vmul.f32 %v673, %v1196
  %v1272 = vmul.f32 %v675, %v1198
  %v1273 = vmul.f32 %v714, %v1267
  %v1274 = vmul.f32 %v716, %v1269
  %v1275 = vld [vmem:[%s9] sm:$0x3]
  %v1276 = vpack.c.bf16 %v1271, %v1271
  %v1277 = vpack.c.bf16 %v1272, %v1272
  %v1278 = vpack.c.bf16 %v1273, %v1273
  %v1279 = vpack.c.bf16 %v1274, %v1274
  %v1280 = vld [vmem:[%s10] sm:$0xf]
  %1282 = vset.pattern.permute.xlu0 4
  %1283 = vperm.xlu0 %1282, %v1280
  %v1284 = vpop.permute.xlu0 %1283
  %v1287 = vsel %vm621, %v1275, 0
  %v1290 = vsel %vm625, %v1276, 0
  %v1293 = vsel %vm625, %v1277, 0
  %v1296 = vsel %vm625, %v1278, 0
  %v1299 = vsel %vm625, %v1279, 0
  %1301 = vmatprep.subr.bf16.mxu0 0
  %1302 = vmatpush1.bf16.msra.mxu0 0
  %1303 = vmatprep.subr.bf16.mxu0 0
  %1304 = vmatpush1.bf16.msra.mxu0 0
  %1305 = vmatprep.subr.bf16.mxu0 0
  %1306 = vmatpush1.bf16.msra.mxu0 0
  %1307 = vmatprep.subr.bf16.mxu0 0
  %1308 = vmatpush1.bf16.msra.mxu0 0
  %1309 = vmatprep.subr.bf16.mxu0 0
  %1310 = vmatpush1.bf16.msra.mxu0 0
  %1311 = vmatprep.subr.bf16.mxu0 0
  %1312 = vmatpush1.bf16.msra.mxu0 0
  %1313 = vmatprep.subr.bf16.mxu0 0
  %1314 = vmatpush1.bf16.msra.mxu0 0
  %1315 = vmatprep.subr.bf16.mxu0 %v1293
  %1316 = vmatpush1.bf16.msra.mxu0 %v1290
  %1317 = vmatprep.subr.bf16.mxu0 0
  %1318 = vmatpush2.bf16.msra.mxu0 0
  %1319 = vmatprep.subr.bf16.mxu0 0
  %1320 = vmatpush2.bf16.msra.mxu0 0
  %1321 = vmatprep.subr.bf16.mxu0 0
  %1322 = vmatpush2.bf16.msra.mxu0 0
  %1323 = vmatprep.subr.bf16.mxu0 0
  %1324 = vmatpush2.bf16.msra.mxu0 0
  %1325 = vmatprep.subr.bf16.mxu0 0
  %1326 = vmatpush2.bf16.msra.mxu0 0
  %1327 = vmatprep.subr.bf16.mxu0 0
  %1328 = vmatpush2.bf16.msra.mxu0 0
  %1329 = vmatprep.subr.bf16.mxu0 0
  %1330 = vmatpush2.bf16.msra.mxu0 0
  %1331 = vmatprep.subr.bf16.mxu0 0
  %1332 = vmatpush2.bf16.msra.mxu0 0
  %1333 = vmatprep.mubr.bf16.mxu0 0
  %1334 = vmatmul.mubr.bf16.gmra.mxu0 %v1287
  %v1335 = vpop.f32.mrf.mxu0
  %v1336 = vadd.f32 %v1284, %v1335
  %v1337 = vpop.f32.mrf.mxu0
  %v1338 = vadd.f32 %v1284, %v1337
  %v1339 = vpop.f32.mrf.mxu0
  %v1340 = vpop.f32.mrf.mxu0
  %1341 = vdwg.mxu0
  %1342 = vmatprep.subr.bf16.mxu0 0
  %1343 = vmatpush1.bf16.msra.mxu0 0
  %1344 = vmatprep.subr.bf16.mxu0 0
  %1345 = vmatpush1.bf16.msra.mxu0 0
  %1346 = vmatprep.subr.bf16.mxu0 0
  %1347 = vmatpush1.bf16.msra.mxu0 0
  %1348 = vmatprep.subr.bf16.mxu0 0
  %1349 = vmatpush1.bf16.msra.mxu0 0
  %1350 = vmatprep.subr.bf16.mxu0 0
  %1351 = vmatpush1.bf16.msra.mxu0 0
  %1352 = vmatprep.subr.bf16.mxu0 0
  %1353 = vmatpush1.bf16.msra.mxu0 0
  %1354 = vmatprep.subr.bf16.mxu0 0
  %1355 = vmatpush1.bf16.msra.mxu0 0
  %1356 = vmatprep.subr.bf16.mxu0 %v1299
  %1357 = vmatpush1.bf16.msra.mxu0 %v1296
  %1358 = vmatprep.subr.bf16.mxu0 0
  %1359 = vmatpush2.bf16.msra.mxu0 0
  %1360 = vmatprep.subr.bf16.mxu0 0
  %1361 = vmatpush2.bf16.msra.mxu0 0
  %1362 = vmatprep.subr.bf16.mxu0 0
  %1363 = vmatpush2.bf16.msra.mxu0 0
  %1364 = vmatprep.subr.bf16.mxu0 0
  %1365 = vmatpush2.bf16.msra.mxu0 0
  %1366 = vmatprep.subr.bf16.mxu0 0
  %1367 = vmatpush2.bf16.msra.mxu0 0
  %1368 = vmatprep.subr.bf16.mxu0 0
  %1369 = vmatpush2.bf16.msra.mxu0 0
  %1370 = vmatprep.subr.bf16.mxu0 0
  %1371 = vmatpush2.bf16.msra.mxu0 0
  %1372 = vmatprep.subr.bf16.mxu0 0
  %1373 = vmatpush2.bf16.msra.mxu0 0
  %1374 = vmatprep.mubr.bf16.mxu0 0
  %1375 = vmatmul.mubr.bf16.gmra.mxu0 %v1287
  %v1376 = vpop.f32.mrf.mxu0
  %v1377 = vadd.f32 %v1284, %v1376
  %v1378 = vpop.f32.mrf.mxu0
  %v1379 = vadd.f32 %v1284, %v1378
  %v1380 = vpop.f32.mrf.mxu0
  %v1381 = vpop.f32.mrf.mxu0
  %1382 = vdwg.mxu0
  %v1383 = vadd.f32 %v1336, %v39
  %v1384 = vadd.f32 %v1338, %v44
  %v1385 = vadd.f32 %v1377, %v40
  %v1386 = vadd.f32 %v1379, %v45
  %v1391 = vcombine.low %v1383, %v1384
  %v1392 = vcombine.low %v1385, %v1386
  %1395 = vst [vmem:[%s11] sm:$0xff] %v1391
  %1396 = vst [vmem:[%s11 + $0x8] sm:$0xff] %v1392
  // Predicated region
  $region46: #{_lambda_.3} parent=0 // pred_check
    _
  $region47: #{_lambda_.3} parent=0 // pred_check_branch
    %1398 = sbr.rel (0) target = $region49
  $region48: #{_lambda_.3} parent=0 // pred_region
    _
  $region49: #{_lambda_.3} parent=0 // pred_fallthru
    _
  // Predicated region
  $region50: #{_lambda_.3} parent=0 // pred_check
    _
  $region51: #{_lambda_.3} parent=0 // pred_check_branch
    %1400 = sbr.rel (0) target = $region53
  $region52: #{_lambda_.3} parent=0 // pred_region
    _
  $region53: #{_lambda_.3} parent=0 // pred_fallthru
    _

// kernel: _lambda_.2
$region0: #{_lambda_.2}
  #allocation0 [shape = 'u32[]', space=smem, size = 0x4, offset = 0x4, fixed_abs, tag = 'smem constant byte address 0x4 - core index']
  #allocation1 [shape = 'u32[144,128]{1,0:T(1,128)}', space=vmem, size = 0x12000, scoped, tag = 'internal scratch']
  %s0 = inlined_call_operand.vmem [shape: f32[4,512], index: 0, kind: input, shape index: {}]
  %s1 = inlined_call_operand.vmem [shape: f32[9,512], index: 1, kind: input, shape index: {}]
  %s2 = inlined_call_operand.hbm [shape: f32[512,2], index: 2, kind: input, shape index: {}]
  %s3 = inlined_call_operand.vmem [shape: f32[2,512], index: 3, kind: input, shape index: {}]
  %s4 = inlined_call_operand.vmem [shape: bf16[8,4], index: 4, kind: input, shape index: {}]
  %s5 = inlined_call_operand.vmem [shape: f32[8,9], index: 5, kind: input, shape index: {}]
  %s6 = inlined_call_operand.vmem [shape: bf16[8,8], index: 6, kind: input, shape index: {}]
  %s7 = inlined_call_operand.vmem [shape: f32[2,8], index: 7, kind: input, shape index: {}]
  %s8 = inlined_call_operand.vmem [shape: f32[8,2], index: 8, kind: input, shape index: {}]
  %s9 = inlined_call_operand.vmem [shape: bf16[4,8], index: 9, kind: input, shape index: {}]
  %s10 = inlined_call_operand.vmem [shape: f32[8,5], index: 10, kind: input, shape index: {}]
  %s11 = inlined_call_operand.vmem [shape: f32[4,512], index: 11, kind: output, shape index: {}]
  %s12 = sld [smem:[#allocation0]]
  $region58: #{_lambda_.2} parent=0
    _
  %s14 = ssub.s32 1, %s12
  %s15 = scalar_select 0, %s14, %s12
  $region1: #{_lambda_.2} parent=0
    #allocation2 [shape = 'u8[262144]{0}', space=vmem, size = 0x40000, scoped, tag = 'input window, operand 2, single buffered']
    #allocation3 [shape = 's32[1]{0}', space=sflag, size = 0x4, scoped, tag = 'scoped memory for _lambda_.2']
    %16 = vsyncpa [#allocation3], 0
    // Predicated region
    $region2: #{_lambda_.2} parent=1 // pred_check
      _
    $region3: #{_lambda_.2} parent=1 // pred_check_branch
      %18 = sbr.rel (0) target = $region5
    $region4: #{_lambda_.2} parent=1 // pred_region
      _
    $region5: #{_lambda_.2} parent=1 // pred_fallthru
      _
    // Predicated region
    $region6: #{_lambda_.2} parent=1 // pred_check
      _
    $region7: #{_lambda_.2} parent=1 // pred_check_branch
      %20 = sbr.rel (0) target = $region9
    $region8: #{_lambda_.2} parent=1 // pred_region
      _
    $region9: #{_lambda_.2} parent=1 // pred_fallthru
      _
    // Predicated region
    $region10: #{_lambda_.2} parent=1 // pred_check
      _
    $region11: #{_lambda_.2} parent=1 // pred_check_branch
      %22 = sbr.rel (0) target = $region13
    $region12: #{_lambda_.2} parent=1 // pred_region
      %s24 = ssub.s32 8192, 8192
      %25 = vsyncadd [#allocation3], %s24
      %s26 = sshll.u32 [#allocation2], 4
      %s27 = int_to_ptr.vmem [resolvable:$true] %s26
      %32 = dma.hbm_to_vmem [thread:$0]  %s2, 8192, %s27, [#allocation3], 128, 128, 8
    $region13: #{_lambda_.2} parent=1 // pred_fallthru
      _
    // Predicated region
    $region14: #{_lambda_.2} parent=1 // pred_check
      _
    $region15: #{_lambda_.2} parent=1 // pred_check_branch
      %34 = sbr.rel (0) target = $region17
    $region16: #{_lambda_.2} parent=1 // pred_region
      _
    $region17: #{_lambda_.2} parent=1 // pred_fallthru
      _
    // Predicated region
    $region18: #{_lambda_.2} parent=1 // pred_check
      _
    $region19: #{_lambda_.2} parent=1 // pred_check_branch
      %36 = sbr.rel (0) target = $region21
    $region20: #{_lambda_.2} parent=1 // pred_region
      _
    $region21: #{_lambda_.2} parent=1 // pred_fallthru
      _
    // Predicated region
    $region22: #{_lambda_.2} parent=1 // pred_check
      _
    $region23: #{_lambda_.2} parent=1 // pred_check_branch
      %38 = sbr.rel (0) target = $region25
    $region24: #{_lambda_.2} parent=1 // pred_region
      _
    $region25: #{_lambda_.2} parent=1 // pred_fallthru
      _
    // Predicated region
    $region26: #{_lambda_.2} parent=1 // pred_check
      _
    $region27: #{_lambda_.2} parent=1 // pred_check_branch
      %40 = sbr.rel (0) target = $region29
    $region28: #{_lambda_.2} parent=1 // pred_region
      _
    $region29: #{_lambda_.2} parent=1 // pred_fallthru
      _
    // Predicated region
    $region30: #{_lambda_.2} parent=1 // pred_check
      _
    $region31: #{_lambda_.2} parent=1 // pred_check_branch
      %42 = sbr.rel (0) target = $region33
    $region32: #{_lambda_.2} parent=1 // pred_region
      _
    $region33: #{_lambda_.2} parent=1 // pred_fallthru
      _
    // Predicated region
    $region34: #{_lambda_.2} parent=1 // pred_check
      _
    $region35: #{_lambda_.2} parent=1 // pred_check_branch
      %44 = sbr.rel (0) target = $region37
    $region36: #{_lambda_.2} parent=1 // pred_region
      _
    $region37: #{_lambda_.2} parent=1 // pred_fallthru
      _
    // Predicated region
    $region38: #{_lambda_.2} parent=1 // pred_check
      _
    $region39: #{_lambda_.2} parent=1 // pred_check_branch
      %46 = sbr.rel (0) target = $region41
    $region40: #{_lambda_.2} parent=1 // pred_region
      _
    $region41: #{_lambda_.2} parent=1 // pred_fallthru
      _
    // Predicated region
    $region42: #{_lambda_.2} parent=1 // pred_check
      _
    $region43: #{_lambda_.2} parent=1 // pred_check_branch
      %48 = sbr.rel (0) target = $region45
    $region44: #{_lambda_.2} parent=1 // pred_region
      _
    $region45: #{_lambda_.2} parent=1 // pred_fallthru
      _
    // Predicated region
    $region46: #{_lambda_.2} parent=1 // pred_check
      _
    $region47: #{_lambda_.2} parent=1 // pred_check_branch
      %50 = sbr.rel (0) target = $region49
    $region48: #{_lambda_.2} parent=1 // pred_region
      %51 = dma.done [#allocation3], 8192
    $region49: #{_lambda_.2} parent=1 // pred_fallthru
      _
    %v53 = vld [vmem:[%s0] sm:$0xff]
    %v54 = vld [vmem:[%s0 + $0x8] sm:$0xff]
    %v55 = vld [vmem:[%s4] sm:$0xf]
    %v58 = vcombine.high %v53, %v53
    %v59 = vcombine.high %v54, %v54
    %v62 = vpack.c.bf16 %v53, %v53
    %v63 = vpack.c.bf16 %v58, %v58
    %v64 = vpack.c.bf16 %v54, %v54
    %v65 = vpack.c.bf16 %v59, %v59
    %v66 = vld [vmem:[%s10] sm:$0xff]
    %68 = vset.pattern.permute.xlu0 0
    %69 = vperm.xlu0 %68, %v66
    %v70 = vpop.permute.xlu0 %69
    %vm72 = vcmask 31744
    %v74 = vsel %vm72, %v55, 0
    %vm76 = vcmask 1041408
    %v78 = vsel %vm76, %v62, 0
    %v81 = vsel %vm76, %v63, 0
    %v84 = vsel %vm76, %v64, 0
    %v87 = vsel %vm76, %v65, 0
    %89 = vmatprep.subr.bf16.mxu0 0
    %90 = vmatpush1.bf16.msra.mxu0 0
    %91 = vmatprep.subr.bf16.mxu0 0
    %92 = vmatpush1.bf16.msra.mxu0 0
    %93 = vmatprep.subr.bf16.mxu0 0
    %94 = vmatpush1.bf16.msra.mxu0 0
    %95 = vmatprep.subr.bf16.mxu0 0
    %96 = vmatpush1.bf16.msra.mxu0 0
    %97 = vmatprep.subr.bf16.mxu0 0
    %98 = vmatpush1.bf16.msra.mxu0 0
    %99 = vmatprep.subr.bf16.mxu0 0
    %100 = vmatpush1.bf16.msra.mxu0 0
    %101 = vmatprep.subr.bf16.mxu0 0
    %102 = vmatpush1.bf16.msra.mxu0 0
    %103 = vmatprep.subr.bf16.mxu0 %v81
    %104 = vmatpush1.bf16.msra.mxu0 %v78
    %105 = vmatprep.subr.bf16.mxu0 0
    %106 = vmatpush2.bf16.msra.mxu0 0
    %107 = vmatprep.subr.bf16.mxu0 0
    %108 = vmatpush2.bf16.msra.mxu0 0
    %109 = vmatprep.subr.bf16.mxu0 0
    %110 = vmatpush2.bf16.msra.mxu0 0
    %111 = vmatprep.subr.bf16.mxu0 0
    %112 = vmatpush2.bf16.msra.mxu0 0
    %113 = vmatprep.subr.bf16.mxu0 0
    %114 = vmatpush2.bf16.msra.mxu0 0
    %115 = vmatprep.subr.bf16.mxu0 0
    %116 = vmatpush2.bf16.msra.mxu0 0
    %117 = vmatprep.subr.bf16.mxu0 0
    %118 = vmatpush2.bf16.msra.mxu0 0
    %119 = vmatprep.subr.bf16.mxu0 0
    %120 = vmatpush2.bf16.msra.mxu0 0
    %121 = vmatprep.mubr.bf16.mxu0 0
    %122 = vmatmul.mubr.bf16.gmra.mxu0 %v74
    %v123 = vpop.f32.mrf.mxu0
    %v124 = vadd.f32 %v70, %v123
    %v125 = vpop.f32.mrf.mxu0
    %v126 = vadd.f32 %v70, %v125
    %v127 = vpop.f32.mrf.mxu0
    %v128 = vpop.f32.mrf.mxu0
    %129 = vdwg.mxu0
    %130 = vmatprep.subr.bf16.mxu0 0
    %131 = vmatpush1.bf16.msra.mxu0 0
    %132 = vmatprep.subr.bf16.mxu0 0
    %133 = vmatpush1.bf16.msra.mxu0 0
    %134 = vmatprep.subr.bf16.mxu0 0
    %135 = vmatpush1.bf16.msra.mxu0 0
    %136 = vmatprep.subr.bf16.mxu0 0
    %137 = vmatpush1.bf16.msra.mxu0 0
    %138 = vmatprep.subr.bf16.mxu0 0
    %139 = vmatpush1.bf16.msra.mxu0 0
    %140 = vmatprep.subr.bf16.mxu0 0
    %141 = vmatpush1.bf16.msra.mxu0 0
    %142 = vmatprep.subr.bf16.mxu0 0
    %143 = vmatpush1.bf16.msra.mxu0 0
    %144 = vmatprep.subr.bf16.mxu0 %v87
    %145 = vmatpush1.bf16.msra.mxu0 %v84
    %146 = vmatprep.subr.bf16.mxu0 0
    %147 = vmatpush2.bf16.msra.mxu0 0
    %148 = vmatprep.subr.bf16.mxu0 0
    %149 = vmatpush2.bf16.msra.mxu0 0
    %150 = vmatprep.subr.bf16.mxu0 0
    %151 = vmatpush2.bf16.msra.mxu0 0
    %152 = vmatprep.subr.bf16.mxu0 0
    %153 = vmatpush2.bf16.msra.mxu0 0
    %154 = vmatprep.subr.bf16.mxu0 0
    %155 = vmatpush2.bf16.msra.mxu0 0
    %156 = vmatprep.subr.bf16.mxu0 0
    %157 = vmatpush2.bf16.msra.mxu0 0
    %158 = vmatprep.subr.bf16.mxu0 0
    %159 = vmatpush2.bf16.msra.mxu0 0
    %160 = vmatprep.subr.bf16.mxu0 0
    %161 = vmatpush2.bf16.msra.mxu0 0
    %162 = vmatprep.mubr.bf16.mxu0 0
    %163 = vmatmul.mubr.bf16.gmra.mxu0 %v74
    %v164 = vpop.f32.mrf.mxu0
    %v165 = vadd.f32 %v70, %v164
    %v166 = vpop.f32.mrf.mxu0
    %v167 = vadd.f32 %v70, %v166
    %v168 = vpop.f32.mrf.mxu0
    %v169 = vpop.f32.mrf.mxu0
    %170 = vdwg.mxu0
    %v171 = vxor.u32 %v124, 2147483648
    %v172 = vxor.u32 %v126, 2147483648
    %v173 = vxor.u32 %v165, 2147483648
    %v174 = vxor.u32 %v167, 2147483648
    %v175 = vmul.f32 %v171, 1.442695
    %v176 = vpow.pop %v175
    %v177 = vmul.f32 %v172, 1.442695
    %v178 = vpow.pop %v177
    %v179 = vmul.f32 %v173, 1.442695
    %v180 = vpow.pop %v179
    %v181 = vmul.f32 %v174, 1.442695
    %v182 = vpow.pop %v181
    %v183 = vadd.f32 %v176, 1.0
    %v184 = vadd.f32 %v178, 1.0
    %v185 = vadd.f32 %v180, 1.0
    %v186 = vadd.f32 %v182, 1.0
    %v187 = vrcp.pop %v183
    %v188 = vmul.f32 1.0, %v187
    %v189 = vrcp.pop %v184
    %v190 = vmul.f32 1.0, %v189
    %v191 = vrcp.pop %v185
    %v192 = vmul.f32 1.0, %v191
    %v193 = vrcp.pop %v186
    %v194 = vmul.f32 1.0, %v193
    %v195 = vmul.f32 %v124, %v188
    %v196 = vmul.f32 %v126, %v190
    %v197 = vmul.f32 %v165, %v192
    %v198 = vmul.f32 %v167, %v194
    %v199 = vld [vmem:[%s5] sm:$0xff]
    %201 = vset.pattern.permute.xlu0 4
    %202 = vperm.xlu0 %201, %v199
    %v203 = vpop.permute.xlu0 %202
    %v205 = vmul.f32 %v195, %v203
    %v206 = vmul.f32 %v196, %v203
    %v207 = vmul.f32 %v197, %v203
    %v208 = vmul.f32 %v198, %v203
    %209 = vrot.lane.b32.xlu0 %v195, 17
    %v210 = vpop.permute.xlu0 %209
    %211 = vrot.lane.b32.xlu0 %v196, 17
    %v212 = vpop.permute.xlu0 %211
    %213 = vrot.lane.b32.xlu0 %v197, 17
    %v214 = vpop.permute.xlu0 %213
    %215 = vrot.lane.b32.xlu0 %v198, 17
    %v216 = vpop.permute.xlu0 %215
    %v217 = vlaneseq
    %v218 = vand.u32 %v217, 127
    %vm219 = vcmp.lt.s32.totalorder %v218, 17
    %v220 = vsel %vm219, %v214, %v216
    %v221 = vsel %vm219, %v212, %v214
    %v222 = vsel %vm219, %v210, %v212
    %v223 = vsel %vm219, %v216, %v210
    %v224 = vld [vmem:[%s1] ss:$8 sm:$0xf]
    %v226 = vlaneseq
    %v227 = vshrl.u32 %v226, 7
    %v228 = vsub.s32 0, %v227
    %v229 = vrot.slane %v224, %v228
    %v230 = vlaneseq
    %v231 = vshrl.u32 %v230, 7
    %v232 = vsub.s32 1, %v231
    %v233 = vrot.slane %v224, %v232
    %v234 = vlaneseq
    %v235 = vshrl.u32 %v234, 7
    %v236 = vsub.s32 2, %v235
    %v237 = vrot.slane %v224, %v236
    %v238 = vlaneseq
    %v239 = vshrl.u32 %v238, 7
    %v240 = vsub.s32 3, %v239
    %v241 = vrot.slane %v224, %v240
    %v246 = vmul.f32 %v223, %v229
    %v247 = vmul.f32 %v222, %v233
    %v248 = vmul.f32 %v221, %v237
    %v249 = vmul.f32 %v220, %v241
    %250 = vset.pattern.permute.xlu0 0
    %251 = vperm.xlu0 %250, %v199
    %v252 = vpop.permute.xlu0 %251
    %v254 = vmul.f32 %v246, %v252
    %v255 = vmul.f32 %v247, %v252
    %v256 = vmul.f32 %v248, %v252
    %v257 = vmul.f32 %v249, %v252
    %v258 = vadd.f32 %v205, %v254
    %v259 = vadd.f32 %v206, %v255
    %v260 = vadd.f32 %v207, %v256
    %v261 = vadd.f32 %v208, %v257
    %262 = vrot.lane.b32.xlu0 %v195, 16
    %v263 = vpop.permute.xlu0 %262
    %264 = vrot.lane.b32.xlu0 %v196, 16
    %v265 = vpop.permute.xlu0 %264
    %266 = vrot.lane.b32.xlu0 %v197, 16
    %v267 = vpop.permute.xlu0 %266
    %268 = vrot.lane.b32.xlu0 %v198, 16
    %v269 = vpop.permute.xlu0 %268
    %vm270 = vcmp.lt.s32.totalorder %v218, 16
    %v271 = vsel %vm270, %v267, %v269
    %v272 = vsel %vm270, %v265, %v267
    %v273 = vsel %vm270, %v263, %v265
    %v274 = vsel %vm270, %v269, %v263
    %s275 = scalar_lea.vmem %s1, 1
    %v276 = vld [vmem:[%s275] ss:$8 sm:$0xf]
    %v278 = vlaneseq
    %v279 = vshrl.u32 %v278, 7
    %v280 = vsub.s32 0, %v279
    %v281 = vrot.slane %v276, %v280
    %v282 = vlaneseq
    %v283 = vshrl.u32 %v282, 7
    %v284 = vsub.s32 1, %v283
    %v285 = vrot.slane %v276, %v284
    %v286 = vlaneseq
    %v287 = vshrl.u32 %v286, 7
    %v288 = vsub.s32 2, %v287
    %v289 = vrot.slane %v276, %v288
    %v290 = vlaneseq
    %v291 = vshrl.u32 %v290, 7
    %v292 = vsub.s32 3, %v291
    %v293 = vrot.slane %v276, %v292
    %v298 = vmul.f32 %v274, %v281
    %v299 = vmul.f32 %v273, %v285
    %v300 = vmul.f32 %v272, %v289
    %v301 = vmul.f32 %v271, %v293
    %302 = vset.pattern.permute.xlu0 1
    %303 = vperm.xlu0 %302, %v199
    %v304 = vpop.permute.xlu0 %303
    %v306 = vmul.f32 %v298, %v304
    %v307 = vmul.f32 %v299, %v304
    %v308 = vmul.f32 %v300, %v304
    %v309 = vmul.f32 %v301, %v304
    %v310 = vadd.f32 %v258, %v306
    %v311 = vadd.f32 %v259, %v307
    %v312 = vadd.f32 %v260, %v308
    %v313 = vadd.f32 %v261, %v309
    %314 = vrot.lane.b32.xlu0 %v195, 15
    %v315 = vpop.permute.xlu0 %314
    %316 = vrot.lane.b32.xlu0 %v196, 15
    %v317 = vpop.permute.xlu0 %316
    %318 = vrot.lane.b32.xlu0 %v197, 15
    %v319 = vpop.permute.xlu0 %318
    %320 = vrot.lane.b32.xlu0 %v198, 15
    %v321 = vpop.permute.xlu0 %320
    %vm322 = vcmp.lt.s32.totalorder %v218, 15
    %v323 = vsel %vm322, %v319, %v321
    %v324 = vsel %vm322, %v317, %v319
    %v325 = vsel %vm322, %v315, %v317
    %v326 = vsel %vm322, %v321, %v315
    %s327 = scalar_lea.vmem %s1, 2
    %v328 = vld [vmem:[%s327] ss:$8 sm:$0xf]
    %v330 = vlaneseq
    %v331 = vshrl.u32 %v330, 7
    %v332 = vsub.s32 0, %v331
    %v333 = vrot.slane %v328, %v332
    %v334 = vlaneseq
    %v335 = vshrl.u32 %v334, 7
    %v336 = vsub.s32 1, %v335
    %v337 = vrot.slane %v328, %v336
    %v338 = vlaneseq
    %v339 = vshrl.u32 %v338, 7
    %v340 = vsub.s32 2, %v339
    %v341 = vrot.slane %v328, %v340
    %v342 = vlaneseq
    %v343 = vshrl.u32 %v342, 7
    %v344 = vsub.s32 3, %v343
    %v345 = vrot.slane %v328, %v344
    %v350 = vmul.f32 %v326, %v333
    %v351 = vmul.f32 %v325, %v337
    %v352 = vmul.f32 %v324, %v341
    %v353 = vmul.f32 %v323, %v345
    %354 = vset.pattern.permute.xlu0 2
    %355 = vperm.xlu0 %354, %v199
    %v356 = vpop.permute.xlu0 %355
    %v358 = vmul.f32 %v350, %v356
    %v359 = vmul.f32 %v351, %v356
    %v360 = vmul.f32 %v352, %v356
    %v361 = vmul.f32 %v353, %v356
    %v362 = vadd.f32 %v310, %v358
    %v363 = vadd.f32 %v311, %v359
    %v364 = vadd.f32 %v312, %v360
    %v365 = vadd.f32 %v313, %v361
    %366 = vrot.lane.b32.xlu0 %v195, 1
    %v367 = vpop.permute.xlu0 %366
    %368 = vrot.lane.b32.xlu0 %v196, 1
    %v369 = vpop.permute.xlu0 %368
    %370 = vrot.lane.b32.xlu0 %v197, 1
    %v371 = vpop.permute.xlu0 %370
    %372 = vrot.lane.b32.xlu0 %v198, 1
    %v373 = vpop.permute.xlu0 %372
    %vm374 = vcmp.lt.s32.totalorder %v218, 1
    %v375 = vsel %vm374, %v371, %v373
    %v376 = vsel %vm374, %v369, %v371
    %v377 = vsel %vm374, %v367, %v369
    %v378 = vsel %vm374, %v373, %v367
    %s379 = scalar_lea.vmem %s1, 3
    %v380 = vld [vmem:[%s379] ss:$8 sm:$0xf]
    %v382 = vlaneseq
    %v383 = vshrl.u32 %v382, 7
    %v384 = vsub.s32 0, %v383
    %v385 = vrot.slane %v380, %v384
    %v386 = vlaneseq
    %v387 = vshrl.u32 %v386, 7
    %v388 = vsub.s32 1, %v387
    %v389 = vrot.slane %v380, %v388
    %v390 = vlaneseq
    %v391 = vshrl.u32 %v390, 7
    %v392 = vsub.s32 2, %v391
    %v393 = vrot.slane %v380, %v392
    %v394 = vlaneseq
    %v395 = vshrl.u32 %v394, 7
    %v396 = vsub.s32 3, %v395
    %v397 = vrot.slane %v380, %v396
    %v402 = vmul.f32 %v378, %v385
    %v403 = vmul.f32 %v377, %v389
    %v404 = vmul.f32 %v376, %v393
    %v405 = vmul.f32 %v375, %v397
    %406 = vset.pattern.permute.xlu0 3
    %407 = vperm.xlu0 %406, %v199
    %v408 = vpop.permute.xlu0 %407
    %v410 = vmul.f32 %v402, %v408
    %v411 = vmul.f32 %v403, %v408
    %v412 = vmul.f32 %v404, %v408
    %v413 = vmul.f32 %v405, %v408
    %v414 = vadd.f32 %v362, %v410
    %v415 = vadd.f32 %v363, %v411
    %v416 = vadd.f32 %v364, %v412
    %v417 = vadd.f32 %v365, %v413
    %418 = vrot.lane.b32.xlu0 %v195, 127
    %v419 = vpop.permute.xlu0 %418
    %420 = vrot.lane.b32.xlu0 %v196, 127
    %v421 = vpop.permute.xlu0 %420
    %422 = vrot.lane.b32.xlu0 %v197, 127
    %v423 = vpop.permute.xlu0 %422
    %424 = vrot.lane.b32.xlu0 %v198, 127
    %v425 = vpop.permute.xlu0 %424
    %vm426 = vcmp.lt.s32.totalorder %v218, 127
    %v427 = vsel %vm426, %v423, %v425
    %v428 = vsel %vm426, %v421, %v423
    %v429 = vsel %vm426, %v419, %v421
    %v430 = vsel %vm426, %v425, %v419
    %s431 = scalar_lea.vmem %s1, 5
    %v432 = vld [vmem:[%s431] ss:$8 sm:$0xf]
    %v434 = vlaneseq
    %v435 = vshrl.u32 %v434, 7
    %v436 = vsub.s32 0, %v435
    %v437 = vrot.slane %v432, %v436
    %v438 = vlaneseq
    %v439 = vshrl.u32 %v438, 7
    %v440 = vsub.s32 1, %v439
    %v441 = vrot.slane %v432, %v440
    %v442 = vlaneseq
    %v443 = vshrl.u32 %v442, 7
    %v444 = vsub.s32 2, %v443
    %v445 = vrot.slane %v432, %v444
    %v446 = vlaneseq
    %v447 = vshrl.u32 %v446, 7
    %v448 = vsub.s32 3, %v447
    %v449 = vrot.slane %v432, %v448
    %v454 = vmul.f32 %v429, %v437
    %v455 = vmul.f32 %v428, %v441
    %v456 = vmul.f32 %v427, %v445
    %v457 = vmul.f32 %v430, %v449
    %458 = vset.pattern.permute.xlu0 5
    %459 = vperm.xlu0 %458, %v199
    %v460 = vpop.permute.xlu0 %459
    %v462 = vmul.f32 %v454, %v460
    %v463 = vmul.f32 %v455, %v460
    %v464 = vmul.f32 %v456, %v460
    %v465 = vmul.f32 %v457, %v460
    %v466 = vadd.f32 %v414, %v462
    %v467 = vadd.f32 %v415, %v463
    %v468 = vadd.f32 %v416, %v464
    %v469 = vadd.f32 %v417, %v465
    %470 = vrot.lane.b32.xlu0 %v195, 113
    %v471 = vpop.permute.xlu0 %470
    %472 = vrot.lane.b32.xlu0 %v196, 113
    %v473 = vpop.permute.xlu0 %472
    %474 = vrot.lane.b32.xlu0 %v197, 113
    %v475 = vpop.permute.xlu0 %474
    %476 = vrot.lane.b32.xlu0 %v198, 113
    %v477 = vpop.permute.xlu0 %476
    %vm478 = vcmp.lt.s32.totalorder %v218, 113
    %v479 = vsel %vm478, %v475, %v477
    %v480 = vsel %vm478, %v473, %v475
    %v481 = vsel %vm478, %v471, %v473
    %v482 = vsel %vm478, %v477, %v471
    %s483 = scalar_lea.vmem %s1, 6
    %v484 = vld [vmem:[%s483] ss:$8 sm:$0xf]
    %v486 = vlaneseq
    %v487 = vshrl.u32 %v486, 7
    %v488 = vsub.s32 0, %v487
    %v489 = vrot.slane %v484, %v488
    %v490 = vlaneseq
    %v491 = vshrl.u32 %v490, 7
    %v492 = vsub.s32 1, %v491
    %v493 = vrot.slane %v484, %v492
    %v494 = vlaneseq
    %v495 = vshrl.u32 %v494, 7
    %v496 = vsub.s32 2, %v495
    %v497 = vrot.slane %v484, %v496
    %v498 = vlaneseq
    %v499 = vshrl.u32 %v498, 7
    %v500 = vsub.s32 3, %v499
    %v501 = vrot.slane %v484, %v500
    %v506 = vmul.f32 %v481, %v489
    %v507 = vmul.f32 %v480, %v493
    %v508 = vmul.f32 %v479, %v497
    %v509 = vmul.f32 %v482, %v501
    %510 = vset.pattern.permute.xlu0 6
    %511 = vperm.xlu0 %510, %v199
    %v512 = vpop.permute.xlu0 %511
    %v514 = vmul.f32 %v506, %v512
    %v515 = vmul.f32 %v507, %v512
    %v516 = vmul.f32 %v508, %v512
    %v517 = vmul.f32 %v509, %v512
    %v518 = vadd.f32 %v466, %v514
    %v519 = vadd.f32 %v467, %v515
    %v520 = vadd.f32 %v468, %v516
    %v521 = vadd.f32 %v469, %v517
    %522 = vrot.lane.b32.xlu0 %v195, 112
    %v523 = vpop.permute.xlu0 %522
    %524 = vrot.lane.b32.xlu0 %v196, 112
    %v525 = vpop.permute.xlu0 %524
    %526 = vrot.lane.b32.xlu0 %v197, 112
    %v527 = vpop.permute.xlu0 %526
    %528 = vrot.lane.b32.xlu0 %v198, 112
    %v529 = vpop.permute.xlu0 %528
    %vm530 = vcmp.lt.s32.totalorder %v218, 112
    %v531 = vsel %vm530, %v527, %v529
    %v532 = vsel %vm530, %v525, %v527
    %v533 = vsel %vm530, %v523, %v525
    %v534 = vsel %vm530, %v529, %v523
    %s535 = scalar_lea.vmem %s1, 7
    %v536 = vld [vmem:[%s535] ss:$8 sm:$0xf]
    %v538 = vlaneseq
    %v539 = vshrl.u32 %v538, 7
    %v540 = vsub.s32 0, %v539
    %v541 = vrot.slane %v536, %v540
    %v542 = vlaneseq
    %v543 = vshrl.u32 %v542, 7
    %v544 = vsub.s32 1, %v543
    %v545 = vrot.slane %v536, %v544
    %v546 = vlaneseq
    %v547 = vshrl.u32 %v546, 7
    %v548 = vsub.s32 2, %v547
    %v549 = vrot.slane %v536, %v548
    %v550 = vlaneseq
    %v551 = vshrl.u32 %v550, 7
    %v552 = vsub.s32 3, %v551
    %v553 = vrot.slane %v536, %v552
    %v558 = vmul.f32 %v533, %v541
    %v559 = vmul.f32 %v532, %v545
    %v560 = vmul.f32 %v531, %v549
    %v561 = vmul.f32 %v534, %v553
    %562 = vset.pattern.permute.xlu0 7
    %563 = vperm.xlu0 %562, %v199
    %v564 = vpop.permute.xlu0 %563
    %v566 = vmul.f32 %v558, %v564
    %v567 = vmul.f32 %v559, %v564
    %v568 = vmul.f32 %v560, %v564
    %v569 = vmul.f32 %v561, %v564
    %v570 = vadd.f32 %v518, %v566
    %v571 = vadd.f32 %v519, %v567
    %v572 = vadd.f32 %v520, %v568
    %v573 = vadd.f32 %v521, %v569
    %574 = vrot.lane.b32.xlu0 %v195, 111
    %v575 = vpop.permute.xlu0 %574
    %576 = vrot.lane.b32.xlu0 %v196, 111
    %v577 = vpop.permute.xlu0 %576
    %578 = vrot.lane.b32.xlu0 %v197, 111
    %v579 = vpop.permute.xlu0 %578
    %580 = vrot.lane.b32.xlu0 %v198, 111
    %v581 = vpop.permute.xlu0 %580
    %vm582 = vcmp.lt.s32.totalorder %v218, 111
    %v583 = vsel %vm582, %v579, %v581
    %v584 = vsel %vm582, %v577, %v579
    %v585 = vsel %vm582, %v575, %v577
    %v586 = vsel %vm582, %v581, %v575
    %s587 = scalar_lea.vmem %s1, 32
    %v588 = vld [vmem:[%s587] ss:$8 sm:$0xf]
    %v590 = vlaneseq
    %v591 = vshrl.u32 %v590, 7
    %v592 = vsub.s32 0, %v591
    %v593 = vrot.slane %v588, %v592
    %v594 = vlaneseq
    %v595 = vshrl.u32 %v594, 7
    %v596 = vsub.s32 1, %v595
    %v597 = vrot.slane %v588, %v596
    %v598 = vlaneseq
    %v599 = vshrl.u32 %v598, 7
    %v600 = vsub.s32 2, %v599
    %v601 = vrot.slane %v588, %v600
    %v602 = vlaneseq
    %v603 = vshrl.u32 %v602, 7
    %v604 = vsub.s32 3, %v603
    %v605 = vrot.slane %v588, %v604
    %v610 = vmul.f32 %v585, %v593
    %v611 = vmul.f32 %v584, %v597
    %v612 = vmul.f32 %v583, %v601
    %v613 = vmul.f32 %v586, %v605
    %614 = vset.pattern.permute.xlu0 8
    %615 = vperm.xlu0 %614, %v199
    %v616 = vpop.permute.xlu0 %615
    %v618 = vmul.f32 %v610, %v616
    %v619 = vmul.f32 %v611, %v616
    %v620 = vmul.f32 %v612, %v616
    %v621 = vmul.f32 %v613, %v616
    %v622 = vadd.f32 %v570, %v618
    %v623 = vadd.f32 %v571, %v619
    %v624 = vadd.f32 %v572, %v620
    %v625 = vadd.f32 %v573, %v621
    %v626 = vld [vmem:[%s6] sm:$0xf]
    %v627 = vpack.c.bf16 %v622, %v622
    %v628 = vpack.c.bf16 %v623, %v623
    %v629 = vpack.c.bf16 %v624, %v624
    %v630 = vpack.c.bf16 %v625, %v625
    %631 = vset.pattern.permute.xlu0 1
    %632 = vperm.xlu0 %631, %v66
    %v633 = vpop.permute.xlu0 %632
    %vm635 = vcmask 64512
    %v637 = vsel %vm635, %v626, 0
    %vm639 = vcmask 1043456
    %v641 = vsel %vm639, %v627, 0
    %v644 = vsel %vm639, %v628, 0
    %v647 = vsel %vm639, %v629, 0
    %v650 = vsel %vm639, %v630, 0
    %652 = vmatprep.subr.bf16.mxu0 0
    %653 = vmatpush1.bf16.msra.mxu0 0
    %654 = vmatprep.subr.bf16.mxu0 0
    %655 = vmatpush1.bf16.msra.mxu0 0
    %656 = vmatprep.subr.bf16.mxu0 0
    %657 = vmatpush1.bf16.msra.mxu0 0
    %658 = vmatprep.subr.bf16.mxu0 0
    %659 = vmatpush1.bf16.msra.mxu0 0
    %660 = vmatprep.subr.bf16.mxu0 0
    %661 = vmatpush1.bf16.msra.mxu0 0
    %662 = vmatprep.subr.bf16.mxu0 0
    %663 = vmatpush1.bf16.msra.mxu0 0
    %664 = vmatprep.subr.bf16.mxu0 0
    %665 = vmatpush1.bf16.msra.mxu0 0
    %666 = vmatprep.subr.bf16.mxu0 %v644
    %667 = vmatpush1.bf16.msra.mxu0 %v641
    %668 = vmatprep.subr.bf16.mxu0 0
    %669 = vmatpush2.bf16.msra.mxu0 0
    %670 = vmatprep.subr.bf16.mxu0 0
    %671 = vmatpush2.bf16.msra.mxu0 0
    %672 = vmatprep.subr.bf16.mxu0 0
    %673 = vmatpush2.bf16.msra.mxu0 0
    %674 = vmatprep.subr.bf16.mxu0 0
    %675 = vmatpush2.bf16.msra.mxu0 0
    %676 = vmatprep.subr.bf16.mxu0 0
    %677 = vmatpush2.bf16.msra.mxu0 0
    %678 = vmatprep.subr.bf16.mxu0 0
    %679 = vmatpush2.bf16.msra.mxu0 0
    %680 = vmatprep.subr.bf16.mxu0 0
    %681 = vmatpush2.bf16.msra.mxu0 0
    %682 = vmatprep.subr.bf16.mxu0 0
    %683 = vmatpush2.bf16.msra.mxu0 0
    %684 = vmatprep.mubr.bf16.mxu0 0
    %685 = vmatmul.mubr.bf16.gmra.mxu0 %v637
    %v686 = vpop.f32.mrf.mxu0
    %v687 = vadd.f32 %v633, %v686
    %v688 = vpop.f32.mrf.mxu0
    %v689 = vadd.f32 %v633, %v688
    %v690 = vpop.f32.mrf.mxu0
    %v691 = vpop.f32.mrf.mxu0
    %692 = vdwg.mxu0
    %693 = vmatprep.subr.bf16.mxu0 0
    %694 = vmatpush1.bf16.msra.mxu0 0
    %695 = vmatprep.subr.bf16.mxu0 0
    %696 = vmatpush1.bf16.msra.mxu0 0
    %697 = vmatprep.subr.bf16.mxu0 0
    %698 = vmatpush1.bf16.msra.mxu0 0
    %699 = vmatprep.subr.bf16.mxu0 0
    %700 = vmatpush1.bf16.msra.mxu0 0
    %701 = vmatprep.subr.bf16.mxu0 0
    %702 = vmatpush1.bf16.msra.mxu0 0
    %703 = vmatprep.subr.bf16.mxu0 0
    %704 = vmatpush1.bf16.msra.mxu0 0
    %705 = vmatprep.subr.bf16.mxu0 0
    %706 = vmatpush1.bf16.msra.mxu0 0
    %707 = vmatprep.subr.bf16.mxu0 %v650
    %708 = vmatpush1.bf16.msra.mxu0 %v647
    %709 = vmatprep.subr.bf16.mxu0 0
    %710 = vmatpush2.bf16.msra.mxu0 0
    %711 = vmatprep.subr.bf16.mxu0 0
    %712 = vmatpush2.bf16.msra.mxu0 0
    %713 = vmatprep.subr.bf16.mxu0 0
    %714 = vmatpush2.bf16.msra.mxu0 0
    %715 = vmatprep.subr.bf16.mxu0 0
    %716 = vmatpush2.bf16.msra.mxu0 0
    %717 = vmatprep.subr.bf16.mxu0 0
    %718 = vmatpush2.bf16.msra.mxu0 0
    %719 = vmatprep.subr.bf16.mxu0 0
    %720 = vmatpush2.bf16.msra.mxu0 0
    %721 = vmatprep.subr.bf16.mxu0 0
    %722 = vmatpush2.bf16.msra.mxu0 0
    %723 = vmatprep.subr.bf16.mxu0 0
    %724 = vmatpush2.bf16.msra.mxu0 0
    %725 = vmatprep.mubr.bf16.mxu0 0
    %726 = vmatmul.mubr.bf16.gmra.mxu0 %v637
    %v727 = vpop.f32.mrf.mxu0
    %v728 = vadd.f32 %v633, %v727
    %v729 = vpop.f32.mrf.mxu0
    %v730 = vadd.f32 %v633, %v729
    %v731 = vpop.f32.mrf.mxu0
    %v732 = vpop.f32.mrf.mxu0
    %733 = vdwg.mxu0
    %v734 = vld [vmem:[#allocation2] sm:$0xff]
    %v735 = vld [vmem:[#allocation2 + $0x8] sm:$0xff]
    %v736 = vld [vmem:[#allocation2 + $0x10] sm:$0xff]
    %v737 = vld [vmem:[#allocation2 + $0x18] sm:$0xff]
    %v738 = vld [vmem:[#allocation2 + $0x20] sm:$0xff]
    %v739 = vld [vmem:[#allocation2 + $0x28] sm:$0xff]
    %v740 = vld [vmem:[#allocation2 + $0x30] sm:$0xff]
    %v741 = vld [vmem:[#allocation2 + $0x38] sm:$0xff]
    %v742 = vld [vmem:[#allocation2 + $0x40] sm:$0xff]
    %v743 = vld [vmem:[#allocation2 + $0x48] sm:$0xff]
    %v744 = vld [vmem:[#allocation2 + $0x50] sm:$0xff]
    %v745 = vld [vmem:[#allocation2 + $0x58] sm:$0xff]
    %v746 = vld [vmem:[#allocation2 + $0x60] sm:$0xff]
    %v747 = vld [vmem:[#allocation2 + $0x68] sm:$0xff]
    %v748 = vld [vmem:[#allocation2 + $0x70] sm:$0xff]
    %v749 = vld [vmem:[#allocation2 + $0x78] sm:$0xff]
    %v750 = vld [vmem:[#allocation2 + $0x80] sm:$0xff]
    %v751 = vld [vmem:[#allocation2 + $0x88] sm:$0xff]
    %v752 = vld [vmem:[#allocation2 + $0x90] sm:$0xff]
    %v753 = vld [vmem:[#allocation2 + $0x98] sm:$0xff]
    %v754 = vld [vmem:[#allocation2 + $0xa0] sm:$0xff]
    %v755 = vld [vmem:[#allocation2 + $0xa8] sm:$0xff]
    %v756 = vld [vmem:[#allocation2 + $0xb0] sm:$0xff]
    %v757 = vld [vmem:[#allocation2 + $0xb8] sm:$0xff]
    %v758 = vld [vmem:[#allocation2 + $0xc0] sm:$0xff]
    %v759 = vld [vmem:[#allocation2 + $0xc8] sm:$0xff]
    %v760 = vld [vmem:[#allocation2 + $0xd0] sm:$0xff]
    %v761 = vld [vmem:[#allocation2 + $0xd8] sm:$0xff]
    %v762 = vld [vmem:[#allocation2 + $0xe0] sm:$0xff]
    %v763 = vld [vmem:[#allocation2 + $0xe8] sm:$0xff]
    %v764 = vld [vmem:[#allocation2 + $0xf0] sm:$0xff]
    %v765 = vld [vmem:[#allocation2 + $0xf8] sm:$0xff]
    %v766 = vld [vmem:[#allocation2 + $0x100] sm:$0xff]
    %v767 = vld [vmem:[#allocation2 + $0x108] sm:$0xff]
    %v768 = vld [vmem:[#allocation2 + $0x110] sm:$0xff]
    %v769 = vld [vmem:[#allocation2 + $0x118] sm:$0xff]
    %v770 = vld [vmem:[#allocation2 + $0x120] sm:$0xff]
    %v771 = vld [vmem:[#allocation2 + $0x128] sm:$0xff]
    %v772 = vld [vmem:[#allocation2 + $0x130] sm:$0xff]
    %v773 = vld [vmem:[#allocation2 + $0x138] sm:$0xff]
    %v774 = vld [vmem:[#allocation2 + $0x140] sm:$0xff]
    %v775 = vld [vmem:[#allocation2 + $0x148] sm:$0xff]
    %v776 = vld [vmem:[#allocation2 + $0x150] sm:$0xff]
    %v777 = vld [vmem:[#allocation2 + $0x158] sm:$0xff]
    %v778 = vld [vmem:[#allocation2 + $0x160] sm:$0xff]
    %v779 = vld [vmem:[#allocation2 + $0x168] sm:$0xff]
    %v780 = vld [vmem:[#allocation2 + $0x170] sm:$0xff]
    %v781 = vld [vmem:[#allocation2 + $0x178] sm:$0xff]
    %v782 = vld [vmem:[#allocation2 + $0x180] sm:$0xff]
    %v783 = vld [vmem:[#allocation2 + $0x188] sm:$0xff]
    %v784 = vld [vmem:[#allocation2 + $0x190] sm:$0xff]
    %v785 = vld [vmem:[#allocation2 + $0x198] sm:$0xff]
    %v786 = vld [vmem:[#allocation2 + $0x1a0] sm:$0xff]
    %v787 = vld [vmem:[#allocation2 + $0x1a8] sm:$0xff]
    %v788 = vld [vmem:[#allocation2 + $0x1b0] sm:$0xff]
    %v789 = vld [vmem:[#allocation2 + $0x1b8] sm:$0xff]
    %v790 = vld [vmem:[#allocation2 + $0x1c0] sm:$0xff]
    %v791 = vld [vmem:[#allocation2 + $0x1c8] sm:$0xff]
    %v792 = vld [vmem:[#allocation2 + $0x1d0] sm:$0xff]
    %v793 = vld [vmem:[#allocation2 + $0x1d8] sm:$0xff]
    %v794 = vld [vmem:[#allocation2 + $0x1e0] sm:$0xff]
    %v795 = vld [vmem:[#allocation2 + $0x1e8] sm:$0xff]
    %v796 = vld [vmem:[#allocation2 + $0x1f0] sm:$0xff]
    %v797 = vld [vmem:[#allocation2 + $0x1f8] sm:$0xff]
    %798 = vmatprep.subr.mxu0 0.0
    %799 = vmatpush1.msra.mxu0 %v749
    %800 = vmatprep.subr.mxu0 0.0
    %801 = vmatpush1.msra.mxu0 %v748
    %802 = vmatprep.subr.mxu0 0.0
    %803 = vmatpush1.msra.mxu0 %v747
    %804 = vmatprep.subr.mxu0 0.0
    %805 = vmatpush1.msra.mxu0 %v746
    %806 = vmatprep.subr.mxu0 0.0
    %807 = vmatpush1.msra.mxu0 %v745
    %808 = vmatprep.subr.mxu0 0.0
    %809 = vmatpush1.msra.mxu0 %v744
    %810 = vmatprep.subr.mxu0 0.0
    %811 = vmatpush1.msra.mxu0 %v743
    %812 = vmatprep.subr.mxu0 0.0
    %813 = vmatpush1.msra.mxu0 %v742
    %814 = vmatprep.subr.mxu0 0.0
    %815 = vmatpush1.msra.mxu0 %v741
    %816 = vmatprep.subr.mxu0 0.0
    %817 = vmatpush1.msra.mxu0 %v740
    %818 = vmatprep.subr.mxu0 0.0
    %819 = vmatpush1.msra.mxu0 %v739
    %820 = vmatprep.subr.mxu0 0.0
    %821 = vmatpush1.msra.mxu0 %v738
    %822 = vmatprep.subr.mxu0 0.0
    %823 = vmatpush1.msra.mxu0 %v737
    %824 = vmatprep.subr.mxu0 0.0
    %825 = vmatpush1.msra.mxu0 %v736
    %826 = vmatprep.subr.mxu0 0.0
    %827 = vmatpush1.msra.mxu0 %v735
    %828 = vmatprep.subr.mxu0 0.0
    %829 = vmatpush1.msra.mxu0 %v734
    %830 = vmatprep.subr.mxu0 0.0
    %831 = vmatpush2.msra.mxu0 %v765
    %832 = vmatprep.subr.mxu0 0.0
    %833 = vmatpush2.msra.mxu0 %v764
    %834 = vmatprep.subr.mxu0 0.0
    %835 = vmatpush2.msra.mxu0 %v763
    %836 = vmatprep.subr.mxu0 0.0
    %837 = vmatpush2.msra.mxu0 %v762
    %838 = vmatprep.subr.mxu0 0.0
    %839 = vmatpush2.msra.mxu0 %v761
    %840 = vmatprep.subr.mxu0 0.0
    %841 = vmatpush2.msra.mxu0 %v760
    %842 = vmatprep.subr.mxu0 0.0
    %843 = vmatpush2.msra.mxu0 %v759
    %844 = vmatprep.subr.mxu0 0.0
    %845 = vmatpush2.msra.mxu0 %v758
    %846 = vmatprep.subr.mxu0 0.0
    %847 = vmatpush2.msra.mxu0 %v757
    %848 = vmatprep.subr.mxu0 0.0
    %849 = vmatpush2.msra.mxu0 %v756
    %850 = vmatprep.subr.mxu0 0.0
    %851 = vmatpush2.msra.mxu0 %v755
    %852 = vmatprep.subr.mxu0 0.0
    %853 = vmatpush2.msra.mxu0 %v754
    %854 = vmatprep.subr.mxu0 0.0
    %855 = vmatpush2.msra.mxu0 %v753
    %856 = vmatprep.subr.mxu0 0.0
    %857 = vmatpush2.msra.mxu0 %v752
    %858 = vmatprep.subr.mxu0 0.0
    %859 = vmatpush2.msra.mxu0 %v751
    %860 = vmatprep.subr.mxu0 0.0
    %861 = vmatpush2.msra.mxu0 %v750
    %862 = vmatprep.mubr.f32.mxu0 %v689
    %863 = vmatmul.mubr.f32.gmra.mxu0 %v687
    %v864 = vpop.f32.mrf.mxu0
    %v865 = vadd.f32 0.0, %v864
    %v866 = vpop.f32.mrf.mxu0
    %867 = vdwg.mxu0
    %868 = vmatprep.subr.mxu0 0.0
    %869 = vmatpush1.msra.mxu0 %v781
    %870 = vmatprep.subr.mxu0 0.0
    %871 = vmatpush1.msra.mxu0 %v780
    %872 = vmatprep.subr.mxu0 0.0
    %873 = vmatpush1.msra.mxu0 %v779
    %874 = vmatprep.subr.mxu0 0.0
    %875 = vmatpush1.msra.mxu0 %v778
    %876 = vmatprep.subr.mxu0 0.0
    %877 = vmatpush1.msra.mxu0 %v777
    %878 = vmatprep.subr.mxu0 0.0
    %879 = vmatpush1.msra.mxu0 %v776
    %880 = vmatprep.subr.mxu0 0.0
    %881 = vmatpush1.msra.mxu0 %v775
    %882 = vmatprep.subr.mxu0 0.0
    %883 = vmatpush1.msra.mxu0 %v774
    %884 = vmatprep.subr.mxu0 0.0
    %885 = vmatpush1.msra.mxu0 %v773
    %886 = vmatprep.subr.mxu0 0.0
    %887 = vmatpush1.msra.mxu0 %v772
    %888 = vmatprep.subr.mxu0 0.0
    %889 = vmatpush1.msra.mxu0 %v771
    %890 = vmatprep.subr.mxu0 0.0
    %891 = vmatpush1.msra.mxu0 %v770
    %892 = vmatprep.subr.mxu0 0.0
    %893 = vmatpush1.msra.mxu0 %v769
    %894 = vmatprep.subr.mxu0 0.0
    %895 = vmatpush1.msra.mxu0 %v768
    %896 = vmatprep.subr.mxu0 0.0
    %897 = vmatpush1.msra.mxu0 %v767
    %898 = vmatprep.subr.mxu0 0.0
    %899 = vmatpush1.msra.mxu0 %v766
    %900 = vmatprep.subr.mxu0 0.0
    %901 = vmatpush2.msra.mxu0 %v797
    %902 = vmatprep.subr.mxu0 0.0
    %903 = vmatpush2.msra.mxu0 %v796
    %904 = vmatprep.subr.mxu0 0.0
    %905 = vmatpush2.msra.mxu0 %v795
    %906 = vmatprep.subr.mxu0 0.0
    %907 = vmatpush2.msra.mxu0 %v794
    %908 = vmatprep.subr.mxu0 0.0
    %909 = vmatpush2.msra.mxu0 %v793
    %910 = vmatprep.subr.mxu0 0.0
    %911 = vmatpush2.msra.mxu0 %v792
    %912 = vmatprep.subr.mxu0 0.0
    %913 = vmatpush2.msra.mxu0 %v791
    %914 = vmatprep.subr.mxu0 0.0
    %915 = vmatpush2.msra.mxu0 %v790
    %916 = vmatprep.subr.mxu0 0.0
    %917 = vmatpush2.msra.mxu0 %v789
    %918 = vmatprep.subr.mxu0 0.0
    %919 = vmatpush2.msra.mxu0 %v788
    %920 = vmatprep.subr.mxu0 0.0
    %921 = vmatpush2.msra.mxu0 %v787
    %922 = vmatprep.subr.mxu0 0.0
    %923 = vmatpush2.msra.mxu0 %v786
    %924 = vmatprep.subr.mxu0 0.0
    %925 = vmatpush2.msra.mxu0 %v785
    %926 = vmatprep.subr.mxu0 0.0
    %927 = vmatpush2.msra.mxu0 %v784
    %928 = vmatprep.subr.mxu0 0.0
    %929 = vmatpush2.msra.mxu0 %v783
    %930 = vmatprep.subr.mxu0 0.0
    %931 = vmatpush2.msra.mxu0 %v782
    %932 = vmatprep.mubr.f32.mxu0 %v730
    %933 = vmatmul.mubr.f32.gmra.mxu0 %v728
    %v934 = vpop.f32.mrf.mxu0
    %v935 = vadd.f32 %v865, %v934
    %v936 = vpop.f32.mrf.mxu0
    %937 = vdwg.mxu0
    %v938 = vld [vmem:[%s7] sm:$0x3]
    %v939 = vld [vmem:[%s10] sm:$0x3]
    %941 = vset.pattern.permute.xlu0 2
    %942 = vperm.xlu0 %941, %v939
    %v943 = vpop.permute.xlu0 %942
    %v946 = vsel %vm635, %v938, 0
    %948 = vmatprep.subr.mxu0 0.0
    %949 = vmatpush1.msra.mxu0 0.0
    %950 = vmatprep.subr.mxu0 0.0
    %951 = vmatpush1.msra.mxu0 0.0
    %952 = vmatprep.subr.mxu0 0.0
    %953 = vmatpush1.msra.mxu0 0.0
    %954 = vmatprep.subr.mxu0 0.0
    %955 = vmatpush1.msra.mxu0 0.0
    %956 = vmatprep.subr.mxu0 0.0
    %957 = vmatpush1.msra.mxu0 0.0
    %958 = vmatprep.subr.mxu0 0.0
    %959 = vmatpush1.msra.mxu0 0.0
    %960 = vmatprep.subr.mxu0 0.0
    %961 = vmatpush1.msra.mxu0 0.0
    %962 = vmatprep.subr.mxu0 0.0
    %963 = vmatpush1.msra.mxu0 0.0
    %964 = vmatprep.subr.mxu0 0.0
    %965 = vmatpush1.msra.mxu0 0.0
    %966 = vmatprep.subr.mxu0 0.0
    %967 = vmatpush1.msra.mxu0 0.0
    %968 = vmatprep.subr.mxu0 0.0
    %969 = vmatpush1.msra.mxu0 0.0
    %970 = vmatprep.subr.mxu0 0.0
    %971 = vmatpush1.msra.mxu0 0.0
    %972 = vmatprep.subr.mxu0 0.0
    %973 = vmatpush1.msra.mxu0 0.0
    %974 = vmatprep.subr.mxu0 0.0
    %975 = vmatpush1.msra.mxu0 0.0
    %976 = vmatprep.subr.mxu0 0.0
    %977 = vmatpush1.msra.mxu0 0.0
    %978 = vmatprep.subr.mxu0 0.0
    %979 = vmatpush1.msra.mxu0 %v935
    %980 = vmatprep.subr.mxu0 0.0
    %981 = vmatpush2.msra.mxu0 0.0
    %982 = vmatprep.subr.mxu0 0.0
    %983 = vmatpush2.msra.mxu0 0.0
    %984 = vmatprep.subr.mxu0 0.0
    %985 = vmatpush2.msra.mxu0 0.0
    %986 = vmatprep.subr.mxu0 0.0
    %987 = vmatpush2.msra.mxu0 0.0
    %988 = vmatprep.subr.mxu0 0.0
    %989 = vmatpush2.msra.mxu0 0.0
    %990 = vmatprep.subr.mxu0 0.0
    %991 = vmatpush2.msra.mxu0 0.0
    %992 = vmatprep.subr.mxu0 0.0
    %993 = vmatpush2.msra.mxu0 0.0
    %994 = vmatprep.subr.mxu0 0.0
    %995 = vmatpush2.msra.mxu0 0.0
    %996 = vmatprep.subr.mxu0 0.0
    %997 = vmatpush2.msra.mxu0 0.0
    %998 = vmatprep.subr.mxu0 0.0
    %999 = vmatpush2.msra.mxu0 0.0
    %1000 = vmatprep.subr.mxu0 0.0
    %1001 = vmatpush2.msra.mxu0 0.0
    %1002 = vmatprep.subr.mxu0 0.0
    %1003 = vmatpush2.msra.mxu0 0.0
    %1004 = vmatprep.subr.mxu0 0.0
    %1005 = vmatpush2.msra.mxu0 0.0
    %1006 = vmatprep.subr.mxu0 0.0
    %1007 = vmatpush2.msra.mxu0 0.0
    %1008 = vmatprep.subr.mxu0 0.0
    %1009 = vmatpush2.msra.mxu0 0.0
    %1010 = vmatprep.subr.mxu0 0.0
    %1011 = vmatpush2.msra.mxu0 0.0
    %1012 = vmatprep.mubr.f32.mxu0 0.0
    %1013 = vmatmul.mubr.f32.gmra.mxu0 %v946
    %v1014 = vpop.f32.mrf.mxu0
    %v1015 = vadd.f32 %v943, %v1014
    %v1016 = vpop.f32.mrf.mxu0
    %1017 = vdwg.mxu0
    %v1018 = vxor.u32 %v1015, 2147483648
    %v1019 = vmul.f32 %v1018, 1.442695
    %v1020 = vpow.pop %v1019
    %v1021 = vadd.f32 %v1020, 1.0
    %v1022 = vrcp.pop %v1021
    %v1023 = vmul.f32 1.0, %v1022
    %v1024 = vmul.f32 %v1015, %v1023
    %v1025 = vld [vmem:[%s8] sm:$0xff]
    %1026 = vset.pattern.permute.xlu0 3
    %1027 = vperm.xlu0 %1026, %v66
    %v1028 = vpop.permute.xlu0 %1027
    %vm1030 = vcmask 15360
    %v1032 = vsel %vm1030, %v1025, 0
    %v1035 = vsel %vm76, %v1024, 0
    %1037 = vmatprep.subr.mxu0 0.0
    %1038 = vmatpush1.msra.mxu0 0.0
    %1039 = vmatprep.subr.mxu0 0.0
    %1040 = vmatpush1.msra.mxu0 0.0
    %1041 = vmatprep.subr.mxu0 0.0
    %1042 = vmatpush1.msra.mxu0 0.0
    %1043 = vmatprep.subr.mxu0 0.0
    %1044 = vmatpush1.msra.mxu0 0.0
    %1045 = vmatprep.subr.mxu0 0.0
    %1046 = vmatpush1.msra.mxu0 0.0
    %1047 = vmatprep.subr.mxu0 0.0
    %1048 = vmatpush1.msra.mxu0 0.0
    %1049 = vmatprep.subr.mxu0 0.0
    %1050 = vmatpush1.msra.mxu0 0.0
    %1051 = vmatprep.subr.mxu0 0.0
    %1052 = vmatpush1.msra.mxu0 0.0
    %1053 = vmatprep.subr.mxu0 0.0
    %1054 = vmatpush1.msra.mxu0 0.0
    %1055 = vmatprep.subr.mxu0 0.0
    %1056 = vmatpush1.msra.mxu0 0.0
    %1057 = vmatprep.subr.mxu0 0.0
    %1058 = vmatpush1.msra.mxu0 0.0
    %1059 = vmatprep.subr.mxu0 0.0
    %1060 = vmatpush1.msra.mxu0 0.0
    %1061 = vmatprep.subr.mxu0 0.0
    %1062 = vmatpush1.msra.mxu0 0.0
    %1063 = vmatprep.subr.mxu0 0.0
    %1064 = vmatpush1.msra.mxu0 0.0
    %1065 = vmatprep.subr.mxu0 0.0
    %1066 = vmatpush1.msra.mxu0 0.0
    %1067 = vmatprep.subr.mxu0 0.0
    %1068 = vmatpush1.msra.mxu0 %v1035
    %1069 = vmatprep.subr.mxu0 0.0
    %1070 = vmatpush2.msra.mxu0 0.0
    %1071 = vmatprep.subr.mxu0 0.0
    %1072 = vmatpush2.msra.mxu0 0.0
    %1073 = vmatprep.subr.mxu0 0.0
    %1074 = vmatpush2.msra.mxu0 0.0
    %1075 = vmatprep.subr.mxu0 0.0
    %1076 = vmatpush2.msra.mxu0 0.0
    %1077 = vmatprep.subr.mxu0 0.0
    %1078 = vmatpush2.msra.mxu0 0.0
    %1079 = vmatprep.subr.mxu0 0.0
    %1080 = vmatpush2.msra.mxu0 0.0
    %1081 = vmatprep.subr.mxu0 0.0
    %1082 = vmatpush2.msra.mxu0 0.0
    %1083 = vmatprep.subr.mxu0 0.0
    %1084 = vmatpush2.msra.mxu0 0.0
    %1085 = vmatprep.subr.mxu0 0.0
    %1086 = vmatpush2.msra.mxu0 0.0
    %1087 = vmatprep.subr.mxu0 0.0
    %1088 = vmatpush2.msra.mxu0 0.0
    %1089 = vmatprep.subr.mxu0 0.0
    %1090 = vmatpush2.msra.mxu0 0.0
    %1091 = vmatprep.subr.mxu0 0.0
    %1092 = vmatpush2.msra.mxu0 0.0
    %1093 = vmatprep.subr.mxu0 0.0
    %1094 = vmatpush2.msra.mxu0 0.0
    %1095 = vmatprep.subr.mxu0 0.0
    %1096 = vmatpush2.msra.mxu0 0.0
    %1097 = vmatprep.subr.mxu0 0.0
    %1098 = vmatpush2.msra.mxu0 0.0
    %1099 = vmatprep.subr.mxu0 0.0
    %1100 = vmatpush2.msra.mxu0 0.0
    %1101 = vmatprep.mubr.f32.mxu0 0.0
    %1102 = vmatmul.mubr.f32.gmra.mxu0 %v1032
    %v1103 = vpop.f32.mrf.mxu0
    %v1104 = vadd.f32 %v1028, %v1103
    %v1105 = vpop.f32.mrf.mxu0
    %1106 = vdwg.mxu0
    %v1107 = vxor.u32 %v1104, 2147483648
    %v1108 = vmul.f32 %v1107, 1.442695
    %v1109 = vpow.pop %v1108
    %v1110 = vadd.f32 %v1109, 1.0
    %v1111 = vrcp.pop %v1110
    %v1112 = vmul.f32 1.0, %v1111
    %v1113 = vld [vmem:[%s3] sm:$0xff]
    %v1115 = vcombine.high %v1113, %v1113
    %v1117 = vunpack.c.l.s4 1983009808
    %v1118 = vunpack.c.0.s8 %v1117
    %v1119 = vlaneseq
    %v1120 = vshrl.u32 %v1119, 7
    %v1121 = vsub.s32 %v1118, %v1120
    %v1122 = vrot.slane %v1113, %v1121
    %v1124 = vunpack.c.l.s4 1983009808
    %v1125 = vunpack.c.0.s8 %v1124
    %v1126 = vlaneseq
    %v1127 = vshrl.u32 %v1126, 7
    %v1128 = vsub.s32 %v1125, %v1127
    %v1129 = vrot.slane %v1115, %v1128
    %v1130 = vcombine.high %v1122, %v1122
    %v1131 = vcombine.high %v1129, %v1129
    %v1133 = vsel %vm1030, %v1112, 0
    %v1135 = vsel %vm76, %v1122, 0
    %v1137 = vsel %vm76, %v1130, 0
    %v1139 = vsel %vm76, %v1129, 0
    %v1141 = vsel %vm76, %v1131, 0
    %1143 = vmatprep.subr.mxu0 0.0
    %1144 = vmatpush1.msra.mxu0 0.0
    %1145 = vmatprep.subr.mxu0 0.0
    %1146 = vmatpush1.msra.mxu0 0.0
    %1147 = vmatprep.subr.mxu0 0.0
    %1148 = vmatpush1.msra.mxu0 0.0
    %1149 = vmatprep.subr.mxu0 0.0
    %1150 = vmatpush1.msra.mxu0 0.0
    %1151 = vmatprep.subr.mxu0 0.0
    %1152 = vmatpush1.msra.mxu0 0.0
    %1153 = vmatprep.subr.mxu0 0.0
    %1154 = vmatpush1.msra.mxu0 0.0
    %1155 = vmatprep.subr.mxu0 0.0
    %1156 = vmatpush1.msra.mxu0 0.0
    %1157 = vmatprep.subr.mxu0 0.0
    %1158 = vmatpush1.msra.mxu0 0.0
    %1159 = vmatprep.subr.mxu0 0.0
    %1160 = vmatpush1.msra.mxu0 0.0
    %1161 = vmatprep.subr.mxu0 0.0
    %1162 = vmatpush1.msra.mxu0 0.0
    %1163 = vmatprep.subr.mxu0 0.0
    %1164 = vmatpush1.msra.mxu0 0.0
    %1165 = vmatprep.subr.mxu0 0.0
    %1166 = vmatpush1.msra.mxu0 0.0
    %1167 = vmatprep.subr.mxu0 0.0
    %1168 = vmatpush1.msra.mxu0 0.0
    %1169 = vmatprep.subr.mxu0 0.0
    %1170 = vmatpush1.msra.mxu0 0.0
    %1171 = vmatprep.subr.mxu0 0.0
    %1172 = vmatpush1.msra.mxu0 0.0
    %1173 = vmatprep.subr.mxu0 %v1137
    %1174 = vmatpush1.msra.mxu0 %v1135
    %1175 = vmatprep.subr.mxu0 0.0
    %1176 = vmatpush2.msra.mxu0 0.0
    %1177 = vmatprep.subr.mxu0 0.0
    %1178 = vmatpush2.msra.mxu0 0.0
    %1179 = vmatprep.subr.mxu0 0.0
    %1180 = vmatpush2.msra.mxu0 0.0
    %1181 = vmatprep.subr.mxu0 0.0
    %1182 = vmatpush2.msra.mxu0 0.0
    %1183 = vmatprep.subr.mxu0 0.0
    %1184 = vmatpush2.msra.mxu0 0.0
    %1185 = vmatprep.subr.mxu0 0.0
    %1186 = vmatpush2.msra.mxu0 0.0
    %1187 = vmatprep.subr.mxu0 0.0
    %1188 = vmatpush2.msra.mxu0 0.0
    %1189 = vmatprep.subr.mxu0 0.0
    %1190 = vmatpush2.msra.mxu0 0.0
    %1191 = vmatprep.subr.mxu0 0.0
    %1192 = vmatpush2.msra.mxu0 0.0
    %1193 = vmatprep.subr.mxu0 0.0
    %1194 = vmatpush2.msra.mxu0 0.0
    %1195 = vmatprep.subr.mxu0 0.0
    %1196 = vmatpush2.msra.mxu0 0.0
    %1197 = vmatprep.subr.mxu0 0.0
    %1198 = vmatpush2.msra.mxu0 0.0
    %1199 = vmatprep.subr.mxu0 0.0
    %1200 = vmatpush2.msra.mxu0 0.0
    %1201 = vmatprep.subr.mxu0 0.0
    %1202 = vmatpush2.msra.mxu0 0.0
    %1203 = vmatprep.subr.mxu0 0.0
    %1204 = vmatpush2.msra.mxu0 0.0
    %1205 = vmatprep.subr.mxu0 0.0
    %1206 = vmatpush2.msra.mxu0 0.0
    %1207 = vmatprep.mubr.f32.mxu0 0.0
    %1208 = vmatmul.mubr.f32.gmra.mxu0 %v1133
    %v1209 = vpop.f32.mrf.mxu0
    %v1210 = vadd.f32 0.0, %v1209
    %v1211 = vpop.f32.mrf.mxu0
    %v1212 = vadd.f32 0.0, %v1211
    %1213 = vdwg.mxu0
    %1214 = vmatprep.subr.mxu0 0.0
    %1215 = vmatpush1.msra.mxu0 0.0
    %1216 = vmatprep.subr.mxu0 0.0
    %1217 = vmatpush1.msra.mxu0 0.0
    %1218 = vmatprep.subr.mxu0 0.0
    %1219 = vmatpush1.msra.mxu0 0.0
    %1220 = vmatprep.subr.mxu0 0.0
    %1221 = vmatpush1.msra.mxu0 0.0
    %1222 = vmatprep.subr.mxu0 0.0
    %1223 = vmatpush1.msra.mxu0 0.0
    %1224 = vmatprep.subr.mxu0 0.0
    %1225 = vmatpush1.msra.mxu0 0.0
    %1226 = vmatprep.subr.mxu0 0.0
    %1227 = vmatpush1.msra.mxu0 0.0
    %1228 = vmatprep.subr.mxu0 0.0
    %1229 = vmatpush1.msra.mxu0 0.0
    %1230 = vmatprep.subr.mxu0 0.0
    %1231 = vmatpush1.msra.mxu0 0.0
    %1232 = vmatprep.subr.mxu0 0.0
    %1233 = vmatpush1.msra.mxu0 0.0
    %1234 = vmatprep.subr.mxu0 0.0
    %1235 = vmatpush1.msra.mxu0 0.0
    %1236 = vmatprep.subr.mxu0 0.0
    %1237 = vmatpush1.msra.mxu0 0.0
    %1238 = vmatprep.subr.mxu0 0.0
    %1239 = vmatpush1.msra.mxu0 0.0
    %1240 = vmatprep.subr.mxu0 0.0
    %1241 = vmatpush1.msra.mxu0 0.0
    %1242 = vmatprep.subr.mxu0 0.0
    %1243 = vmatpush1.msra.mxu0 0.0
    %1244 = vmatprep.subr.mxu0 %v1141
    %1245 = vmatpush1.msra.mxu0 %v1139
    %1246 = vmatprep.subr.mxu0 0.0
    %1247 = vmatpush2.msra.mxu0 0.0
    %1248 = vmatprep.subr.mxu0 0.0
    %1249 = vmatpush2.msra.mxu0 0.0
    %1250 = vmatprep.subr.mxu0 0.0
    %1251 = vmatpush2.msra.mxu0 0.0
    %1252 = vmatprep.subr.mxu0 0.0
    %1253 = vmatpush2.msra.mxu0 0.0
    %1254 = vmatprep.subr.mxu0 0.0
    %1255 = vmatpush2.msra.mxu0 0.0
    %1256 = vmatprep.subr.mxu0 0.0
    %1257 = vmatpush2.msra.mxu0 0.0
    %1258 = vmatprep.subr.mxu0 0.0
    %1259 = vmatpush2.msra.mxu0 0.0
    %1260 = vmatprep.subr.mxu0 0.0
    %1261 = vmatpush2.msra.mxu0 0.0
    %1262 = vmatprep.subr.mxu0 0.0
    %1263 = vmatpush2.msra.mxu0 0.0
    %1264 = vmatprep.subr.mxu0 0.0
    %1265 = vmatpush2.msra.mxu0 0.0
    %1266 = vmatprep.subr.mxu0 0.0
    %1267 = vmatpush2.msra.mxu0 0.0
    %1268 = vmatprep.subr.mxu0 0.0
    %1269 = vmatpush2.msra.mxu0 0.0
    %1270 = vmatprep.subr.mxu0 0.0
    %1271 = vmatpush2.msra.mxu0 0.0
    %1272 = vmatprep.subr.mxu0 0.0
    %1273 = vmatpush2.msra.mxu0 0.0
    %1274 = vmatprep.subr.mxu0 0.0
    %1275 = vmatpush2.msra.mxu0 0.0
    %1276 = vmatprep.subr.mxu0 0.0
    %1277 = vmatpush2.msra.mxu0 0.0
    %1278 = vmatprep.mubr.f32.mxu0 0.0
    %1279 = vmatmul.mubr.f32.gmra.mxu0 %v1133
    %v1280 = vpop.f32.mrf.mxu0
    %v1281 = vadd.f32 0.0, %v1280
    %v1282 = vpop.f32.mrf.mxu0
    %v1283 = vadd.f32 0.0, %v1282
    %1284 = vdwg.mxu0
    %v1285 = vmul.f32 %v687, %v1210
    %v1286 = vmul.f32 %v689, %v1212
    %v1287 = vmul.f32 %v728, %v1281
    %v1288 = vmul.f32 %v730, %v1283
    %v1289 = vld [vmem:[%s9] sm:$0x3]
    %v1290 = vpack.c.bf16 %v1285, %v1285
    %v1291 = vpack.c.bf16 %v1286, %v1286
    %v1292 = vpack.c.bf16 %v1287, %v1287
    %v1293 = vpack.c.bf16 %v1288, %v1288
    %v1294 = vld [vmem:[%s10] sm:$0xf]
    %1296 = vset.pattern.permute.xlu0 4
    %1297 = vperm.xlu0 %1296, %v1294
    %v1298 = vpop.permute.xlu0 %1297
    %v1301 = vsel %vm635, %v1289, 0
    %v1304 = vsel %vm639, %v1290, 0
    %v1307 = vsel %vm639, %v1291, 0
    %v1310 = vsel %vm639, %v1292, 0
    %v1313 = vsel %vm639, %v1293, 0
    %1315 = vmatprep.subr.bf16.mxu0 0
    %1316 = vmatpush1.bf16.msra.mxu0 0
    %1317 = vmatprep.subr.bf16.mxu0 0
    %1318 = vmatpush1.bf16.msra.mxu0 0
    %1319 = vmatprep.subr.bf16.mxu0 0
    %1320 = vmatpush1.bf16.msra.mxu0 0
    %1321 = vmatprep.subr.bf16.mxu0 0
    %1322 = vmatpush1.bf16.msra.mxu0 0
    %1323 = vmatprep.subr.bf16.mxu0 0
    %1324 = vmatpush1.bf16.msra.mxu0 0
    %1325 = vmatprep.subr.bf16.mxu0 0
    %1326 = vmatpush1.bf16.msra.mxu0 0
    %1327 = vmatprep.subr.bf16.mxu0 0
    %1328 = vmatpush1.bf16.msra.mxu0 0
    %1329 = vmatprep.subr.bf16.mxu0 %v1307
    %1330 = vmatpush1.bf16.msra.mxu0 %v1304
    %1331 = vmatprep.subr.bf16.mxu0 0
    %1332 = vmatpush2.bf16.msra.mxu0 0
    %1333 = vmatprep.subr.bf16.mxu0 0
    %1334 = vmatpush2.bf16.msra.mxu0 0
    %1335 = vmatprep.subr.bf16.mxu0 0
    %1336 = vmatpush2.bf16.msra.mxu0 0
    %1337 = vmatprep.subr.bf16.mxu0 0
    %1338 = vmatpush2.bf16.msra.mxu0 0
    %1339 = vmatprep.subr.bf16.mxu0 0
    %1340 = vmatpush2.bf16.msra.mxu0 0
    %1341 = vmatprep.subr.bf16.mxu0 0
    %1342 = vmatpush2.bf16.msra.mxu0 0
    %1343 = vmatprep.subr.bf16.mxu0 0
    %1344 = vmatpush2.bf16.msra.mxu0 0
    %1345 = vmatprep.subr.bf16.mxu0 0
    %1346 = vmatpush2.bf16.msra.mxu0 0
    %1347 = vmatprep.mubr.bf16.mxu0 0
    %1348 = vmatmul.mubr.bf16.gmra.mxu0 %v1301
    %v1349 = vpop.f32.mrf.mxu0
    %v1350 = vadd.f32 %v1298, %v1349
    %v1351 = vpop.f32.mrf.mxu0
    %v1352 = vadd.f32 %v1298, %v1351
    %v1353 = vpop.f32.mrf.mxu0
    %v1354 = vpop.f32.mrf.mxu0
    %1355 = vdwg.mxu0
    %1356 = vmatprep.subr.bf16.mxu0 0
    %1357 = vmatpush1.bf16.msra.mxu0 0
    %1358 = vmatprep.subr.bf16.mxu0 0
    %1359 = vmatpush1.bf16.msra.mxu0 0
    %1360 = vmatprep.subr.bf16.mxu0 0
    %1361 = vmatpush1.bf16.msra.mxu0 0
    %1362 = vmatprep.subr.bf16.mxu0 0
    %1363 = vmatpush1.bf16.msra.mxu0 0
    %1364 = vmatprep.subr.bf16.mxu0 0
    %1365 = vmatpush1.bf16.msra.mxu0 0
    %1366 = vmatprep.subr.bf16.mxu0 0
    %1367 = vmatpush1.bf16.msra.mxu0 0
    %1368 = vmatprep.subr.bf16.mxu0 0
    %1369 = vmatpush1.bf16.msra.mxu0 0
    %1370 = vmatprep.subr.bf16.mxu0 %v1313
    %1371 = vmatpush1.bf16.msra.mxu0 %v1310
    %1372 = vmatprep.subr.bf16.mxu0 0
    %1373 = vmatpush2.bf16.msra.mxu0 0
    %1374 = vmatprep.subr.bf16.mxu0 0
    %1375 = vmatpush2.bf16.msra.mxu0 0
    %1376 = vmatprep.subr.bf16.mxu0 0
    %1377 = vmatpush2.bf16.msra.mxu0 0
    %1378 = vmatprep.subr.bf16.mxu0 0
    %1379 = vmatpush2.bf16.msra.mxu0 0
    %1380 = vmatprep.subr.bf16.mxu0 0
    %1381 = vmatpush2.bf16.msra.mxu0 0
    %1382 = vmatprep.subr.bf16.mxu0 0
    %1383 = vmatpush2.bf16.msra.mxu0 0
    %1384 = vmatprep.subr.bf16.mxu0 0
    %1385 = vmatpush2.bf16.msra.mxu0 0
    %1386 = vmatprep.subr.bf16.mxu0 0
    %1387 = vmatpush2.bf16.msra.mxu0 0
    %1388 = vmatprep.mubr.bf16.mxu0 0
    %1389 = vmatmul.mubr.bf16.gmra.mxu0 %v1301
    %v1390 = vpop.f32.mrf.mxu0
    %v1391 = vadd.f32 %v1298, %v1390
    %v1392 = vpop.f32.mrf.mxu0
    %v1393 = vadd.f32 %v1298, %v1392
    %v1394 = vpop.f32.mrf.mxu0
    %v1395 = vpop.f32.mrf.mxu0
    %1396 = vdwg.mxu0
    %v1397 = vadd.f32 %v1350, %v53
    %v1398 = vadd.f32 %v1352, %v58
    %v1399 = vadd.f32 %v1391, %v54
    %v1400 = vadd.f32 %v1393, %v59
    %v1405 = vcombine.low %v1397, %v1398
    %v1406 = vcombine.low %v1399, %v1400
    %1409 = vst [vmem:[%s11] sm:$0xff] %v1405
    %1410 = vst [vmem:[%s11 + $0x8] sm:$0xff] %v1406
    // Predicated region
    $region50: #{_lambda_.2} parent=1 // pred_check
      _
    $region51: #{_lambda_.2} parent=1 // pred_check_branch
      %1412 = sbr.rel (0) target = $region53
    $region52: #{_lambda_.2} parent=1 // pred_region
      _
    $region53: #{_lambda_.2} parent=1 // pred_fallthru
      _
    // Predicated region
    $region54: #{_lambda_.2} parent=1 // pred_check
      _
    $region55: #{_lambda_.2} parent=1 // pred_check_branch
      %1414 = sbr.rel (0) target = $region57
    $region56: #{_lambda_.2} parent=1 // pred_region
      _
    $region57: #{_lambda_.2} parent=1 // pred_fallthru
      _
    %1415 = vsyncpa [#allocation3], 1

</llo_original>
